<compile_context>
chip_gen: v7x
topology: tpu7x:2x2x1
jax: 0.10.0
libtpu: 0.0.40
codegen_flags: <defaults>
</compile_context>

<pallas_src>
import jax
import jax.numpy as jnp
from jax import lax
from jax.experimental import pallas as pl
from jax.experimental.pallas import tpu as pltpu


def _round_up(x, m):
    return (x + m - 1) // m * m


def make_psa_kernel(S, cs, H, W, Wp, N, p):
    """Kernel body: one batch element per grid step, all S branches fused."""
    inv_hw = 1.0 / float(H * W)
    k_sizes = [2 * (i + 1) + 1 for i in range(S)]
    k_rows = [k * k * cs for k in k_sizes]               # slab rows per branch
    offs = [sum(k_rows[:i]) for i in range(S)]           # slab row offsets

    def kernel(*refs):
        x_ref = refs[0]                                  # (1, C, L)  bf16
        w_refs = refs[1:1 + S]                           # (cs, k_i^2*cs) bf16
        bias_ref = refs[1 + S]                           # (C, 1)     f32
        w1t_ref = refs[2 + S]                            # (S, cs, cr) f32
        w2_ref = refs[3 + S]                             # (S, cs, cr) f32
        valid_ref = refs[4 + S]                          # (1, N)     f32
        o_ref = refs[5 + S]                              # (1, cs, N)
        slab_ref = refs[6 + S]                           # (K_pad, N) bf16

        x = x_ref[0]                                     # (C, L) bf16
        bias = bias_ref[...]                             # (C, 1) f32
        valid = valid_ref[...]                           # (1, N) f32

        # ---- im2col in VMEM: pure bf16 copies (no mask-mul, no casts). ----
        row = 0
        for i in range(S):
            p_i = i + 1
            xb = x[i * cs:(i + 1) * cs, :]               # branch channels (cs, L)
            for dy in range(-p_i, p_i + 1):
                for dx in range(-p_i, p_i + 1):
                    start = (dy + p) * Wp + (dx + p)     # static offset
                    slab_ref[row:row + cs, :] = xb[:, start:start + N]
                    row += cs

        # ---- one MXU matmul per branch: taps fused on K (no zero blocks). ----
        conv = []
        for i in range(S):
            conv.append(jnp.dot(w_refs[i][...],
                                slab_ref[offs[i]:offs[i] + k_rows[i], :],
                                preferred_element_type=jnp.float32))   # (cs, N)

        # ---- SE: masked global avg pool -> 1x1 -> ReLU -> 1x1 -> sigmoid. ----
        # Bias is added only on the pooled path (mean of a constant == const).
        se = []
        for i in range(S):
            b_i = bias[i * cs:(i + 1) * cs, :]
            pooled = jnp.sum(conv[i] * valid, axis=1, keepdims=True) * inv_hw + b_i
            h = jnp.maximum(jnp.sum(w1t_ref[i] * pooled, axis=0, keepdims=True), 0.0)
            logits = jnp.sum(w2_ref[i] * h, axis=1, keepdims=True)     # (cs, 1)
            se.append(1.0 / (1.0 + jnp.exp(-logits)))                  # sigmoid

        # ---- softmax over the S branches (constant over h, w). ----
        m = se[0]
        for i in range(1, S):
            m = jnp.maximum(m, se[i])
        exps = [jnp.exp(s - m) for s in se]
        denom = exps[0]
        for e in exps[1:]:
            denom = denom + e
        inv_denom = pl.reciprocal(denom, approx=True)

        out = jnp.zeros((cs, N), jnp.float32)
        wbias = jnp.zeros((cs, 1), jnp.float32)
        for i in range(S):
            att = exps[i] * inv_denom                                  # (cs, 1)
            out = out + att * conv[i]
            wbias = wbias + att * bias[i * cs:(i + 1) * cs, :]
        o_ref[0] = (out + wbias).astype(o_ref.dtype)

    return kernel


def psa_forward(x, params, S=4):
    """PSA forward.  x: (B, C, H, W).  Returns (B, C//S, H, W)."""
    B, C, H, W = x.shape
    cs = C // S
    conv_ws, conv_bs, se_w1s, se_w2s = params
    cr = se_w1s[0].shape[0]
    p = S                                   # largest padding (branch S-1)
    Hp, Wp = H + 2 * p, W + 2 * p
    n_valid = H * Wp                        # flat output length before lane pad
    N = _round_up(n_valid, 128)             # lane-dense matmul N
    # Flat slab length: must cover the padded image plus the farthest window.
    L = _round_up(max(Hp * Wp, 2 * p * Wp + 2 * p + N), 128)

    # Input slab: zero-pad H and W by p, flatten, add flat tail halo, cast bf16.
    # HBM read per step is ~(Hp*Wp)/(H*W) of the raw input, in bf16.
    xp = jnp.pad(x, ((0, 0), (0, 0), (p, p), (p, p)))
    x_flat = xp.reshape(B, C, Hp * Wp)
    x_flat = jnp.pad(x_flat, ((0, 0), (0, 0), (0, L - Hp * Wp)))
    x_flat = x_flat.astype(jnp.bfloat16)

    # Per-branch packed conv weights (cs, k_i^2*cs), tap-major / channel-minor,
    # matching the im2col row order built in the kernel.  No zero padding.
    w_branches = []
    for i in range(S):
        k = 2 * (i + 1) + 1
        wi = jnp.transpose(conv_ws[i], (0, 2, 3, 1)).reshape(cs, k * k * cs)
        w_branches.append(wi.astype(jnp.bfloat16))

    bias = jnp.concatenate(conv_bs, axis=0).reshape(C, 1).astype(jnp.float32)
    w1t = jnp.stack([w.T for w in se_w1s], axis=0)                 # (S, cs, cr)
    w2 = jnp.stack(se_w2s, axis=0)                                 # (S, cs, cr)

    # Validity mask for the global-avg-pool sum (padded-width + lane-pad cols).
    col = jnp.arange(N, dtype=jnp.int32)
    valid = (((col % Wp) < W) & (col < n_valid)).astype(jnp.float32).reshape(1, N)

    kernel = make_psa_kernel(S, cs, H, W, Wp, N, p)

    in_specs = [pl.BlockSpec((1, C, L), lambda b: (b, 0, 0))]
    for wb in w_branches:
        in_specs.append(pl.BlockSpec(wb.shape, lambda b: (0, 0)))
    in_specs += [
        pl.BlockSpec((C, 1), lambda b: (0, 0)),
        pl.BlockSpec((S, cs, cr), lambda b: (0, 0, 0)),
        pl.BlockSpec((S, cs, cr), lambda b: (0, 0, 0)),
        pl.BlockSpec((1, N), lambda b: (0, 0)),
    ]

    K_total = sum((2 * (i + 1) + 1) ** 2 for i in range(S)) * cs
    K_pad = _round_up(K_total, 8)

    out = pl.pallas_call(
        kernel,
        out_shape=jax.ShapeDtypeStruct((B, cs, N), x.dtype),
        grid=(B,),
        in_specs=in_specs,
        out_specs=pl.BlockSpec((1, cs, N), lambda b: (b, 0, 0)),
        scratch_shapes=[pltpu.VMEM((K_pad, N), jnp.bfloat16)],
        compiler_params=pltpu.CompilerParams(
            dimension_semantics=("parallel",)),
    )(x_flat, *w_branches, bias, w1t, w2, valid)

    # Drop the padded-width / lane-pad garbage columns.
    out = out[:, :, :n_valid].reshape(B, cs, H, Wp)[:, :, :, :W]
    return out


def init_params(key, channel=16, S=4, reduction=4):
    """Deterministic synthetic parameters matching PSA.__init__ shapes."""
    cs = channel // S
    cr = channel // (S * reduction)
    keys = jax.random.split(key, 4 * S)
    conv_ws, conv_bs, se_w1s, se_w2s = [], [], [], []
    for i in range(S):
        k = 2 * (i + 1) + 1
        fan = cs * k * k
        conv_ws.append(jax.random.normal(keys[4 * i], (cs, cs, k, k), jnp.float32)
                       / jnp.sqrt(float(fan)))
        conv_bs.append(jax.random.normal(keys[4 * i + 1], (cs,), jnp.float32) * 0.1)
        se_w1s.append(jax.random.normal(keys[4 * i + 2], (cr, cs), jnp.float32)
                      / jnp.sqrt(float(cs)))
        se_w2s.append(jax.random.normal(keys[4 * i + 3], (cs, cr), jnp.float32)
                      / jnp.sqrt(float(cr)))
    return conv_ws, conv_bs, se_w1s, se_w2s


def psa_reference(x, params, S=4):
    """Pure-JAX reference mirroring the PyTorch forward."""
    B, C, H, W = x.shape
    cs = C // S
    conv_ws, conv_bs, se_w1s, se_w2s = params
    x5 = x.reshape(B, S, cs, H, W)
    conv_out, se_out = [], []
    for i in range(S):
        pad = i + 1
        y = lax.conv_general_dilated(
            x5[:, i], conv_ws[i], (1, 1), [(pad, pad), (pad, pad)],
            dimension_numbers=("NCHW", "OIHW", "NCHW"),
            precision=lax.Precision.HIGHEST)
        y = y + conv_bs[i][None, :, None, None]
        conv_out.append(y)
        pooled = jnp.mean(y, axis=(2, 3))                               # (B, cs)
        h = jnp.maximum(pooled @ se_w1s[i].T, 0.0)                      # (B, cr)
        se = jax.nn.sigmoid(h @ se_w2s[i].T)                            # (B, cs)
        se_out.append(se)
    conv_out = jnp.stack(conv_out, axis=1)                              # (B,S,cs,H,W)
    se_all = jnp.stack(se_out, axis=1)                                  # (B,S,cs)
    att = jax.nn.softmax(se_all, axis=1)[..., None, None]               # (B,S,cs,1,1)
    return jnp.sum(conv_out * att, axis=1)                              # (B,cs,H,W)


if __name__ == "__main__":
    key = jax.random.PRNGKey(0)
    kx, kp = jax.random.split(key)
    B, C, H, W = 2, 16, 16, 16
    S, reduction = 4, 4

    x = jax.random.normal(kx, (B, C, H, W), jnp.float32)
    params = init_params(kp, channel=C, S=S, reduction=reduction)

    out = psa_forward(x, params, S=S)
    out = jax.block_until_ready(out)

    ref = psa_reference(x, params, S=S)
    assert out.shape == (B, C // S, H, W), out.shape
    max_err = float(jnp.max(jnp.abs(out - ref)))
    scale = float(jnp.max(jnp.abs(ref))) + 1e-6
    assert max_err / scale < 2e-2, f"mismatch: max_err={max_err}, scale={scale}"

    print("KERNEL_OK")
</pallas_src>

<mosaic_0001>
module attributes {stable_mosaic.version = 11 : i64} {
  func.func @kernel(%arg0: i32, %arg1: memref<1x16x640xbf16, #tpu.memory_space<vmem>>, %arg2: memref<4x36xbf16, #tpu.memory_space<vmem>>, %arg3: memref<4x100xbf16, #tpu.memory_space<vmem>>, %arg4: memref<4x196xbf16, #tpu.memory_space<vmem>>, %arg5: memref<4x324xbf16, #tpu.memory_space<vmem>>, %arg6: memref<16x1xf32, #tpu.memory_space<vmem>>, %arg7: memref<4x4x1xf32, #tpu.memory_space<vmem>>, %arg8: memref<4x4x1xf32, #tpu.memory_space<vmem>>, %arg9: memref<1x384xf32, #tpu.memory_space<vmem>>, %arg10: memref<1x4x384xf32, #tpu.memory_space<vmem>>, %arg11: memref<656x384xbf16, #tpu.memory_space<vmem>>) attributes {dimension_semantics = [#tpu.dimension_semantics<parallel>], iteration_bounds = array<i64: 2>, scalar_prefetch = 0 : i64, scratch_operands = 1 : i64, tpu.core_type = #tpu.core_type<tc>, window_params = [{transform_indices = @transform_0, window_bounds = array<i64: 1, 16, 640>}, {pipeline_mode = #tpu.pipeline_mode<synchronous>, transform_indices = @transform_1, window_bounds = array<i64: 4, 36>}, {pipeline_mode = #tpu.pipeline_mode<synchronous>, transform_indices = @transform_2, window_bounds = array<i64: 4, 100>}, {pipeline_mode = #tpu.pipeline_mode<synchronous>, transform_indices = @transform_3, window_bounds = array<i64: 4, 196>}, {pipeline_mode = #tpu.pipeline_mode<synchronous>, transform_indices = @transform_4, window_bounds = array<i64: 4, 324>}, {pipeline_mode = #tpu.pipeline_mode<synchronous>, transform_indices = @transform_5, window_bounds = array<i64: 16, 1>}, {pipeline_mode = #tpu.pipeline_mode<synchronous>, transform_indices = @transform_6, window_bounds = array<i64: 4, 4, 1>}, {pipeline_mode = #tpu.pipeline_mode<synchronous>, transform_indices = @transform_7, window_bounds = array<i64: 4, 4, 1>}, {pipeline_mode = #tpu.pipeline_mode<synchronous>, transform_indices = @transform_8, window_bounds = array<i64: 1, 384>}, {transform_indices = @transform_9, window_bounds = array<i64: 1, 4, 384>}]} {
    %c0 = arith.constant 0 : index
    %c0_0 = arith.constant 0 : index
    %c0_1 = arith.constant 0 : index
    %0 = vector.load %arg1[%c0, %c0_0, %c0_1] : memref<1x16x640xbf16, #tpu.memory_space<vmem>>, vector<1x16x640xbf16>
    %1 = vector.shape_cast %0 : vector<1x16x640xbf16> to vector<16x640xbf16>
    %c0_2 = arith.constant 0 : index
    %c0_3 = arith.constant 0 : index
    %2 = vector.load %arg6[%c0_2, %c0_3] : memref<16x1xf32, #tpu.memory_space<vmem>>, vector<16x1xf32>
    %c0_4 = arith.constant 0 : index
    %c0_5 = arith.constant 0 : index
    %3 = vector.load %arg9[%c0_4, %c0_5] : memref<1x384xf32, #tpu.memory_space<vmem>>, vector<1x384xf32>
    %4 = vector.extract_strided_slice %1 {offsets = [0, 0], sizes = [4, 640], strides = [1, 1]} : vector<16x640xbf16> to vector<4x640xbf16>
    %5 = vector.extract_strided_slice %4 {offsets = [0, 75], sizes = [4, 384], strides = [1, 1]} : vector<4x640xbf16> to vector<4x384xbf16>
    %c0_6 = arith.constant 0 : index
    %c0_7 = arith.constant 0 : index
    %6 = vector.load %arg11[%c0_6, %c0_7] : memref<656x384xbf16, #tpu.memory_space<vmem>>, vector<4x384xbf16>
    tpu.vector_store %arg11[%c0_6, %c0_7], %5 {strides = array<i32>} : memref<656x384xbf16, #tpu.memory_space<vmem>>, vector<4x384xbf16>,
    %7 = vector.extract_strided_slice %4 {offsets = [0, 76], sizes = [4, 384], strides = [1, 1]} : vector<4x640xbf16> to vector<4x384xbf16>
    %c4 = arith.constant 4 : index
    %c0_8 = arith.constant 0 : index
    %8 = vector.load %arg11[%c4, %c0_8] : memref<656x384xbf16, #tpu.memory_space<vmem>>, vector<4x384xbf16>
    tpu.vector_store %arg11[%c4, %c0_8], %7 {strides = array<i32>} : memref<656x384xbf16, #tpu.memory_space<vmem>>, vector<4x384xbf16>,
    %9 = vector.extract_strided_slice %4 {offsets = [0, 77], sizes = [4, 384], strides = [1, 1]} : vector<4x640xbf16> to vector<4x384xbf16>
    %c8 = arith.constant 8 : index
    %c0_9 = arith.constant 0 : index
    %10 = vector.load %arg11[%c8, %c0_9] : memref<656x384xbf16, #tpu.memory_space<vmem>>, vector<4x384xbf16>
    tpu.vector_store %arg11[%c8, %c0_9], %9 {strides = array<i32>} : memref<656x384xbf16, #tpu.memory_space<vmem>>, vector<4x384xbf16>,
    %11 = vector.extract_strided_slice %4 {offsets = [0, 99], sizes = [4, 384], strides = [1, 1]} : vector<4x640xbf16> to vector<4x384xbf16>
    %c12 = arith.constant 12 : index
    %c0_10 = arith.constant 0 : index
    %12 = vector.load %arg11[%c12, %c0_10] : memref<656x384xbf16, #tpu.memory_space<vmem>>, vector<4x384xbf16>
    tpu.vector_store %arg11[%c12, %c0_10], %11 {strides = array<i32>} : memref<656x384xbf16, #tpu.memory_space<vmem>>, vector<4x384xbf16>,
    %13 = vector.extract_strided_slice %4 {offsets = [0, 100], sizes = [4, 384], strides = [1, 1]} : vector<4x640xbf16> to vector<4x384xbf16>
    %c16 = arith.constant 16 : index
    %c0_11 = arith.constant 0 : index
    %14 = vector.load %arg11[%c16, %c0_11] : memref<656x384xbf16, #tpu.memory_space<vmem>>, vector<4x384xbf16>
    tpu.vector_store %arg11[%c16, %c0_11], %13 {strides = array<i32>} : memref<656x384xbf16, #tpu.memory_space<vmem>>, vector<4x384xbf16>,
    %15 = vector.extract_strided_slice %4 {offsets = [0, 101], sizes = [4, 384], strides = [1, 1]} : vector<4x640xbf16> to vector<4x384xbf16>
    %c20 = arith.constant 20 : index
    %c0_12 = arith.constant 0 : index
    %16 = vector.load %arg11[%c20, %c0_12] : memref<656x384xbf16, #tpu.memory_space<vmem>>, vector<4x384xbf16>
    tpu.vector_store %arg11[%c20, %c0_12], %15 {strides = array<i32>} : memref<656x384xbf16, #tpu.memory_space<vmem>>, vector<4x384xbf16>,
    %17 = vector.extract_strided_slice %4 {offsets = [0, 123], sizes = [4, 384], strides = [1, 1]} : vector<4x640xbf16> to vector<4x384xbf16>
    %c24 = arith.constant 24 : index
    %c0_13 = arith.constant 0 : index
    %18 = vector.load %arg11[%c24, %c0_13] : memref<656x384xbf16, #tpu.memory_space<vmem>>, vector<4x384xbf16>
    tpu.vector_store %arg11[%c24, %c0_13], %17 {strides = array<i32>} : memref<656x384xbf16, #tpu.memory_space<vmem>>, vector<4x384xbf16>,
    %19 = vector.extract_strided_slice %4 {offsets = [0, 124], sizes = [4, 384], strides = [1, 1]} : vector<4x640xbf16> to vector<4x384xbf16>
    %c28 = arith.constant 28 : index
    %c0_14 = arith.constant 0 : index
    %20 = vector.load %arg11[%c28, %c0_14] : memref<656x384xbf16, #tpu.memory_space<vmem>>, vector<4x384xbf16>
    tpu.vector_store %arg11[%c28, %c0_14], %19 {strides = array<i32>} : memref<656x384xbf16, #tpu.memory_space<vmem>>, vector<4x384xbf16>,
    %21 = vector.extract_strided_slice %4 {offsets = [0, 125], sizes = [4, 384], strides = [1, 1]} : vector<4x640xbf16> to vector<4x384xbf16>
    %c32 = arith.constant 32 : index
    %c0_15 = arith.constant 0 : index
    %22 = vector.load %arg11[%c32, %c0_15] : memref<656x384xbf16, #tpu.memory_space<vmem>>, vector<4x384xbf16>
    tpu.vector_store %arg11[%c32, %c0_15], %21 {strides = array<i32>} : memref<656x384xbf16, #tpu.memory_space<vmem>>, vector<4x384xbf16>,
    %23 = vector.extract_strided_slice %1 {offsets = [4, 0], sizes = [4, 640], strides = [1, 1]} : vector<16x640xbf16> to vector<4x640xbf16>
    %24 = vector.extract_strided_slice %23 {offsets = [0, 50], sizes = [4, 384], strides = [1, 1]} : vector<4x640xbf16> to vector<4x384xbf16>
    %c36 = arith.constant 36 : index
    %c0_16 = arith.constant 0 : index
    %25 = vector.load %arg11[%c36, %c0_16] : memref<656x384xbf16, #tpu.memory_space<vmem>>, vector<4x384xbf16>
    tpu.vector_store %arg11[%c36, %c0_16], %24 {strides = array<i32>} : memref<656x384xbf16, #tpu.memory_space<vmem>>, vector<4x384xbf16>,
    %26 = vector.extract_strided_slice %23 {offsets = [0, 51], sizes = [4, 384], strides = [1, 1]} : vector<4x640xbf16> to vector<4x384xbf16>
    %c40 = arith.constant 40 : index
    %c0_17 = arith.constant 0 : index
    %27 = vector.load %arg11[%c40, %c0_17] : memref<656x384xbf16, #tpu.memory_space<vmem>>, vector<4x384xbf16>
    tpu.vector_store %arg11[%c40, %c0_17], %26 {strides = array<i32>} : memref<656x384xbf16, #tpu.memory_space<vmem>>, vector<4x384xbf16>,
    %28 = vector.extract_strided_slice %23 {offsets = [0, 52], sizes = [4, 384], strides = [1, 1]} : vector<4x640xbf16> to vector<4x384xbf16>
    %c44 = arith.constant 44 : index
    %c0_18 = arith.constant 0 : index
    %29 = vector.load %arg11[%c44, %c0_18] : memref<656x384xbf16, #tpu.memory_space<vmem>>, vector<4x384xbf16>
    tpu.vector_store %arg11[%c44, %c0_18], %28 {strides = array<i32>} : memref<656x384xbf16, #tpu.memory_space<vmem>>, vector<4x384xbf16>,
    %30 = vector.extract_strided_slice %23 {offsets = [0, 53], sizes = [4, 384], strides = [1, 1]} : vector<4x640xbf16> to vector<4x384xbf16>
    %c48 = arith.constant 48 : index
    %c0_19 = arith.constant 0 : index
    %31 = vector.load %arg11[%c48, %c0_19] : memref<656x384xbf16, #tpu.memory_space<vmem>>, vector<4x384xbf16>
    tpu.vector_store %arg11[%c48, %c0_19], %30 {strides = array<i32>} : memref<656x384xbf16, #tpu.memory_space<vmem>>, vector<4x384xbf16>,
    %32 = vector.extract_strided_slice %23 {offsets = [0, 54], sizes = [4, 384], strides = [1, 1]} : vector<4x640xbf16> to vector<4x384xbf16>
    %c52 = arith.constant 52 : index
    %c0_20 = arith.constant 0 : index
    %33 = vector.load %arg11[%c52, %c0_20] : memref<656x384xbf16, #tpu.memory_space<vmem>>, vector<4x384xbf16>
    tpu.vector_store %arg11[%c52, %c0_20], %32 {strides = array<i32>} : memref<656x384xbf16, #tpu.memory_space<vmem>>, vector<4x384xbf16>,
    %34 = vector.extract_strided_slice %23 {offsets = [0, 74], sizes = [4, 384], strides = [1, 1]} : vector<4x640xbf16> to vector<4x384xbf16>
    %c56 = arith.constant 56 : index
    %c0_21 = arith.constant 0 : index
    %35 = vector.load %arg11[%c56, %c0_21] : memref<656x384xbf16, #tpu.memory_space<vmem>>, vector<4x384xbf16>
    tpu.vector_store %arg11[%c56, %c0_21], %34 {strides = array<i32>} : memref<656x384xbf16, #tpu.memory_space<vmem>>, vector<4x384xbf16>,
    %36 = vector.extract_strided_slice %23 {offsets = [0, 75], sizes = [4, 384], strides = [1, 1]} : vector<4x640xbf16> to vector<4x384xbf16>
    %c60 = arith.constant 60 : index
    %c0_22 = arith.constant 0 : index
    %37 = vector.load %arg11[%c60, %c0_22] : memref<656x384xbf16, #tpu.memory_space<vmem>>, vector<4x384xbf16>
    tpu.vector_store %arg11[%c60, %c0_22], %36 {strides = array<i32>} : memref<656x384xbf16, #tpu.memory_space<vmem>>, vector<4x384xbf16>,
    %38 = vector.extract_strided_slice %23 {offsets = [0, 76], sizes = [4, 384], strides = [1, 1]} : vector<4x640xbf16> to vector<4x384xbf16>
    %c64 = arith.constant 64 : index
    %c0_23 = arith.constant 0 : index
    %39 = vector.load %arg11[%c64, %c0_23] : memref<656x384xbf16, #tpu.memory_space<vmem>>, vector<4x384xbf16>
    tpu.vector_store %arg11[%c64, %c0_23], %38 {strides = array<i32>} : memref<656x384xbf16, #tpu.memory_space<vmem>>, vector<4x384xbf16>,
    %40 = vector.extract_strided_slice %23 {offsets = [0, 77], sizes = [4, 384], strides = [1, 1]} : vector<4x640xbf16> to vector<4x384xbf16>
    %c68 = arith.constant 68 : index
    %c0_24 = arith.constant 0 : index
    %41 = vector.load %arg11[%c68, %c0_24] : memref<656x384xbf16, #tpu.memory_space<vmem>>, vector<4x384xbf16>
    tpu.vector_store %arg11[%c68, %c0_24], %40 {strides = array<i32>} : memref<656x384xbf16, #tpu.memory_space<vmem>>, vector<4x384xbf16>,
    %42 = vector.extract_strided_slice %23 {offsets = [0, 78], sizes = [4, 384], strides = [1, 1]} : vector<4x640xbf16> to vector<4x384xbf16>
    %c72 = arith.constant 72 : index
    %c0_25 = arith.constant 0 : index
    %43 = vector.load %arg11[%c72, %c0_25] : memref<656x384xbf16, #tpu.memory_space<vmem>>, vector<4x384xbf16>
    tpu.vector_store %arg11[%c72, %c0_25], %42 {strides = array<i32>} : memref<656x384xbf16, #tpu.memory_space<vmem>>, vector<4x384xbf16>,
    %44 = vector.extract_strided_slice %23 {offsets = [0, 98], sizes = [4, 384], strides = [1, 1]} : vector<4x640xbf16> to vector<4x384xbf16>
    %c76 = arith.constant 76 : index
    %c0_26 = arith.constant 0 : index
    %45 = vector.load %arg11[%c76, %c0_26] : memref<656x384xbf16, #tpu.memory_space<vmem>>, vector<4x384xbf16>
    tpu.vector_store %arg11[%c76, %c0_26], %44 {strides = array<i32>} : memref<656x384xbf16, #tpu.memory_space<vmem>>, vector<4x384xbf16>,
    %46 = vector.extract_strided_slice %23 {offsets = [0, 99], sizes = [4, 384], strides = [1, 1]} : vector<4x640xbf16> to vector<4x384xbf16>
    %c80 = arith.constant 80 : index
    %c0_27 = arith.constant 0 : index
    %47 = vector.load %arg11[%c80, %c0_27] : memref<656x384xbf16, #tpu.memory_space<vmem>>, vector<4x384xbf16>
    tpu.vector_store %arg11[%c80, %c0_27], %46 {strides = array<i32>} : memref<656x384xbf16, #tpu.memory_space<vmem>>, vector<4x384xbf16>,
    %48 = vector.extract_strided_slice %23 {offsets = [0, 100], sizes = [4, 384], strides = [1, 1]} : vector<4x640xbf16> to vector<4x384xbf16>
    %c84 = arith.constant 84 : index
    %c0_28 = arith.constant 0 : index
    %49 = vector.load %arg11[%c84, %c0_28] : memref<656x384xbf16, #tpu.memory_space<vmem>>, vector<4x384xbf16>
    tpu.vector_store %arg11[%c84, %c0_28], %48 {strides = array<i32>} : memref<656x384xbf16, #tpu.memory_space<vmem>>, vector<4x384xbf16>,
    %50 = vector.extract_strided_slice %23 {offsets = [0, 101], sizes = [4, 384], strides = [1, 1]} : vector<4x640xbf16> to vector<4x384xbf16>
    %c88 = arith.constant 88 : index
    %c0_29 = arith.constant 0 : index
    %51 = vector.load %arg11[%c88, %c0_29] : memref<656x384xbf16, #tpu.memory_space<vmem>>, vector<4x384xbf16>
    tpu.vector_store %arg11[%c88, %c0_29], %50 {strides = array<i32>} : memref<656x384xbf16, #tpu.memory_space<vmem>>, vector<4x384xbf16>,
    %52 = vector.extract_strided_slice %23 {offsets = [0, 102], sizes = [4, 384], strides = [1, 1]} : vector<4x640xbf16> to vector<4x384xbf16>
    %c92 = arith.constant 92 : index
    %c0_30 = arith.constant 0 : index
    %53 = vector.load %arg11[%c92, %c0_30] : memref<656x384xbf16, #tpu.memory_space<vmem>>, vector<4x384xbf16>
    tpu.vector_store %arg11[%c92, %c0_30], %52 {strides = array<i32>} : memref<656x384xbf16, #tpu.memory_space<vmem>>, vector<4x384xbf16>,
    %54 = vector.extract_strided_slice %23 {offsets = [0, 122], sizes = [4, 384], strides = [1, 1]} : vector<4x640xbf16> to vector<4x384xbf16>
    %c96 = arith.constant 96 : index
    %c0_31 = arith.constant 0 : index
    %55 = vector.load %arg11[%c96, %c0_31] : memref<656x384xbf16, #tpu.memory_space<vmem>>, vector<4x384xbf16>
    tpu.vector_store %arg11[%c96, %c0_31], %54 {strides = array<i32>} : memref<656x384xbf16, #tpu.memory_space<vmem>>, vector<4x384xbf16>,
    %56 = vector.extract_strided_slice %23 {offsets = [0, 123], sizes = [4, 384], strides = [1, 1]} : vector<4x640xbf16> to vector<4x384xbf16>
    %c100 = arith.constant 100 : index
    %c0_32 = arith.constant 0 : index
    %57 = vector.load %arg11[%c100, %c0_32] : memref<656x384xbf16, #tpu.memory_space<vmem>>, vector<4x384xbf16>
    tpu.vector_store %arg11[%c100, %c0_32], %56 {strides = array<i32>} : memref<656x384xbf16, #tpu.memory_space<vmem>>, vector<4x384xbf16>,
    %58 = vector.extract_strided_slice %23 {offsets = [0, 124], sizes = [4, 384], strides = [1, 1]} : vector<4x640xbf16> to vector<4x384xbf16>
    %c104 = arith.constant 104 : index
    %c0_33 = arith.constant 0 : index
    %59 = vector.load %arg11[%c104, %c0_33] : memref<656x384xbf16, #tpu.memory_space<vmem>>, vector<4x384xbf16>
    tpu.vector_store %arg11[%c104, %c0_33], %58 {strides = array<i32>} : memref<656x384xbf16, #tpu.memory_space<vmem>>, vector<4x384xbf16>,
    %60 = vector.extract_strided_slice %23 {offsets = [0, 125], sizes = [4, 384], strides = [1, 1]} : vector<4x640xbf16> to vector<4x384xbf16>
    %c108 = arith.constant 108 : index
    %c0_34 = arith.constant 0 : index
    %61 = vector.load %arg11[%c108, %c0_34] : memref<656x384xbf16, #tpu.memory_space<vmem>>, vector<4x384xbf16>
    tpu.vector_store %arg11[%c108, %c0_34], %60 {strides = array<i32>} : memref<656x384xbf16, #tpu.memory_space<vmem>>, vector<4x384xbf16>,
    %62 = vector.extract_strided_slice %23 {offsets = [0, 126], sizes = [4, 384], strides = [1, 1]} : vector<4x640xbf16> to vector<4x384xbf16>
    %c112 = arith.constant 112 : index
    %c0_35 = arith.constant 0 : index
    %63 = vector.load %arg11[%c112, %c0_35] : memref<656x384xbf16, #tpu.memory_space<vmem>>, vector<4x384xbf16>
    tpu.vector_store %arg11[%c112, %c0_35], %62 {strides = array<i32>} : memref<656x384xbf16, #tpu.memory_space<vmem>>, vector<4x384xbf16>,
    %64 = vector.extract_strided_slice %23 {offsets = [0, 146], sizes = [4, 384], strides = [1, 1]} : vector<4x640xbf16> to vector<4x384xbf16>
    %c116 = arith.constant 116 : index
    %c0_36 = arith.constant 0 : index
    %65 = vector.load %arg11[%c116, %c0_36] : memref<656x384xbf16, #tpu.memory_space<vmem>>, vector<4x384xbf16>
    tpu.vector_store %arg11[%c116, %c0_36], %64 {strides = array<i32>} : memref<656x384xbf16, #tpu.memory_space<vmem>>, vector<4x384xbf16>,
    %66 = vector.extract_strided_slice %23 {offsets = [0, 147], sizes = [4, 384], strides = [1, 1]} : vector<4x640xbf16> to vector<4x384xbf16>
    %c120 = arith.constant 120 : index
    %c0_37 = arith.constant 0 : index
    %67 = vector.load %arg11[%c120, %c0_37] : memref<656x384xbf16, #tpu.memory_space<vmem>>, vector<4x384xbf16>
    tpu.vector_store %arg11[%c120, %c0_37], %66 {strides = array<i32>} : memref<656x384xbf16, #tpu.memory_space<vmem>>, vector<4x384xbf16>,
    %68 = vector.extract_strided_slice %23 {offsets = [0, 148], sizes = [4, 384], strides = [1, 1]} : vector<4x640xbf16> to vector<4x384xbf16>
    %c124 = arith.constant 124 : index
    %c0_38 = arith.constant 0 : index
    %69 = vector.load %arg11[%c124, %c0_38] : memref<656x384xbf16, #tpu.memory_space<vmem>>, vector<4x384xbf16>
    tpu.vector_store %arg11[%c124, %c0_38], %68 {strides = array<i32>} : memref<656x384xbf16, #tpu.memory_space<vmem>>, vector<4x384xbf16>,
    %70 = vector.extract_strided_slice %23 {offsets = [0, 149], sizes = [4, 384], strides = [1, 1]} : vector<4x640xbf16> to vector<4x384xbf16>
    %c128 = arith.constant 128 : index
    %c0_39 = arith.constant 0 : index
    %71 = vector.load %arg11[%c128, %c0_39] : memref<656x384xbf16, #tpu.memory_space<vmem>>, vector<4x384xbf16>
    tpu.vector_store %arg11[%c128, %c0_39], %70 {strides = array<i32>} : memref<656x384xbf16, #tpu.memory_space<vmem>>, vector<4x384xbf16>,
    %72 = vector.extract_strided_slice %23 {offsets = [0, 150], sizes = [4, 384], strides = [1, 1]} : vector<4x640xbf16> to vector<4x384xbf16>
    %c132 = arith.constant 132 : index
    %c0_40 = arith.constant 0 : index
    %73 = vector.load %arg11[%c132, %c0_40] : memref<656x384xbf16, #tpu.memory_space<vmem>>, vector<4x384xbf16>
    tpu.vector_store %arg11[%c132, %c0_40], %72 {strides = array<i32>} : memref<656x384xbf16, #tpu.memory_space<vmem>>, vector<4x384xbf16>,
    %74 = vector.extract_strided_slice %1 {offsets = [8, 0], sizes = [4, 640], strides = [1, 1]} : vector<16x640xbf16> to vector<4x640xbf16>
    %75 = vector.extract_strided_slice %74 {offsets = [0, 25], sizes = [4, 384], strides = [1, 1]} : vector<4x640xbf16> to vector<4x384xbf16>
    %c136 = arith.constant 136 : index
    %c0_41 = arith.constant 0 : index
    %76 = vector.load %arg11[%c136, %c0_41] : memref<656x384xbf16, #tpu.memory_space<vmem>>, vector<4x384xbf16>
    tpu.vector_store %arg11[%c136, %c0_41], %75 {strides = array<i32>} : memref<656x384xbf16, #tpu.memory_space<vmem>>, vector<4x384xbf16>,
    %77 = vector.extract_strided_slice %74 {offsets = [0, 26], sizes = [4, 384], strides = [1, 1]} : vector<4x640xbf16> to vector<4x384xbf16>
    %c140 = arith.constant 140 : index
    %c0_42 = arith.constant 0 : index
    %78 = vector.load %arg11[%c140, %c0_42] : memref<656x384xbf16, #tpu.memory_space<vmem>>, vector<4x384xbf16>
    tpu.vector_store %arg11[%c140, %c0_42], %77 {strides = array<i32>} : memref<656x384xbf16, #tpu.memory_space<vmem>>, vector<4x384xbf16>,
    %79 = vector.extract_strided_slice %74 {offsets = [0, 27], sizes = [4, 384], strides = [1, 1]} : vector<4x640xbf16> to vector<4x384xbf16>
    %c144 = arith.constant 144 : index
    %c0_43 = arith.constant 0 : index
    %80 = vector.load %arg11[%c144, %c0_43] : memref<656x384xbf16, #tpu.memory_space<vmem>>, vector<4x384xbf16>
    tpu.vector_store %arg11[%c144, %c0_43], %79 {strides = array<i32>} : memref<656x384xbf16, #tpu.memory_space<vmem>>, vector<4x384xbf16>,
    %81 = vector.extract_strided_slice %74 {offsets = [0, 28], sizes = [4, 384], strides = [1, 1]} : vector<4x640xbf16> to vector<4x384xbf16>
    %c148 = arith.constant 148 : index
    %c0_44 = arith.constant 0 : index
    %82 = vector.load %arg11[%c148, %c0_44] : memref<656x384xbf16, #tpu.memory_space<vmem>>, vector<4x384xbf16>
    tpu.vector_store %arg11[%c148, %c0_44], %81 {strides = array<i32>} : memref<656x384xbf16, #tpu.memory_space<vmem>>, vector<4x384xbf16>,
    %83 = vector.extract_strided_slice %74 {offsets = [0, 29], sizes = [4, 384], strides = [1, 1]} : vector<4x640xbf16> to vector<4x384xbf16>
    %c152 = arith.constant 152 : index
    %c0_45 = arith.constant 0 : index
    %84 = vector.load %arg11[%c152, %c0_45] : memref<656x384xbf16, #tpu.memory_space<vmem>>, vector<4x384xbf16>
    tpu.vector_store %arg11[%c152, %c0_45], %83 {strides = array<i32>} : memref<656x384xbf16, #tpu.memory_space<vmem>>, vector<4x384xbf16>,
    %85 = vector.extract_strided_slice %74 {offsets = [0, 30], sizes = [4, 384], strides = [1, 1]} : vector<4x640xbf16> to vector<4x384xbf16>
    %c156 = arith.constant 156 : index
    %c0_46 = arith.constant 0 : index
    %86 = vector.load %arg11[%c156, %c0_46] : memref<656x384xbf16, #tpu.memory_space<vmem>>, vector<4x384xbf16>
    tpu.vector_store %arg11[%c156, %c0_46], %85 {strides = array<i32>} : memref<656x384xbf16, #tpu.memory_space<vmem>>, vector<4x384xbf16>,
    %87 = vector.extract_strided_slice %74 {offsets = [0, 31], sizes = [4, 384], strides = [1, 1]} : vector<4x640xbf16> to vector<4x384xbf16>
    %c160 = arith.constant 160 : index
    %c0_47 = arith.constant 0 : index
    %88 = vector.load %arg11[%c160, %c0_47] : memref<656x384xbf16, #tpu.memory_space<vmem>>, vector<4x384xbf16>
    tpu.vector_store %arg11[%c160, %c0_47], %87 {strides = array<i32>} : memref<656x384xbf16, #tpu.memory_space<vmem>>, vector<4x384xbf16>,
    %89 = vector.extract_strided_slice %74 {offsets = [0, 49], sizes = [4, 384], strides = [1, 1]} : vector<4x640xbf16> to vector<4x384xbf16>
    %c164 = arith.constant 164 : index
    %c0_48 = arith.constant 0 : index
    %90 = vector.load %arg11[%c164, %c0_48] : memref<656x384xbf16, #tpu.memory_space<vmem>>, vector<4x384xbf16>
    tpu.vector_store %arg11[%c164, %c0_48], %89 {strides = array<i32>} : memref<656x384xbf16, #tpu.memory_space<vmem>>, vector<4x384xbf16>,
    %91 = vector.extract_strided_slice %74 {offsets = [0, 50], sizes = [4, 384], strides = [1, 1]} : vector<4x640xbf16> to vector<4x384xbf16>
    %c168 = arith.constant 168 : index
    %c0_49 = arith.constant 0 : index
    %92 = vector.load %arg11[%c168, %c0_49] : memref<656x384xbf16, #tpu.memory_space<vmem>>, vector<4x384xbf16>
    tpu.vector_store %arg11[%c168, %c0_49], %91 {strides = array<i32>} : memref<656x384xbf16, #tpu.memory_space<vmem>>, vector<4x384xbf16>,
    %93 = vector.extract_strided_slice %74 {offsets = [0, 51], sizes = [4, 384], strides = [1, 1]} : vector<4x640xbf16> to vector<4x384xbf16>
    %c172 = arith.constant 172 : index
    %c0_50 = arith.constant 0 : index
    %94 = vector.load %arg11[%c172, %c0_50] : memref<656x384xbf16, #tpu.memory_space<vmem>>, vector<4x384xbf16>
    tpu.vector_store %arg11[%c172, %c0_50], %93 {strides = array<i32>} : memref<656x384xbf16, #tpu.memory_space<vmem>>, vector<4x384xbf16>,
    %95 = vector.extract_strided_slice %74 {offsets = [0, 52], sizes = [4, 384], strides = [1, 1]} : vector<4x640xbf16> to vector<4x384xbf16>
    %c176 = arith.constant 176 : index
    %c0_51 = arith.constant 0 : index
    %96 = vector.load %arg11[%c176, %c0_51] : memref<656x384xbf16, #tpu.memory_space<vmem>>, vector<4x384xbf16>
    tpu.vector_store %arg11[%c176, %c0_51], %95 {strides = array<i32>} : memref<656x384xbf16, #tpu.memory_space<vmem>>, vector<4x384xbf16>,
    %97 = vector.extract_strided_slice %74 {offsets = [0, 53], sizes = [4, 384], strides = [1, 1]} : vector<4x640xbf16> to vector<4x384xbf16>
    %c180 = arith.constant 180 : index
    %c0_52 = arith.constant 0 : index
    %98 = vector.load %arg11[%c180, %c0_52] : memref<656x384xbf16, #tpu.memory_space<vmem>>, vector<4x384xbf16>
    tpu.vector_store %arg11[%c180, %c0_52], %97 {strides = array<i32>} : memref<656x384xbf16, #tpu.memory_space<vmem>>, vector<4x384xbf16>,
    %99 = vector.extract_strided_slice %74 {offsets = [0, 54], sizes = [4, 384], strides = [1, 1]} : vector<4x640xbf16> to vector<4x384xbf16>
    %c184 = arith.constant 184 : index
    %c0_53 = arith.constant 0 : index
    %100 = vector.load %arg11[%c184, %c0_53] : memref<656x384xbf16, #tpu.memory_space<vmem>>, vector<4x384xbf16>
    tpu.vector_store %arg11[%c184, %c0_53], %99 {strides = array<i32>} : memref<656x384xbf16, #tpu.memory_space<vmem>>, vector<4x384xbf16>,
    %101 = vector.extract_strided_slice %74 {offsets = [0, 55], sizes = [4, 384], strides = [1, 1]} : vector<4x640xbf16> to vector<4x384xbf16>
    %c188 = arith.constant 188 : index
    %c0_54 = arith.constant 0 : index
    %102 = vector.load %arg11[%c188, %c0_54] : memref<656x384xbf16, #tpu.memory_space<vmem>>, vector<4x384xbf16>
    tpu.vector_store %arg11[%c188, %c0_54], %101 {strides = array<i32>} : memref<656x384xbf16, #tpu.memory_space<vmem>>, vector<4x384xbf16>,
    %103 = vector.extract_strided_slice %74 {offsets = [0, 73], sizes = [4, 384], strides = [1, 1]} : vector<4x640xbf16> to vector<4x384xbf16>
    %c192 = arith.constant 192 : index
    %c0_55 = arith.constant 0 : index
    %104 = vector.load %arg11[%c192, %c0_55] : memref<656x384xbf16, #tpu.memory_space<vmem>>, vector<4x384xbf16>
    tpu.vector_store %arg11[%c192, %c0_55], %103 {strides = array<i32>} : memref<656x384xbf16, #tpu.memory_space<vmem>>, vector<4x384xbf16>,
    %105 = vector.extract_strided_slice %74 {offsets = [0, 74], sizes = [4, 384], strides = [1, 1]} : vector<4x640xbf16> to vector<4x384xbf16>
    %c196 = arith.constant 196 : index
    %c0_56 = arith.constant 0 : index
    %106 = vector.load %arg11[%c196, %c0_56] : memref<656x384xbf16, #tpu.memory_space<vmem>>, vector<4x384xbf16>
    tpu.vector_store %arg11[%c196, %c0_56], %105 {strides = array<i32>} : memref<656x384xbf16, #tpu.memory_space<vmem>>, vector<4x384xbf16>,
    %107 = vector.extract_strided_slice %74 {offsets = [0, 75], sizes = [4, 384], strides = [1, 1]} : vector<4x640xbf16> to vector<4x384xbf16>
    %c200 = arith.constant 200 : index
    %c0_57 = arith.constant 0 : index
    %108 = vector.load %arg11[%c200, %c0_57] : memref<656x384xbf16, #tpu.memory_space<vmem>>, vector<4x384xbf16>
    tpu.vector_store %arg11[%c200, %c0_57], %107 {strides = array<i32>} : memref<656x384xbf16, #tpu.memory_space<vmem>>, vector<4x384xbf16>,
    %109 = vector.extract_strided_slice %74 {offsets = [0, 76], sizes = [4, 384], strides = [1, 1]} : vector<4x640xbf16> to vector<4x384xbf16>
    %c204 = arith.constant 204 : index
    %c0_58 = arith.constant 0 : index
    %110 = vector.load %arg11[%c204, %c0_58] : memref<656x384xbf16, #tpu.memory_space<vmem>>, vector<4x384xbf16>
    tpu.vector_store %arg11[%c204, %c0_58], %109 {strides = array<i32>} : memref<656x384xbf16, #tpu.memory_space<vmem>>, vector<4x384xbf16>,
    %111 = vector.extract_strided_slice %74 {offsets = [0, 77], sizes = [4, 384], strides = [1, 1]} : vector<4x640xbf16> to vector<4x384xbf16>
    %c208 = arith.constant 208 : index
    %c0_59 = arith.constant 0 : index
    %112 = vector.load %arg11[%c208, %c0_59] : memref<656x384xbf16, #tpu.memory_space<vmem>>, vector<4x384xbf16>
    tpu.vector_store %arg11[%c208, %c0_59], %111 {strides = array<i32>} : memref<656x384xbf16, #tpu.memory_space<vmem>>, vector<4x384xbf16>,
    %113 = vector.extract_strided_slice %74 {offsets = [0, 78], sizes = [4, 384], strides = [1, 1]} : vector<4x640xbf16> to vector<4x384xbf16>
    %c212 = arith.constant 212 : index
    %c0_60 = arith.constant 0 : index
    %114 = vector.load %arg11[%c212, %c0_60] : memref<656x384xbf16, #tpu.memory_space<vmem>>, vector<4x384xbf16>
    tpu.vector_store %arg11[%c212, %c0_60], %113 {strides = array<i32>} : memref<656x384xbf16, #tpu.memory_space<vmem>>, vector<4x384xbf16>,
    %115 = vector.extract_strided_slice %74 {offsets = [0, 79], sizes = [4, 384], strides = [1, 1]} : vector<4x640xbf16> to vector<4x384xbf16>
    %c216 = arith.constant 216 : index
    %c0_61 = arith.constant 0 : index
    %116 = vector.load %arg11[%c216, %c0_61] : memref<656x384xbf16, #tpu.memory_space<vmem>>, vector<4x384xbf16>
    tpu.vector_store %arg11[%c216, %c0_61], %115 {strides = array<i32>} : memref<656x384xbf16, #tpu.memory_space<vmem>>, vector<4x384xbf16>,
    %117 = vector.extract_strided_slice %74 {offsets = [0, 97], sizes = [4, 384], strides = [1, 1]} : vector<4x640xbf16> to vector<4x384xbf16>
    %c220 = arith.constant 220 : index
    %c0_62 = arith.constant 0 : index
    %118 = vector.load %arg11[%c220, %c0_62] : memref<656x384xbf16, #tpu.memory_space<vmem>>, vector<4x384xbf16>
    tpu.vector_store %arg11[%c220, %c0_62], %117 {strides = array<i32>} : memref<656x384xbf16, #tpu.memory_space<vmem>>, vector<4x384xbf16>,
    %119 = vector.extract_strided_slice %74 {offsets = [0, 98], sizes = [4, 384], strides = [1, 1]} : vector<4x640xbf16> to vector<4x384xbf16>
    %c224 = arith.constant 224 : index
    %c0_63 = arith.constant 0 : index
    %120 = vector.load %arg11[%c224, %c0_63] : memref<656x384xbf16, #tpu.memory_space<vmem>>, vector<4x384xbf16>
    tpu.vector_store %arg11[%c224, %c0_63], %119 {strides = array<i32>} : memref<656x384xbf16, #tpu.memory_space<vmem>>, vector<4x384xbf16>,
    %121 = vector.extract_strided_slice %74 {offsets = [0, 99], sizes = [4, 384], strides = [1, 1]} : vector<4x640xbf16> to vector<4x384xbf16>
    %c228 = arith.constant 228 : index
    %c0_64 = arith.constant 0 : index
    %122 = vector.load %arg11[%c228, %c0_64] : memref<656x384xbf16, #tpu.memory_space<vmem>>, vector<4x384xbf16>
    tpu.vector_store %arg11[%c228, %c0_64], %121 {strides = array<i32>} : memref<656x384xbf16, #tpu.memory_space<vmem>>, vector<4x384xbf16>,
    %123 = vector.extract_strided_slice %74 {offsets = [0, 100], sizes = [4, 384], strides = [1, 1]} : vector<4x640xbf16> to vector<4x384xbf16>
    %c232 = arith.constant 232 : index
    %c0_65 = arith.constant 0 : index
    %124 = vector.load %arg11[%c232, %c0_65] : memref<656x384xbf16, #tpu.memory_space<vmem>>, vector<4x384xbf16>
    tpu.vector_store %arg11[%c232, %c0_65], %123 {strides = array<i32>} : memref<656x384xbf16, #tpu.memory_space<vmem>>, vector<4x384xbf16>,
    %125 = vector.extract_strided_slice %74 {offsets = [0, 101], sizes = [4, 384], strides = [1, 1]} : vector<4x640xbf16> to vector<4x384xbf16>
    %c236 = arith.constant 236 : index
    %c0_66 = arith.constant 0 : index
    %126 = vector.load %arg11[%c236, %c0_66] : memref<656x384xbf16, #tpu.memory_space<vmem>>, vector<4x384xbf16>
    tpu.vector_store %arg11[%c236, %c0_66], %125 {strides = array<i32>} : memref<656x384xbf16, #tpu.memory_space<vmem>>, vector<4x384xbf16>,
    %127 = vector.extract_strided_slice %74 {offsets = [0, 102], sizes = [4, 384], strides = [1, 1]} : vector<4x640xbf16> to vector<4x384xbf16>
    %c240 = arith.constant 240 : index
    %c0_67 = arith.constant 0 : index
    %128 = vector.load %arg11[%c240, %c0_67] : memref<656x384xbf16, #tpu.memory_space<vmem>>, vector<4x384xbf16>
    tpu.vector_store %arg11[%c240, %c0_67], %127 {strides = array<i32>} : memref<656x384xbf16, #tpu.memory_space<vmem>>, vector<4x384xbf16>,
    %129 = vector.extract_strided_slice %74 {offsets = [0, 103], sizes = [4, 384], strides = [1, 1]} : vector<4x640xbf16> to vector<4x384xbf16>
    %c244 = arith.constant 244 : index
    %c0_68 = arith.constant 0 : index
    %130 = vector.load %arg11[%c244, %c0_68] : memref<656x384xbf16, #tpu.memory_space<vmem>>, vector<4x384xbf16>
    tpu.vector_store %arg11[%c244, %c0_68], %129 {strides = array<i32>} : memref<656x384xbf16, #tpu.memory_space<vmem>>, vector<4x384xbf16>,
    %131 = vector.extract_strided_slice %74 {offsets = [0, 121], sizes = [4, 384], strides = [1, 1]} : vector<4x640xbf16> to vector<4x384xbf16>
    %c248 = arith.constant 248 : index
    %c0_69 = arith.constant 0 : index
    %132 = vector.load %arg11[%c248, %c0_69] : memref<656x384xbf16, #tpu.memory_space<vmem>>, vector<4x384xbf16>
    tpu.vector_store %arg11[%c248, %c0_69], %131 {strides = array<i32>} : memref<656x384xbf16, #tpu.memory_space<vmem>>, vector<4x384xbf16>,
    %133 = vector.extract_strided_slice %74 {offsets = [0, 122], sizes = [4, 384], strides = [1, 1]} : vector<4x640xbf16> to vector<4x384xbf16>
    %c252 = arith.constant 252 : index
    %c0_70 = arith.constant 0 : index
    %134 = vector.load %arg11[%c252, %c0_70] : memref<656x384xbf16, #tpu.memory_space<vmem>>, vector<4x384xbf16>
    tpu.vector_store %arg11[%c252, %c0_70], %133 {strides = array<i32>} : memref<656x384xbf16, #tpu.memory_space<vmem>>, vector<4x384xbf16>,
    %135 = vector.extract_strided_slice %74 {offsets = [0, 123], sizes = [4, 384], strides = [1, 1]} : vector<4x640xbf16> to vector<4x384xbf16>
    %c256 = arith.constant 256 : index
    %c0_71 = arith.constant 0 : index
    %136 = vector.load %arg11[%c256, %c0_71] : memref<656x384xbf16, #tpu.memory_space<vmem>>, vector<4x384xbf16>
    tpu.vector_store %arg11[%c256, %c0_71], %135 {strides = array<i32>} : memref<656x384xbf16, #tpu.memory_space<vmem>>, vector<4x384xbf16>,
    %137 = vector.extract_strided_slice %74 {offsets = [0, 124], sizes = [4, 384], strides = [1, 1]} : vector<4x640xbf16> to vector<4x384xbf16>
    %c260 = arith.constant 260 : index
    %c0_72 = arith.constant 0 : index
    %138 = vector.load %arg11[%c260, %c0_72] : memref<656x384xbf16, #tpu.memory_space<vmem>>, vector<4x384xbf16>
    tpu.vector_store %arg11[%c260, %c0_72], %137 {strides = array<i32>} : memref<656x384xbf16, #tpu.memory_space<vmem>>, vector<4x384xbf16>,
    %139 = vector.extract_strided_slice %74 {offsets = [0, 125], sizes = [4, 384], strides = [1, 1]} : vector<4x640xbf16> to vector<4x384xbf16>
    %c264 = arith.constant 264 : index
    %c0_73 = arith.constant 0 : index
    %140 = vector.load %arg11[%c264, %c0_73] : memref<656x384xbf16, #tpu.memory_space<vmem>>, vector<4x384xbf16>
    tpu.vector_store %arg11[%c264, %c0_73], %139 {strides = array<i32>} : memref<656x384xbf16, #tpu.memory_space<vmem>>, vector<4x384xbf16>,
    %141 = vector.extract_strided_slice %74 {offsets = [0, 126], sizes = [4, 384], strides = [1, 1]} : vector<4x640xbf16> to vector<4x384xbf16>
    %c268 = arith.constant 268 : index
    %c0_74 = arith.constant 0 : index
    %142 = vector.load %arg11[%c268, %c0_74] : memref<656x384xbf16, #tpu.memory_space<vmem>>, vector<4x384xbf16>
    tpu.vector_store %arg11[%c268, %c0_74], %141 {strides = array<i32>} : memref<656x384xbf16, #tpu.memory_space<vmem>>, vector<4x384xbf16>,
    %143 = vector.extract_strided_slice %74 {offsets = [0, 127], sizes = [4, 384], strides = [1, 1]} : vector<4x640xbf16> to vector<4x384xbf16>
    %c272 = arith.constant 272 : index
    %c0_75 = arith.constant 0 : index
    %144 = vector.load %arg11[%c272, %c0_75] : memref<656x384xbf16, #tpu.memory_space<vmem>>, vector<4x384xbf16>
    tpu.vector_store %arg11[%c272, %c0_75], %143 {strides = array<i32>} : memref<656x384xbf16, #tpu.memory_space<vmem>>, vector<4x384xbf16>,
    %145 = vector.extract_strided_slice %74 {offsets = [0, 145], sizes = [4, 384], strides = [1, 1]} : vector<4x640xbf16> to vector<4x384xbf16>
    %c276 = arith.constant 276 : index
    %c0_76 = arith.constant 0 : index
    %146 = vector.load %arg11[%c276, %c0_76] : memref<656x384xbf16, #tpu.memory_space<vmem>>, vector<4x384xbf16>
    tpu.vector_store %arg11[%c276, %c0_76], %145 {strides = array<i32>} : memref<656x384xbf16, #tpu.memory_space<vmem>>, vector<4x384xbf16>,
    %147 = vector.extract_strided_slice %74 {offsets = [0, 146], sizes = [4, 384], strides = [1, 1]} : vector<4x640xbf16> to vector<4x384xbf16>
    %c280 = arith.constant 280 : index
    %c0_77 = arith.constant 0 : index
    %148 = vector.load %arg11[%c280, %c0_77] : memref<656x384xbf16, #tpu.memory_space<vmem>>, vector<4x384xbf16>
    tpu.vector_store %arg11[%c280, %c0_77], %147 {strides = array<i32>} : memref<656x384xbf16, #tpu.memory_space<vmem>>, vector<4x384xbf16>,
    %149 = vector.extract_strided_slice %74 {offsets = [0, 147], sizes = [4, 384], strides = [1, 1]} : vector<4x640xbf16> to vector<4x384xbf16>
    %c284 = arith.constant 284 : index
    %c0_78 = arith.constant 0 : index
    %150 = vector.load %arg11[%c284, %c0_78] : memref<656x384xbf16, #tpu.memory_space<vmem>>, vector<4x384xbf16>
    tpu.vector_store %arg11[%c284, %c0_78], %149 {strides = array<i32>} : memref<656x384xbf16, #tpu.memory_space<vmem>>, vector<4x384xbf16>,
    %151 = vector.extract_strided_slice %74 {offsets = [0, 148], sizes = [4, 384], strides = [1, 1]} : vector<4x640xbf16> to vector<4x384xbf16>
    %c288 = arith.constant 288 : index
    %c0_79 = arith.constant 0 : index
    %152 = vector.load %arg11[%c288, %c0_79] : memref<656x384xbf16, #tpu.memory_space<vmem>>, vector<4x384xbf16>
    tpu.vector_store %arg11[%c288, %c0_79], %151 {strides = array<i32>} : memref<656x384xbf16, #tpu.memory_space<vmem>>, vector<4x384xbf16>,
    %153 = vector.extract_strided_slice %74 {offsets = [0, 149], sizes = [4, 384], strides = [1, 1]} : vector<4x640xbf16> to vector<4x384xbf16>
    %c292 = arith.constant 292 : index
    %c0_80 = arith.constant 0 : index
    %154 = vector.load %arg11[%c292, %c0_80] : memref<656x384xbf16, #tpu.memory_space<vmem>>, vector<4x384xbf16>
    tpu.vector_store %arg11[%c292, %c0_80], %153 {strides = array<i32>} : memref<656x384xbf16, #tpu.memory_space<vmem>>, vector<4x384xbf16>,
    %155 = vector.extract_strided_slice %74 {offsets = [0, 150], sizes = [4, 384], strides = [1, 1]} : vector<4x640xbf16> to vector<4x384xbf16>
    %c296 = arith.constant 296 : index
    %c0_81 = arith.constant 0 : index
    %156 = vector.load %arg11[%c296, %c0_81] : memref<656x384xbf16, #tpu.memory_space<vmem>>, vector<4x384xbf16>
    tpu.vector_store %arg11[%c296, %c0_81], %155 {strides = array<i32>} : memref<656x384xbf16, #tpu.memory_space<vmem>>, vector<4x384xbf16>,
    %157 = vector.extract_strided_slice %74 {offsets = [0, 151], sizes = [4, 384], strides = [1, 1]} : vector<4x640xbf16> to vector<4x384xbf16>
    %c300 = arith.constant 300 : index
    %c0_82 = arith.constant 0 : index
    %158 = vector.load %arg11[%c300, %c0_82] : memref<656x384xbf16, #tpu.memory_space<vmem>>, vector<4x384xbf16>
    tpu.vector_store %arg11[%c300, %c0_82], %157 {strides = array<i32>} : memref<656x384xbf16, #tpu.memory_space<vmem>>, vector<4x384xbf16>,
    %159 = vector.extract_strided_slice %74 {offsets = [0, 169], sizes = [4, 384], strides = [1, 1]} : vector<4x640xbf16> to vector<4x384xbf16>
    %c304 = arith.constant 304 : index
    %c0_83 = arith.constant 0 : index
    %160 = vector.load %arg11[%c304, %c0_83] : memref<656x384xbf16, #tpu.memory_space<vmem>>, vector<4x384xbf16>
    tpu.vector_store %arg11[%c304, %c0_83], %159 {strides = array<i32>} : memref<656x384xbf16, #tpu.memory_space<vmem>>, vector<4x384xbf16>,
    %161 = vector.extract_strided_slice %74 {offsets = [0, 170], sizes = [4, 384], strides = [1, 1]} : vector<4x640xbf16> to vector<4x384xbf16>
    %c308 = arith.constant 308 : index
    %c0_84 = arith.constant 0 : index
    %162 = vector.load %arg11[%c308, %c0_84] : memref<656x384xbf16, #tpu.memory_space<vmem>>, vector<4x384xbf16>
    tpu.vector_store %arg11[%c308, %c0_84], %161 {strides = array<i32>} : memref<656x384xbf16, #tpu.memory_space<vmem>>, vector<4x384xbf16>,
    %163 = vector.extract_strided_slice %74 {offsets = [0, 171], sizes = [4, 384], strides = [1, 1]} : vector<4x640xbf16> to vector<4x384xbf16>
    %c312 = arith.constant 312 : index
    %c0_85 = arith.constant 0 : index
    %164 = vector.load %arg11[%c312, %c0_85] : memref<656x384xbf16, #tpu.memory_space<vmem>>, vector<4x384xbf16>
    tpu.vector_store %arg11[%c312, %c0_85], %163 {strides = array<i32>} : memref<656x384xbf16, #tpu.memory_space<vmem>>, vector<4x384xbf16>,
    %165 = vector.extract_strided_slice %74 {offsets = [0, 172], sizes = [4, 384], strides = [1, 1]} : vector<4x640xbf16> to vector<4x384xbf16>
    %c316 = arith.constant 316 : index
    %c0_86 = arith.constant 0 : index
    %166 = vector.load %arg11[%c316, %c0_86] : memref<656x384xbf16, #tpu.memory_space<vmem>>, vector<4x384xbf16>
    tpu.vector_store %arg11[%c316, %c0_86], %165 {strides = array<i32>} : memref<656x384xbf16, #tpu.memory_space<vmem>>, vector<4x384xbf16>,
    %167 = vector.extract_strided_slice %74 {offsets = [0, 173], sizes = [4, 384], strides = [1, 1]} : vector<4x640xbf16> to vector<4x384xbf16>
    %c320 = arith.constant 320 : index
    %c0_87 = arith.constant 0 : index
    %168 = vector.load %arg11[%c320, %c0_87] : memref<656x384xbf16, #tpu.memory_space<vmem>>, vector<4x384xbf16>
    tpu.vector_store %arg11[%c320, %c0_87], %167 {strides = array<i32>} : memref<656x384xbf16, #tpu.memory_space<vmem>>, vector<4x384xbf16>,
    %169 = vector.extract_strided_slice %74 {offsets = [0, 174], sizes = [4, 384], strides = [1, 1]} : vector<4x640xbf16> to vector<4x384xbf16>
    %c324 = arith.constant 324 : index
    %c0_88 = arith.constant 0 : index
    %170 = vector.load %arg11[%c324, %c0_88] : memref<656x384xbf16, #tpu.memory_space<vmem>>, vector<4x384xbf16>
    tpu.vector_store %arg11[%c324, %c0_88], %169 {strides = array<i32>} : memref<656x384xbf16, #tpu.memory_space<vmem>>, vector<4x384xbf16>,
    %171 = vector.extract_strided_slice %74 {offsets = [0, 175], sizes = [4, 384], strides = [1, 1]} : vector<4x640xbf16> to vector<4x384xbf16>
    %c328 = arith.constant 328 : index
    %c0_89 = arith.constant 0 : index
    %172 = vector.load %arg11[%c328, %c0_89] : memref<656x384xbf16, #tpu.memory_space<vmem>>, vector<4x384xbf16>
    tpu.vector_store %arg11[%c328, %c0_89], %171 {strides = array<i32>} : memref<656x384xbf16, #tpu.memory_space<vmem>>, vector<4x384xbf16>,
    %173 = vector.extract_strided_slice %1 {offsets = [12, 0], sizes = [4, 640], strides = [1, 1]} : vector<16x640xbf16> to vector<4x640xbf16>
    %174 = vector.extract_strided_slice %173 {offsets = [0, 0], sizes = [4, 384], strides = [1, 1]} : vector<4x640xbf16> to vector<4x384xbf16>
    %c332 = arith.constant 332 : index
    %c0_90 = arith.constant 0 : index
    %175 = vector.load %arg11[%c332, %c0_90] : memref<656x384xbf16, #tpu.memory_space<vmem>>, vector<4x384xbf16>
    tpu.vector_store %arg11[%c332, %c0_90], %174 {strides = array<i32>} : memref<656x384xbf16, #tpu.memory_space<vmem>>, vector<4x384xbf16>,
    %176 = vector.extract_strided_slice %173 {offsets = [0, 1], sizes = [4, 384], strides = [1, 1]} : vector<4x640xbf16> to vector<4x384xbf16>
    %c336 = arith.constant 336 : index
    %c0_91 = arith.constant 0 : index
    %177 = vector.load %arg11[%c336, %c0_91] : memref<656x384xbf16, #tpu.memory_space<vmem>>, vector<4x384xbf16>
    tpu.vector_store %arg11[%c336, %c0_91], %176 {strides = array<i32>} : memref<656x384xbf16, #tpu.memory_space<vmem>>, vector<4x384xbf16>,
    %178 = vector.extract_strided_slice %173 {offsets = [0, 2], sizes = [4, 384], strides = [1, 1]} : vector<4x640xbf16> to vector<4x384xbf16>
    %c340 = arith.constant 340 : index
    %c0_92 = arith.constant 0 : index
    %179 = vector.load %arg11[%c340, %c0_92] : memref<656x384xbf16, #tpu.memory_space<vmem>>, vector<4x384xbf16>
    tpu.vector_store %arg11[%c340, %c0_92], %178 {strides = array<i32>} : memref<656x384xbf16, #tpu.memory_space<vmem>>, vector<4x384xbf16>,
    %180 = vector.extract_strided_slice %173 {offsets = [0, 3], sizes = [4, 384], strides = [1, 1]} : vector<4x640xbf16> to vector<4x384xbf16>
    %c344 = arith.constant 344 : index
    %c0_93 = arith.constant 0 : index
    %181 = vector.load %arg11[%c344, %c0_93] : memref<656x384xbf16, #tpu.memory_space<vmem>>, vector<4x384xbf16>
    tpu.vector_store %arg11[%c344, %c0_93], %180 {strides = array<i32>} : memref<656x384xbf16, #tpu.memory_space<vmem>>, vector<4x384xbf16>,
    %182 = vector.extract_strided_slice %173 {offsets = [0, 4], sizes = [4, 384], strides = [1, 1]} : vector<4x640xbf16> to vector<4x384xbf16>
    %c348 = arith.constant 348 : index
    %c0_94 = arith.constant 0 : index
    %183 = vector.load %arg11[%c348, %c0_94] : memref<656x384xbf16, #tpu.memory_space<vmem>>, vector<4x384xbf16>
    tpu.vector_store %arg11[%c348, %c0_94], %182 {strides = array<i32>} : memref<656x384xbf16, #tpu.memory_space<vmem>>, vector<4x384xbf16>,
    %184 = vector.extract_strided_slice %173 {offsets = [0, 5], sizes = [4, 384], strides = [1, 1]} : vector<4x640xbf16> to vector<4x384xbf16>
    %c352 = arith.constant 352 : index
    %c0_95 = arith.constant 0 : index
    %185 = vector.load %arg11[%c352, %c0_95] : memref<656x384xbf16, #tpu.memory_space<vmem>>, vector<4x384xbf16>
    tpu.vector_store %arg11[%c352, %c0_95], %184 {strides = array<i32>} : memref<656x384xbf16, #tpu.memory_space<vmem>>, vector<4x384xbf16>,
    %186 = vector.extract_strided_slice %173 {offsets = [0, 6], sizes = [4, 384], strides = [1, 1]} : vector<4x640xbf16> to vector<4x384xbf16>
    %c356 = arith.constant 356 : index
    %c0_96 = arith.constant 0 : index
    %187 = vector.load %arg11[%c356, %c0_96] : memref<656x384xbf16, #tpu.memory_space<vmem>>, vector<4x384xbf16>
    tpu.vector_store %arg11[%c356, %c0_96], %186 {strides = array<i32>} : memref<656x384xbf16, #tpu.memory_space<vmem>>, vector<4x384xbf16>,
    %188 = vector.extract_strided_slice %173 {offsets = [0, 7], sizes = [4, 384], strides = [1, 1]} : vector<4x640xbf16> to vector<4x384xbf16>
    %c360 = arith.constant 360 : index
    %c0_97 = arith.constant 0 : index
    %189 = vector.load %arg11[%c360, %c0_97] : memref<656x384xbf16, #tpu.memory_space<vmem>>, vector<4x384xbf16>
    tpu.vector_store %arg11[%c360, %c0_97], %188 {strides = array<i32>} : memref<656x384xbf16, #tpu.memory_space<vmem>>, vector<4x384xbf16>,
    %190 = vector.extract_strided_slice %173 {offsets = [0, 8], sizes = [4, 384], strides = [1, 1]} : vector<4x640xbf16> to vector<4x384xbf16>
    %c364 = arith.constant 364 : index
    %c0_98 = arith.constant 0 : index
    %191 = vector.load %arg11[%c364, %c0_98] : memref<656x384xbf16, #tpu.memory_space<vmem>>, vector<4x384xbf16>
    tpu.vector_store %arg11[%c364, %c0_98], %190 {strides = array<i32>} : memref<656x384xbf16, #tpu.memory_space<vmem>>, vector<4x384xbf16>,
    %192 = vector.extract_strided_slice %173 {offsets = [0, 24], sizes = [4, 384], strides = [1, 1]} : vector<4x640xbf16> to vector<4x384xbf16>
    %c368 = arith.constant 368 : index
    %c0_99 = arith.constant 0 : index
    %193 = vector.load %arg11[%c368, %c0_99] : memref<656x384xbf16, #tpu.memory_space<vmem>>, vector<4x384xbf16>
    tpu.vector_store %arg11[%c368, %c0_99], %192 {strides = array<i32>} : memref<656x384xbf16, #tpu.memory_space<vmem>>, vector<4x384xbf16>,
    %194 = vector.extract_strided_slice %173 {offsets = [0, 25], sizes = [4, 384], strides = [1, 1]} : vector<4x640xbf16> to vector<4x384xbf16>
    %c372 = arith.constant 372 : index
    %c0_100 = arith.constant 0 : index
    %195 = vector.load %arg11[%c372, %c0_100] : memref<656x384xbf16, #tpu.memory_space<vmem>>, vector<4x384xbf16>
    tpu.vector_store %arg11[%c372, %c0_100], %194 {strides = array<i32>} : memref<656x384xbf16, #tpu.memory_space<vmem>>, vector<4x384xbf16>,
    %196 = vector.extract_strided_slice %173 {offsets = [0, 26], sizes = [4, 384], strides = [1, 1]} : vector<4x640xbf16> to vector<4x384xbf16>
    %c376 = arith.constant 376 : index
    %c0_101 = arith.constant 0 : index
    %197 = vector.load %arg11[%c376, %c0_101] : memref<656x384xbf16, #tpu.memory_space<vmem>>, vector<4x384xbf16>
    tpu.vector_store %arg11[%c376, %c0_101], %196 {strides = array<i32>} : memref<656x384xbf16, #tpu.memory_space<vmem>>, vector<4x384xbf16>,
    %198 = vector.extract_strided_slice %173 {offsets = [0, 27], sizes = [4, 384], strides = [1, 1]} : vector<4x640xbf16> to vector<4x384xbf16>
    %c380 = arith.constant 380 : index
    %c0_102 = arith.constant 0 : index
    %199 = vector.load %arg11[%c380, %c0_102] : memref<656x384xbf16, #tpu.memory_space<vmem>>, vector<4x384xbf16>
    tpu.vector_store %arg11[%c380, %c0_102], %198 {strides = array<i32>} : memref<656x384xbf16, #tpu.memory_space<vmem>>, vector<4x384xbf16>,
    %200 = vector.extract_strided_slice %173 {offsets = [0, 28], sizes = [4, 384], strides = [1, 1]} : vector<4x640xbf16> to vector<4x384xbf16>
    %c384 = arith.constant 384 : index
    %c0_103 = arith.constant 0 : index
    %201 = vector.load %arg11[%c384, %c0_103] : memref<656x384xbf16, #tpu.memory_space<vmem>>, vector<4x384xbf16>
    tpu.vector_store %arg11[%c384, %c0_103], %200 {strides = array<i32>} : memref<656x384xbf16, #tpu.memory_space<vmem>>, vector<4x384xbf16>,
    %202 = vector.extract_strided_slice %173 {offsets = [0, 29], sizes = [4, 384], strides = [1, 1]} : vector<4x640xbf16> to vector<4x384xbf16>
    %c388 = arith.constant 388 : index
    %c0_104 = arith.constant 0 : index
    %203 = vector.load %arg11[%c388, %c0_104] : memref<656x384xbf16, #tpu.memory_space<vmem>>, vector<4x384xbf16>
    tpu.vector_store %arg11[%c388, %c0_104], %202 {strides = array<i32>} : memref<656x384xbf16, #tpu.memory_space<vmem>>, vector<4x384xbf16>,
    %204 = vector.extract_strided_slice %173 {offsets = [0, 30], sizes = [4, 384], strides = [1, 1]} : vector<4x640xbf16> to vector<4x384xbf16>
    %c392 = arith.constant 392 : index
    %c0_105 = arith.constant 0 : index
    %205 = vector.load %arg11[%c392, %c0_105] : memref<656x384xbf16, #tpu.memory_space<vmem>>, vector<4x384xbf16>
    tpu.vector_store %arg11[%c392, %c0_105], %204 {strides = array<i32>} : memref<656x384xbf16, #tpu.memory_space<vmem>>, vector<4x384xbf16>,
    %206 = vector.extract_strided_slice %173 {offsets = [0, 31], sizes = [4, 384], strides = [1, 1]} : vector<4x640xbf16> to vector<4x384xbf16>
    %c396 = arith.constant 396 : index
    %c0_106 = arith.constant 0 : index
    %207 = vector.load %arg11[%c396, %c0_106] : memref<656x384xbf16, #tpu.memory_space<vmem>>, vector<4x384xbf16>
    tpu.vector_store %arg11[%c396, %c0_106], %206 {strides = array<i32>} : memref<656x384xbf16, #tpu.memory_space<vmem>>, vector<4x384xbf16>,
    %208 = vector.extract_strided_slice %173 {offsets = [0, 32], sizes = [4, 384], strides = [1, 1]} : vector<4x640xbf16> to vector<4x384xbf16>
    %c400 = arith.constant 400 : index
    %c0_107 = arith.constant 0 : index
    %209 = vector.load %arg11[%c400, %c0_107] : memref<656x384xbf16, #tpu.memory_space<vmem>>, vector<4x384xbf16>
    tpu.vector_store %arg11[%c400, %c0_107], %208 {strides = array<i32>} : memref<656x384xbf16, #tpu.memory_space<vmem>>, vector<4x384xbf16>,
    %210 = vector.extract_strided_slice %173 {offsets = [0, 48], sizes = [4, 384], strides = [1, 1]} : vector<4x640xbf16> to vector<4x384xbf16>
    %c404 = arith.constant 404 : index
    %c0_108 = arith.constant 0 : index
    %211 = vector.load %arg11[%c404, %c0_108] : memref<656x384xbf16, #tpu.memory_space<vmem>>, vector<4x384xbf16>
    tpu.vector_store %arg11[%c404, %c0_108], %210 {strides = array<i32>} : memref<656x384xbf16, #tpu.memory_space<vmem>>, vector<4x384xbf16>,
    %212 = vector.extract_strided_slice %173 {offsets = [0, 49], sizes = [4, 384], strides = [1, 1]} : vector<4x640xbf16> to vector<4x384xbf16>
    %c408 = arith.constant 408 : index
    %c0_109 = arith.constant 0 : index
    %213 = vector.load %arg11[%c408, %c0_109] : memref<656x384xbf16, #tpu.memory_space<vmem>>, vector<4x384xbf16>
    tpu.vector_store %arg11[%c408, %c0_109], %212 {strides = array<i32>} : memref<656x384xbf16, #tpu.memory_space<vmem>>, vector<4x384xbf16>,
    %214 = vector.extract_strided_slice %173 {offsets = [0, 50], sizes = [4, 384], strides = [1, 1]} : vector<4x640xbf16> to vector<4x384xbf16>
    %c412 = arith.constant 412 : index
    %c0_110 = arith.constant 0 : index
    %215 = vector.load %arg11[%c412, %c0_110] : memref<656x384xbf16, #tpu.memory_space<vmem>>, vector<4x384xbf16>
    tpu.vector_store %arg11[%c412, %c0_110], %214 {strides = array<i32>} : memref<656x384xbf16, #tpu.memory_space<vmem>>, vector<4x384xbf16>,
    %216 = vector.extract_strided_slice %173 {offsets = [0, 51], sizes = [4, 384], strides = [1, 1]} : vector<4x640xbf16> to vector<4x384xbf16>
    %c416 = arith.constant 416 : index
    %c0_111 = arith.constant 0 : index
    %217 = vector.load %arg11[%c416, %c0_111] : memref<656x384xbf16, #tpu.memory_space<vmem>>, vector<4x384xbf16>
    tpu.vector_store %arg11[%c416, %c0_111], %216 {strides = array<i32>} : memref<656x384xbf16, #tpu.memory_space<vmem>>, vector<4x384xbf16>,
    %218 = vector.extract_strided_slice %173 {offsets = [0, 52], sizes = [4, 384], strides = [1, 1]} : vector<4x640xbf16> to vector<4x384xbf16>
    %c420 = arith.constant 420 : index
    %c0_112 = arith.constant 0 : index
    %219 = vector.load %arg11[%c420, %c0_112] : memref<656x384xbf16, #tpu.memory_space<vmem>>, vector<4x384xbf16>
    tpu.vector_store %arg11[%c420, %c0_112], %218 {strides = array<i32>} : memref<656x384xbf16, #tpu.memory_space<vmem>>, vector<4x384xbf16>,
    %220 = vector.extract_strided_slice %173 {offsets = [0, 53], sizes = [4, 384], strides = [1, 1]} : vector<4x640xbf16> to vector<4x384xbf16>
    %c424 = arith.constant 424 : index
    %c0_113 = arith.constant 0 : index
    %221 = vector.load %arg11[%c424, %c0_113] : memref<656x384xbf16, #tpu.memory_space<vmem>>, vector<4x384xbf16>
    tpu.vector_store %arg11[%c424, %c0_113], %220 {strides = array<i32>} : memref<656x384xbf16, #tpu.memory_space<vmem>>, vector<4x384xbf16>,
    %222 = vector.extract_strided_slice %173 {offsets = [0, 54], sizes = [4, 384], strides = [1, 1]} : vector<4x640xbf16> to vector<4x384xbf16>
    %c428 = arith.constant 428 : index
    %c0_114 = arith.constant 0 : index
    %223 = vector.load %arg11[%c428, %c0_114] : memref<656x384xbf16, #tpu.memory_space<vmem>>, vector<4x384xbf16>
    tpu.vector_store %arg11[%c428, %c0_114], %222 {strides = array<i32>} : memref<656x384xbf16, #tpu.memory_space<vmem>>, vector<4x384xbf16>,
    %224 = vector.extract_strided_slice %173 {offsets = [0, 55], sizes = [4, 384], strides = [1, 1]} : vector<4x640xbf16> to vector<4x384xbf16>
    %c432 = arith.constant 432 : index
    %c0_115 = arith.constant 0 : index
    %225 = vector.load %arg11[%c432, %c0_115] : memref<656x384xbf16, #tpu.memory_space<vmem>>, vector<4x384xbf16>
    tpu.vector_store %arg11[%c432, %c0_115], %224 {strides = array<i32>} : memref<656x384xbf16, #tpu.memory_space<vmem>>, vector<4x384xbf16>,
    %226 = vector.extract_strided_slice %173 {offsets = [0, 56], sizes = [4, 384], strides = [1, 1]} : vector<4x640xbf16> to vector<4x384xbf16>
    %c436 = arith.constant 436 : index
    %c0_116 = arith.constant 0 : index
    %227 = vector.load %arg11[%c436, %c0_116] : memref<656x384xbf16, #tpu.memory_space<vmem>>, vector<4x384xbf16>
    tpu.vector_store %arg11[%c436, %c0_116], %226 {strides = array<i32>} : memref<656x384xbf16, #tpu.memory_space<vmem>>, vector<4x384xbf16>,
    %228 = vector.extract_strided_slice %173 {offsets = [0, 72], sizes = [4, 384], strides = [1, 1]} : vector<4x640xbf16> to vector<4x384xbf16>
    %c440 = arith.constant 440 : index
    %c0_117 = arith.constant 0 : index
    %229 = vector.load %arg11[%c440, %c0_117] : memref<656x384xbf16, #tpu.memory_space<vmem>>, vector<4x384xbf16>
    tpu.vector_store %arg11[%c440, %c0_117], %228 {strides = array<i32>} : memref<656x384xbf16, #tpu.memory_space<vmem>>, vector<4x384xbf16>,
    %230 = vector.extract_strided_slice %173 {offsets = [0, 73], sizes = [4, 384], strides = [1, 1]} : vector<4x640xbf16> to vector<4x384xbf16>
    %c444 = arith.constant 444 : index
    %c0_118 = arith.constant 0 : index
    %231 = vector.load %arg11[%c444, %c0_118] : memref<656x384xbf16, #tpu.memory_space<vmem>>, vector<4x384xbf16>
    tpu.vector_store %arg11[%c444, %c0_118], %230 {strides = array<i32>} : memref<656x384xbf16, #tpu.memory_space<vmem>>, vector<4x384xbf16>,
    %232 = vector.extract_strided_slice %173 {offsets = [0, 74], sizes = [4, 384], strides = [1, 1]} : vector<4x640xbf16> to vector<4x384xbf16>
    %c448 = arith.constant 448 : index
    %c0_119 = arith.constant 0 : index
    %233 = vector.load %arg11[%c448, %c0_119] : memref<656x384xbf16, #tpu.memory_space<vmem>>, vector<4x384xbf16>
    tpu.vector_store %arg11[%c448, %c0_119], %232 {strides = array<i32>} : memref<656x384xbf16, #tpu.memory_space<vmem>>, vector<4x384xbf16>,
    %234 = vector.extract_strided_slice %173 {offsets = [0, 75], sizes = [4, 384], strides = [1, 1]} : vector<4x640xbf16> to vector<4x384xbf16>
    %c452 = arith.constant 452 : index
    %c0_120 = arith.constant 0 : index
    %235 = vector.load %arg11[%c452, %c0_120] : memref<656x384xbf16, #tpu.memory_space<vmem>>, vector<4x384xbf16>
    tpu.vector_store %arg11[%c452, %c0_120], %234 {strides = array<i32>} : memref<656x384xbf16, #tpu.memory_space<vmem>>, vector<4x384xbf16>,
    %236 = vector.extract_strided_slice %173 {offsets = [0, 76], sizes = [4, 384], strides = [1, 1]} : vector<4x640xbf16> to vector<4x384xbf16>
    %c456 = arith.constant 456 : index
    %c0_121 = arith.constant 0 : index
    %237 = vector.load %arg11[%c456, %c0_121] : memref<656x384xbf16, #tpu.memory_space<vmem>>, vector<4x384xbf16>
    tpu.vector_store %arg11[%c456, %c0_121], %236 {strides = array<i32>} : memref<656x384xbf16, #tpu.memory_space<vmem>>, vector<4x384xbf16>,
    %238 = vector.extract_strided_slice %173 {offsets = [0, 77], sizes = [4, 384], strides = [1, 1]} : vector<4x640xbf16> to vector<4x384xbf16>
    %c460 = arith.constant 460 : index
    %c0_122 = arith.constant 0 : index
    %239 = vector.load %arg11[%c460, %c0_122] : memref<656x384xbf16, #tpu.memory_space<vmem>>, vector<4x384xbf16>
    tpu.vector_store %arg11[%c460, %c0_122], %238 {strides = array<i32>} : memref<656x384xbf16, #tpu.memory_space<vmem>>, vector<4x384xbf16>,
    %240 = vector.extract_strided_slice %173 {offsets = [0, 78], sizes = [4, 384], strides = [1, 1]} : vector<4x640xbf16> to vector<4x384xbf16>
    %c464 = arith.constant 464 : index
    %c0_123 = arith.constant 0 : index
    %241 = vector.load %arg11[%c464, %c0_123] : memref<656x384xbf16, #tpu.memory_space<vmem>>, vector<4x384xbf16>
    tpu.vector_store %arg11[%c464, %c0_123], %240 {strides = array<i32>} : memref<656x384xbf16, #tpu.memory_space<vmem>>, vector<4x384xbf16>,
    %242 = vector.extract_strided_slice %173 {offsets = [0, 79], sizes = [4, 384], strides = [1, 1]} : vector<4x640xbf16> to vector<4x384xbf16>
    %c468 = arith.constant 468 : index
    %c0_124 = arith.constant 0 : index
    %243 = vector.load %arg11[%c468, %c0_124] : memref<656x384xbf16, #tpu.memory_space<vmem>>, vector<4x384xbf16>
    tpu.vector_store %arg11[%c468, %c0_124], %242 {strides = array<i32>} : memref<656x384xbf16, #tpu.memory_space<vmem>>, vector<4x384xbf16>,
    %244 = vector.extract_strided_slice %173 {offsets = [0, 80], sizes = [4, 384], strides = [1, 1]} : vector<4x640xbf16> to vector<4x384xbf16>
    %c472 = arith.constant 472 : index
    %c0_125 = arith.constant 0 : index
    %245 = vector.load %arg11[%c472, %c0_125] : memref<656x384xbf16, #tpu.memory_space<vmem>>, vector<4x384xbf16>
    tpu.vector_store %arg11[%c472, %c0_125], %244 {strides = array<i32>} : memref<656x384xbf16, #tpu.memory_space<vmem>>, vector<4x384xbf16>,
    %246 = vector.extract_strided_slice %173 {offsets = [0, 96], sizes = [4, 384], strides = [1, 1]} : vector<4x640xbf16> to vector<4x384xbf16>
    %c476 = arith.constant 476 : index
    %c0_126 = arith.constant 0 : index
    %247 = vector.load %arg11[%c476, %c0_126] : memref<656x384xbf16, #tpu.memory_space<vmem>>, vector<4x384xbf16>
    tpu.vector_store %arg11[%c476, %c0_126], %246 {strides = array<i32>} : memref<656x384xbf16, #tpu.memory_space<vmem>>, vector<4x384xbf16>,
    %248 = vector.extract_strided_slice %173 {offsets = [0, 97], sizes = [4, 384], strides = [1, 1]} : vector<4x640xbf16> to vector<4x384xbf16>
    %c480 = arith.constant 480 : index
    %c0_127 = arith.constant 0 : index
    %249 = vector.load %arg11[%c480, %c0_127] : memref<656x384xbf16, #tpu.memory_space<vmem>>, vector<4x384xbf16>
    tpu.vector_store %arg11[%c480, %c0_127], %248 {strides = array<i32>} : memref<656x384xbf16, #tpu.memory_space<vmem>>, vector<4x384xbf16>,
    %250 = vector.extract_strided_slice %173 {offsets = [0, 98], sizes = [4, 384], strides = [1, 1]} : vector<4x640xbf16> to vector<4x384xbf16>
    %c484 = arith.constant 484 : index
    %c0_128 = arith.constant 0 : index
    %251 = vector.load %arg11[%c484, %c0_128] : memref<656x384xbf16, #tpu.memory_space<vmem>>, vector<4x384xbf16>
    tpu.vector_store %arg11[%c484, %c0_128], %250 {strides = array<i32>} : memref<656x384xbf16, #tpu.memory_space<vmem>>, vector<4x384xbf16>,
    %252 = vector.extract_strided_slice %173 {offsets = [0, 99], sizes = [4, 384], strides = [1, 1]} : vector<4x640xbf16> to vector<4x384xbf16>
    %c488 = arith.constant 488 : index
    %c0_129 = arith.constant 0 : index
    %253 = vector.load %arg11[%c488, %c0_129] : memref<656x384xbf16, #tpu.memory_space<vmem>>, vector<4x384xbf16>
    tpu.vector_store %arg11[%c488, %c0_129], %252 {strides = array<i32>} : memref<656x384xbf16, #tpu.memory_space<vmem>>, vector<4x384xbf16>,
    %254 = vector.extract_strided_slice %173 {offsets = [0, 100], sizes = [4, 384], strides = [1, 1]} : vector<4x640xbf16> to vector<4x384xbf16>
    %c492 = arith.constant 492 : index
    %c0_130 = arith.constant 0 : index
    %255 = vector.load %arg11[%c492, %c0_130] : memref<656x384xbf16, #tpu.memory_space<vmem>>, vector<4x384xbf16>
    tpu.vector_store %arg11[%c492, %c0_130], %254 {strides = array<i32>} : memref<656x384xbf16, #tpu.memory_space<vmem>>, vector<4x384xbf16>,
    %256 = vector.extract_strided_slice %173 {offsets = [0, 101], sizes = [4, 384], strides = [1, 1]} : vector<4x640xbf16> to vector<4x384xbf16>
    %c496 = arith.constant 496 : index
    %c0_131 = arith.constant 0 : index
    %257 = vector.load %arg11[%c496, %c0_131] : memref<656x384xbf16, #tpu.memory_space<vmem>>, vector<4x384xbf16>
    tpu.vector_store %arg11[%c496, %c0_131], %256 {strides = array<i32>} : memref<656x384xbf16, #tpu.memory_space<vmem>>, vector<4x384xbf16>,
    %258 = vector.extract_strided_slice %173 {offsets = [0, 102], sizes = [4, 384], strides = [1, 1]} : vector<4x640xbf16> to vector<4x384xbf16>
    %c500 = arith.constant 500 : index
    %c0_132 = arith.constant 0 : index
    %259 = vector.load %arg11[%c500, %c0_132] : memref<656x384xbf16, #tpu.memory_space<vmem>>, vector<4x384xbf16>
    tpu.vector_store %arg11[%c500, %c0_132], %258 {strides = array<i32>} : memref<656x384xbf16, #tpu.memory_space<vmem>>, vector<4x384xbf16>,
    %260 = vector.extract_strided_slice %173 {offsets = [0, 103], sizes = [4, 384], strides = [1, 1]} : vector<4x640xbf16> to vector<4x384xbf16>
    %c504 = arith.constant 504 : index
    %c0_133 = arith.constant 0 : index
    %261 = vector.load %arg11[%c504, %c0_133] : memref<656x384xbf16, #tpu.memory_space<vmem>>, vector<4x384xbf16>
    tpu.vector_store %arg11[%c504, %c0_133], %260 {strides = array<i32>} : memref<656x384xbf16, #tpu.memory_space<vmem>>, vector<4x384xbf16>,
    %262 = vector.extract_strided_slice %173 {offsets = [0, 104], sizes = [4, 384], strides = [1, 1]} : vector<4x640xbf16> to vector<4x384xbf16>
    %c508 = arith.constant 508 : index
    %c0_134 = arith.constant 0 : index
    %263 = vector.load %arg11[%c508, %c0_134] : memref<656x384xbf16, #tpu.memory_space<vmem>>, vector<4x384xbf16>
    tpu.vector_store %arg11[%c508, %c0_134], %262 {strides = array<i32>} : memref<656x384xbf16, #tpu.memory_space<vmem>>, vector<4x384xbf16>,
    %264 = vector.extract_strided_slice %173 {offsets = [0, 120], sizes = [4, 384], strides = [1, 1]} : vector<4x640xbf16> to vector<4x384xbf16>
    %c512 = arith.constant 512 : index
    %c0_135 = arith.constant 0 : index
    %265 = vector.load %arg11[%c512, %c0_135] : memref<656x384xbf16, #tpu.memory_space<vmem>>, vector<4x384xbf16>
    tpu.vector_store %arg11[%c512, %c0_135], %264 {strides = array<i32>} : memref<656x384xbf16, #tpu.memory_space<vmem>>, vector<4x384xbf16>,
    %266 = vector.extract_strided_slice %173 {offsets = [0, 121], sizes = [4, 384], strides = [1, 1]} : vector<4x640xbf16> to vector<4x384xbf16>
    %c516 = arith.constant 516 : index
    %c0_136 = arith.constant 0 : index
    %267 = vector.load %arg11[%c516, %c0_136] : memref<656x384xbf16, #tpu.memory_space<vmem>>, vector<4x384xbf16>
    tpu.vector_store %arg11[%c516, %c0_136], %266 {strides = array<i32>} : memref<656x384xbf16, #tpu.memory_space<vmem>>, vector<4x384xbf16>,
    %268 = vector.extract_strided_slice %173 {offsets = [0, 122], sizes = [4, 384], strides = [1, 1]} : vector<4x640xbf16> to vector<4x384xbf16>
    %c520 = arith.constant 520 : index
    %c0_137 = arith.constant 0 : index
    %269 = vector.load %arg11[%c520, %c0_137] : memref<656x384xbf16, #tpu.memory_space<vmem>>, vector<4x384xbf16>
    tpu.vector_store %arg11[%c520, %c0_137], %268 {strides = array<i32>} : memref<656x384xbf16, #tpu.memory_space<vmem>>, vector<4x384xbf16>,
    %270 = vector.extract_strided_slice %173 {offsets = [0, 123], sizes = [4, 384], strides = [1, 1]} : vector<4x640xbf16> to vector<4x384xbf16>
    %c524 = arith.constant 524 : index
    %c0_138 = arith.constant 0 : index
    %271 = vector.load %arg11[%c524, %c0_138] : memref<656x384xbf16, #tpu.memory_space<vmem>>, vector<4x384xbf16>
    tpu.vector_store %arg11[%c524, %c0_138], %270 {strides = array<i32>} : memref<656x384xbf16, #tpu.memory_space<vmem>>, vector<4x384xbf16>,
    %272 = vector.extract_strided_slice %173 {offsets = [0, 124], sizes = [4, 384], strides = [1, 1]} : vector<4x640xbf16> to vector<4x384xbf16>
    %c528 = arith.constant 528 : index
    %c0_139 = arith.constant 0 : index
    %273 = vector.load %arg11[%c528, %c0_139] : memref<656x384xbf16, #tpu.memory_space<vmem>>, vector<4x384xbf16>
    tpu.vector_store %arg11[%c528, %c0_139], %272 {strides = array<i32>} : memref<656x384xbf16, #tpu.memory_space<vmem>>, vector<4x384xbf16>,
    %274 = vector.extract_strided_slice %173 {offsets = [0, 125], sizes = [4, 384], strides = [1, 1]} : vector<4x640xbf16> to vector<4x384xbf16>
    %c532 = arith.constant 532 : index
    %c0_140 = arith.constant 0 : index
    %275 = vector.load %arg11[%c532, %c0_140] : memref<656x384xbf16, #tpu.memory_space<vmem>>, vector<4x384xbf16>
    tpu.vector_store %arg11[%c532, %c0_140], %274 {strides = array<i32>} : memref<656x384xbf16, #tpu.memory_space<vmem>>, vector<4x384xbf16>,
    %276 = vector.extract_strided_slice %173 {offsets = [0, 126], sizes = [4, 384], strides = [1, 1]} : vector<4x640xbf16> to vector<4x384xbf16>
    %c536 = arith.constant 536 : index
    %c0_141 = arith.constant 0 : index
    %277 = vector.load %arg11[%c536, %c0_141] : memref<656x384xbf16, #tpu.memory_space<vmem>>, vector<4x384xbf16>
    tpu.vector_store %arg11[%c536, %c0_141], %276 {strides = array<i32>} : memref<656x384xbf16, #tpu.memory_space<vmem>>, vector<4x384xbf16>,
    %278 = vector.extract_strided_slice %173 {offsets = [0, 127], sizes = [4, 384], strides = [1, 1]} : vector<4x640xbf16> to vector<4x384xbf16>
    %c540 = arith.constant 540 : index
    %c0_142 = arith.constant 0 : index
    %279 = vector.load %arg11[%c540, %c0_142] : memref<656x384xbf16, #tpu.memory_space<vmem>>, vector<4x384xbf16>
    tpu.vector_store %arg11[%c540, %c0_142], %278 {strides = array<i32>} : memref<656x384xbf16, #tpu.memory_space<vmem>>, vector<4x384xbf16>,
    %280 = vector.extract_strided_slice %173 {offsets = [0, 128], sizes = [4, 384], strides = [1, 1]} : vector<4x640xbf16> to vector<4x384xbf16>
    %c544 = arith.constant 544 : index
    %c0_143 = arith.constant 0 : index
    %281 = vector.load %arg11[%c544, %c0_143] : memref<656x384xbf16, #tpu.memory_space<vmem>>, vector<4x384xbf16>
    tpu.vector_store %arg11[%c544, %c0_143], %280 {strides = array<i32>} : memref<656x384xbf16, #tpu.memory_space<vmem>>, vector<4x384xbf16>,
    %282 = vector.extract_strided_slice %173 {offsets = [0, 144], sizes = [4, 384], strides = [1, 1]} : vector<4x640xbf16> to vector<4x384xbf16>
    %c548 = arith.constant 548 : index
    %c0_144 = arith.constant 0 : index
    %283 = vector.load %arg11[%c548, %c0_144] : memref<656x384xbf16, #tpu.memory_space<vmem>>, vector<4x384xbf16>
    tpu.vector_store %arg11[%c548, %c0_144], %282 {strides = array<i32>} : memref<656x384xbf16, #tpu.memory_space<vmem>>, vector<4x384xbf16>,
    %284 = vector.extract_strided_slice %173 {offsets = [0, 145], sizes = [4, 384], strides = [1, 1]} : vector<4x640xbf16> to vector<4x384xbf16>
    %c552 = arith.constant 552 : index
    %c0_145 = arith.constant 0 : index
    %285 = vector.load %arg11[%c552, %c0_145] : memref<656x384xbf16, #tpu.memory_space<vmem>>, vector<4x384xbf16>
    tpu.vector_store %arg11[%c552, %c0_145], %284 {strides = array<i32>} : memref<656x384xbf16, #tpu.memory_space<vmem>>, vector<4x384xbf16>,
    %286 = vector.extract_strided_slice %173 {offsets = [0, 146], sizes = [4, 384], strides = [1, 1]} : vector<4x640xbf16> to vector<4x384xbf16>
    %c556 = arith.constant 556 : index
    %c0_146 = arith.constant 0 : index
    %287 = vector.load %arg11[%c556, %c0_146] : memref<656x384xbf16, #tpu.memory_space<vmem>>, vector<4x384xbf16>
    tpu.vector_store %arg11[%c556, %c0_146], %286 {strides = array<i32>} : memref<656x384xbf16, #tpu.memory_space<vmem>>, vector<4x384xbf16>,
    %288 = vector.extract_strided_slice %173 {offsets = [0, 147], sizes = [4, 384], strides = [1, 1]} : vector<4x640xbf16> to vector<4x384xbf16>
    %c560 = arith.constant 560 : index
    %c0_147 = arith.constant 0 : index
    %289 = vector.load %arg11[%c560, %c0_147] : memref<656x384xbf16, #tpu.memory_space<vmem>>, vector<4x384xbf16>
    tpu.vector_store %arg11[%c560, %c0_147], %288 {strides = array<i32>} : memref<656x384xbf16, #tpu.memory_space<vmem>>, vector<4x384xbf16>,
    %290 = vector.extract_strided_slice %173 {offsets = [0, 148], sizes = [4, 384], strides = [1, 1]} : vector<4x640xbf16> to vector<4x384xbf16>
    %c564 = arith.constant 564 : index
    %c0_148 = arith.constant 0 : index
    %291 = vector.load %arg11[%c564, %c0_148] : memref<656x384xbf16, #tpu.memory_space<vmem>>, vector<4x384xbf16>
    tpu.vector_store %arg11[%c564, %c0_148], %290 {strides = array<i32>} : memref<656x384xbf16, #tpu.memory_space<vmem>>, vector<4x384xbf16>,
    %292 = vector.extract_strided_slice %173 {offsets = [0, 149], sizes = [4, 384], strides = [1, 1]} : vector<4x640xbf16> to vector<4x384xbf16>
    %c568 = arith.constant 568 : index
    %c0_149 = arith.constant 0 : index
    %293 = vector.load %arg11[%c568, %c0_149] : memref<656x384xbf16, #tpu.memory_space<vmem>>, vector<4x384xbf16>
    tpu.vector_store %arg11[%c568, %c0_149], %292 {strides = array<i32>} : memref<656x384xbf16, #tpu.memory_space<vmem>>, vector<4x384xbf16>,
    %294 = vector.extract_strided_slice %173 {offsets = [0, 150], sizes = [4, 384], strides = [1, 1]} : vector<4x640xbf16> to vector<4x384xbf16>
    %c572 = arith.constant 572 : index
    %c0_150 = arith.constant 0 : index
    %295 = vector.load %arg11[%c572, %c0_150] : memref<656x384xbf16, #tpu.memory_space<vmem>>, vector<4x384xbf16>
    tpu.vector_store %arg11[%c572, %c0_150], %294 {strides = array<i32>} : memref<656x384xbf16, #tpu.memory_space<vmem>>, vector<4x384xbf16>,
    %296 = vector.extract_strided_slice %173 {offsets = [0, 151], sizes = [4, 384], strides = [1, 1]} : vector<4x640xbf16> to vector<4x384xbf16>
    %c576 = arith.constant 576 : index
    %c0_151 = arith.constant 0 : index
    %297 = vector.load %arg11[%c576, %c0_151] : memref<656x384xbf16, #tpu.memory_space<vmem>>, vector<4x384xbf16>
    tpu.vector_store %arg11[%c576, %c0_151], %296 {strides = array<i32>} : memref<656x384xbf16, #tpu.memory_space<vmem>>, vector<4x384xbf16>,
    %298 = vector.extract_strided_slice %173 {offsets = [0, 152], sizes = [4, 384], strides = [1, 1]} : vector<4x640xbf16> to vector<4x384xbf16>
    %c580 = arith.constant 580 : index
    %c0_152 = arith.constant 0 : index
    %299 = vector.load %arg11[%c580, %c0_152] : memref<656x384xbf16, #tpu.memory_space<vmem>>, vector<4x384xbf16>
    tpu.vector_store %arg11[%c580, %c0_152], %298 {strides = array<i32>} : memref<656x384xbf16, #tpu.memory_space<vmem>>, vector<4x384xbf16>,
    %300 = vector.extract_strided_slice %173 {offsets = [0, 168], sizes = [4, 384], strides = [1, 1]} : vector<4x640xbf16> to vector<4x384xbf16>
    %c584 = arith.constant 584 : index
    %c0_153 = arith.constant 0 : index
    %301 = vector.load %arg11[%c584, %c0_153] : memref<656x384xbf16, #tpu.memory_space<vmem>>, vector<4x384xbf16>
    tpu.vector_store %arg11[%c584, %c0_153], %300 {strides = array<i32>} : memref<656x384xbf16, #tpu.memory_space<vmem>>, vector<4x384xbf16>,
    %302 = vector.extract_strided_slice %173 {offsets = [0, 169], sizes = [4, 384], strides = [1, 1]} : vector<4x640xbf16> to vector<4x384xbf16>
    %c588 = arith.constant 588 : index
    %c0_154 = arith.constant 0 : index
    %303 = vector.load %arg11[%c588, %c0_154] : memref<656x384xbf16, #tpu.memory_space<vmem>>, vector<4x384xbf16>
    tpu.vector_store %arg11[%c588, %c0_154], %302 {strides = array<i32>} : memref<656x384xbf16, #tpu.memory_space<vmem>>, vector<4x384xbf16>,
    %304 = vector.extract_strided_slice %173 {offsets = [0, 170], sizes = [4, 384], strides = [1, 1]} : vector<4x640xbf16> to vector<4x384xbf16>
    %c592 = arith.constant 592 : index
    %c0_155 = arith.constant 0 : index
    %305 = vector.load %arg11[%c592, %c0_155] : memref<656x384xbf16, #tpu.memory_space<vmem>>, vector<4x384xbf16>
    tpu.vector_store %arg11[%c592, %c0_155], %304 {strides = array<i32>} : memref<656x384xbf16, #tpu.memory_space<vmem>>, vector<4x384xbf16>,
    %306 = vector.extract_strided_slice %173 {offsets = [0, 171], sizes = [4, 384], strides = [1, 1]} : vector<4x640xbf16> to vector<4x384xbf16>
    %c596 = arith.constant 596 : index
    %c0_156 = arith.constant 0 : index
    %307 = vector.load %arg11[%c596, %c0_156] : memref<656x384xbf16, #tpu.memory_space<vmem>>, vector<4x384xbf16>
    tpu.vector_store %arg11[%c596, %c0_156], %306 {strides = array<i32>} : memref<656x384xbf16, #tpu.memory_space<vmem>>, vector<4x384xbf16>,
    %308 = vector.extract_strided_slice %173 {offsets = [0, 172], sizes = [4, 384], strides = [1, 1]} : vector<4x640xbf16> to vector<4x384xbf16>
    %c600 = arith.constant 600 : index
    %c0_157 = arith.constant 0 : index
    %309 = vector.load %arg11[%c600, %c0_157] : memref<656x384xbf16, #tpu.memory_space<vmem>>, vector<4x384xbf16>
    tpu.vector_store %arg11[%c600, %c0_157], %308 {strides = array<i32>} : memref<656x384xbf16, #tpu.memory_space<vmem>>, vector<4x384xbf16>,
    %310 = vector.extract_strided_slice %173 {offsets = [0, 173], sizes = [4, 384], strides = [1, 1]} : vector<4x640xbf16> to vector<4x384xbf16>
    %c604 = arith.constant 604 : index
    %c0_158 = arith.constant 0 : index
    %311 = vector.load %arg11[%c604, %c0_158] : memref<656x384xbf16, #tpu.memory_space<vmem>>, vector<4x384xbf16>
    tpu.vector_store %arg11[%c604, %c0_158], %310 {strides = array<i32>} : memref<656x384xbf16, #tpu.memory_space<vmem>>, vector<4x384xbf16>,
    %312 = vector.extract_strided_slice %173 {offsets = [0, 174], sizes = [4, 384], strides = [1, 1]} : vector<4x640xbf16> to vector<4x384xbf16>
    %c608 = arith.constant 608 : index
    %c0_159 = arith.constant 0 : index
    %313 = vector.load %arg11[%c608, %c0_159] : memref<656x384xbf16, #tpu.memory_space<vmem>>, vector<4x384xbf16>
    tpu.vector_store %arg11[%c608, %c0_159], %312 {strides = array<i32>} : memref<656x384xbf16, #tpu.memory_space<vmem>>, vector<4x384xbf16>,
    %314 = vector.extract_strided_slice %173 {offsets = [0, 175], sizes = [4, 384], strides = [1, 1]} : vector<4x640xbf16> to vector<4x384xbf16>
    %c612 = arith.constant 612 : index
    %c0_160 = arith.constant 0 : index
    %315 = vector.load %arg11[%c612, %c0_160] : memref<656x384xbf16, #tpu.memory_space<vmem>>, vector<4x384xbf16>
    tpu.vector_store %arg11[%c612, %c0_160], %314 {strides = array<i32>} : memref<656x384xbf16, #tpu.memory_space<vmem>>, vector<4x384xbf16>,
    %316 = vector.extract_strided_slice %173 {offsets = [0, 176], sizes = [4, 384], strides = [1, 1]} : vector<4x640xbf16> to vector<4x384xbf16>
    %c616 = arith.constant 616 : index
    %c0_161 = arith.constant 0 : index
    %317 = vector.load %arg11[%c616, %c0_161] : memref<656x384xbf16, #tpu.memory_space<vmem>>, vector<4x384xbf16>
    tpu.vector_store %arg11[%c616, %c0_161], %316 {strides = array<i32>} : memref<656x384xbf16, #tpu.memory_space<vmem>>, vector<4x384xbf16>,
    %318 = vector.extract_strided_slice %173 {offsets = [0, 192], sizes = [4, 384], strides = [1, 1]} : vector<4x640xbf16> to vector<4x384xbf16>
    %c620 = arith.constant 620 : index
    %c0_162 = arith.constant 0 : index
    %319 = vector.load %arg11[%c620, %c0_162] : memref<656x384xbf16, #tpu.memory_space<vmem>>, vector<4x384xbf16>
    tpu.vector_store %arg11[%c620, %c0_162], %318 {strides = array<i32>} : memref<656x384xbf16, #tpu.memory_space<vmem>>, vector<4x384xbf16>,
    %320 = vector.extract_strided_slice %173 {offsets = [0, 193], sizes = [4, 384], strides = [1, 1]} : vector<4x640xbf16> to vector<4x384xbf16>
    %c624 = arith.constant 624 : index
    %c0_163 = arith.constant 0 : index
    %321 = vector.load %arg11[%c624, %c0_163] : memref<656x384xbf16, #tpu.memory_space<vmem>>, vector<4x384xbf16>
    tpu.vector_store %arg11[%c624, %c0_163], %320 {strides = array<i32>} : memref<656x384xbf16, #tpu.memory_space<vmem>>, vector<4x384xbf16>,
    %322 = vector.extract_strided_slice %173 {offsets = [0, 194], sizes = [4, 384], strides = [1, 1]} : vector<4x640xbf16> to vector<4x384xbf16>
    %c628 = arith.constant 628 : index
    %c0_164 = arith.constant 0 : index
    %323 = vector.load %arg11[%c628, %c0_164] : memref<656x384xbf16, #tpu.memory_space<vmem>>, vector<4x384xbf16>
    tpu.vector_store %arg11[%c628, %c0_164], %322 {strides = array<i32>} : memref<656x384xbf16, #tpu.memory_space<vmem>>, vector<4x384xbf16>,
    %324 = vector.extract_strided_slice %173 {offsets = [0, 195], sizes = [4, 384], strides = [1, 1]} : vector<4x640xbf16> to vector<4x384xbf16>
    %c632 = arith.constant 632 : index
    %c0_165 = arith.constant 0 : index
    %325 = vector.load %arg11[%c632, %c0_165] : memref<656x384xbf16, #tpu.memory_space<vmem>>, vector<4x384xbf16>
    tpu.vector_store %arg11[%c632, %c0_165], %324 {strides = array<i32>} : memref<656x384xbf16, #tpu.memory_space<vmem>>, vector<4x384xbf16>,
    %326 = vector.extract_strided_slice %173 {offsets = [0, 196], sizes = [4, 384], strides = [1, 1]} : vector<4x640xbf16> to vector<4x384xbf16>
    %c636 = arith.constant 636 : index
    %c0_166 = arith.constant 0 : index
    %327 = vector.load %arg11[%c636, %c0_166] : memref<656x384xbf16, #tpu.memory_space<vmem>>, vector<4x384xbf16>
    tpu.vector_store %arg11[%c636, %c0_166], %326 {strides = array<i32>} : memref<656x384xbf16, #tpu.memory_space<vmem>>, vector<4x384xbf16>,
    %328 = vector.extract_strided_slice %173 {offsets = [0, 197], sizes = [4, 384], strides = [1, 1]} : vector<4x640xbf16> to vector<4x384xbf16>
    %c640 = arith.constant 640 : index
    %c0_167 = arith.constant 0 : index
    %329 = vector.load %arg11[%c640, %c0_167] : memref<656x384xbf16, #tpu.memory_space<vmem>>, vector<4x384xbf16>
    tpu.vector_store %arg11[%c640, %c0_167], %328 {strides = array<i32>} : memref<656x384xbf16, #tpu.memory_space<vmem>>, vector<4x384xbf16>,
    %330 = vector.extract_strided_slice %173 {offsets = [0, 198], sizes = [4, 384], strides = [1, 1]} : vector<4x640xbf16> to vector<4x384xbf16>
    %c644 = arith.constant 644 : index
    %c0_168 = arith.constant 0 : index
    %331 = vector.load %arg11[%c644, %c0_168] : memref<656x384xbf16, #tpu.memory_space<vmem>>, vector<4x384xbf16>
    tpu.vector_store %arg11[%c644, %c0_168], %330 {strides = array<i32>} : memref<656x384xbf16, #tpu.memory_space<vmem>>, vector<4x384xbf16>,
    %332 = vector.extract_strided_slice %173 {offsets = [0, 199], sizes = [4, 384], strides = [1, 1]} : vector<4x640xbf16> to vector<4x384xbf16>
    %c648 = arith.constant 648 : index
    %c0_169 = arith.constant 0 : index
    %333 = vector.load %arg11[%c648, %c0_169] : memref<656x384xbf16, #tpu.memory_space<vmem>>, vector<4x384xbf16>
    tpu.vector_store %arg11[%c648, %c0_169], %332 {strides = array<i32>} : memref<656x384xbf16, #tpu.memory_space<vmem>>, vector<4x384xbf16>,
    %334 = vector.extract_strided_slice %173 {offsets = [0, 200], sizes = [4, 384], strides = [1, 1]} : vector<4x640xbf16> to vector<4x384xbf16>
    %c652 = arith.constant 652 : index
    %c0_170 = arith.constant 0 : index
    %335 = vector.load %arg11[%c652, %c0_170] : memref<656x384xbf16, #tpu.memory_space<vmem>>, vector<4x384xbf16>
    tpu.vector_store %arg11[%c652, %c0_170], %334 {strides = array<i32>} : memref<656x384xbf16, #tpu.memory_space<vmem>>, vector<4x384xbf16>,
    %c0_171 = arith.constant 0 : index
    %c0_172 = arith.constant 0 : index
    %336 = vector.load %arg2[%c0_171, %c0_172] : memref<4x36xbf16, #tpu.memory_space<vmem>>, vector<4x36xbf16>
    %c0_173 = arith.constant 0 : index
    %c0_174 = arith.constant 0 : index
    %337 = vector.load %arg11[%c0_173, %c0_174] : memref<656x384xbf16, #tpu.memory_space<vmem>>, vector<36x384xbf16>
    %cst = arith.constant dense<0.000000e+00> : vector<4x384xf32>
    %338 = tpu.matmul %336, %337, %cst {dimension_numbers = #tpu.dot_dimension_numbers<[1], [0], [0], [1], [0, 0, 1, 1], [], []>} : vector<4x36xbf16>, vector<36x384xbf16>, vector<4x384xf32> -> vector<4x384xf32>
    %c0_175 = arith.constant 0 : index
    %c0_176 = arith.constant 0 : index
    %339 = vector.load %arg3[%c0_175, %c0_176] : memref<4x100xbf16, #tpu.memory_space<vmem>>, vector<4x100xbf16>
    %c36_177 = arith.constant 36 : index
    %c0_178 = arith.constant 0 : index
    %340 = vector.load %arg11[%c36_177, %c0_178] : memref<656x384xbf16, #tpu.memory_space<vmem>>, vector<100x384xbf16>
    %cst_179 = arith.constant dense<0.000000e+00> : vector<4x384xf32>
    %341 = tpu.matmul %339, %340, %cst_179 {dimension_numbers = #tpu.dot_dimension_numbers<[1], [0], [0], [1], [0, 0, 1, 1], [], []>} : vector<4x100xbf16>, vector<100x384xbf16>, vector<4x384xf32> -> vector<4x384xf32>
    %c0_180 = arith.constant 0 : index
    %c0_181 = arith.constant 0 : index
    %342 = vector.load %arg4[%c0_180, %c0_181] : memref<4x196xbf16, #tpu.memory_space<vmem>>, vector<4x196xbf16>
    %c136_182 = arith.constant 136 : index
    %c0_183 = arith.constant 0 : index
    %343 = vector.load %arg11[%c136_182, %c0_183] : memref<656x384xbf16, #tpu.memory_space<vmem>>, vector<196x384xbf16>
    %cst_184 = arith.constant dense<0.000000e+00> : vector<4x384xf32>
    %344 = tpu.matmul %342, %343, %cst_184 {dimension_numbers = #tpu.dot_dimension_numbers<[1], [0], [0], [1], [0, 0, 1, 1], [], []>} : vector<4x196xbf16>, vector<196x384xbf16>, vector<4x384xf32> -> vector<4x384xf32>
    %c0_185 = arith.constant 0 : index
    %c0_186 = arith.constant 0 : index
    %345 = vector.load %arg5[%c0_185, %c0_186] : memref<4x324xbf16, #tpu.memory_space<vmem>>, vector<4x324xbf16>
    %c332_187 = arith.constant 332 : index
    %c0_188 = arith.constant 0 : index
    %346 = vector.load %arg11[%c332_187, %c0_188] : memref<656x384xbf16, #tpu.memory_space<vmem>>, vector<324x384xbf16>
    %cst_189 = arith.constant dense<0.000000e+00> : vector<4x384xf32>
    %347 = tpu.matmul %345, %346, %cst_189 {dimension_numbers = #tpu.dot_dimension_numbers<[1], [0], [0], [1], [0, 0, 1, 1], [], []>} : vector<4x324xbf16>, vector<324x384xbf16>, vector<4x384xf32> -> vector<4x384xf32>
    %348 = vector.extract_strided_slice %2 {offsets = [0, 0], sizes = [4, 1], strides = [1, 1]} : vector<16x1xf32> to vector<4x1xf32>
    %349 = vector.broadcast %3 : vector<1x384xf32> to vector<4x384xf32>
    %350 = arith.mulf %338, %349 : vector<4x384xf32>
    %cst_190 = arith.constant dense<0.000000e+00> : vector<4xf32>
    %351 = vector.multi_reduction <add>, %350, %cst_190 [1] : vector<4x384xf32> to vector<4xf32>
    %352 = vector.shape_cast %351 : vector<4xf32> to vector<4x1xf32>
    %cst_191 = arith.constant 3.906250e-03 : f32
    %353 = vector.broadcast %cst_191 : f32 to vector<4x1xf32>
    %354 = arith.mulf %352, %353 : vector<4x1xf32>
    %355 = arith.addf %354, %348 : vector<4x1xf32>
    %c0_192 = arith.constant 0 : index
    %c0_193 = arith.constant 0 : index
    %c0_194 = arith.constant 0 : index
    %356 = vector.load %arg7[%c0_192, %c0_193, %c0_194] : memref<4x4x1xf32, #tpu.memory_space<vmem>>, vector<1x4x1xf32>
    %357 = vector.shape_cast %356 : vector<1x4x1xf32> to vector<4x1xf32>
    %358 = arith.mulf %357, %355 : vector<4x1xf32>
    %cst_195 = arith.constant dense<0.000000e+00> : vector<1xf32>
    %359 = vector.multi_reduction <add>, %358, %cst_195 [0] : vector<4x1xf32> to vector<1xf32>
    %360 = vector.shape_cast %359 : vector<1xf32> to vector<1x1xf32>
    %cst_196 = arith.constant 0.000000e+00 : f32
    %361 = vector.broadcast %cst_196 : f32 to vector<1x1xf32>
    %362 = arith.maximumf %360, %361 : vector<1x1xf32>
    %c0_197 = arith.constant 0 : index
    %c0_198 = arith.constant 0 : index
    %c0_199 = arith.constant 0 : index
    %363 = vector.load %arg8[%c0_197, %c0_198, %c0_199] : memref<4x4x1xf32, #tpu.memory_space<vmem>>, vector<1x4x1xf32>
    %364 = vector.shape_cast %363 : vector<1x4x1xf32> to vector<4x1xf32>
    %365 = vector.broadcast %362 : vector<1x1xf32> to vector<4x1xf32>
    %366 = arith.mulf %364, %365 : vector<4x1xf32>
    %cst_200 = arith.constant dense<0.000000e+00> : vector<4xf32>
    %367 = vector.multi_reduction <add>, %366, %cst_200 [1] : vector<4x1xf32> to vector<4xf32>
    %368 = vector.shape_cast %367 : vector<4xf32> to vector<4x1xf32>
    %cst_201 = arith.constant 0.000000e+00 : f32
    %369 = vector.broadcast %cst_201 : f32 to vector<4x1xf32>
    %370 = arith.subf %369, %368 : vector<4x1xf32>
    %371 = math.exp %370 : vector<4x1xf32>
    %cst_202 = arith.constant 1.000000e+00 : f32
    %372 = vector.broadcast %cst_202 : f32 to vector<4x1xf32>
    %373 = arith.addf %372, %371 : vector<4x1xf32>
    %cst_203 = arith.constant 1.000000e+00 : f32
    %374 = vector.broadcast %cst_203 : f32 to vector<4x1xf32>
    %375 = arith.divf %374, %373 : vector<4x1xf32>
    %376 = vector.extract_strided_slice %2 {offsets = [4, 0], sizes = [4, 1], strides = [1, 1]} : vector<16x1xf32> to vector<4x1xf32>
    %377 = vector.broadcast %3 : vector<1x384xf32> to vector<4x384xf32>
    %378 = arith.mulf %341, %377 : vector<4x384xf32>
    %cst_204 = arith.constant dense<0.000000e+00> : vector<4xf32>
    %379 = vector.multi_reduction <add>, %378, %cst_204 [1] : vector<4x384xf32> to vector<4xf32>
    %380 = vector.shape_cast %379 : vector<4xf32> to vector<4x1xf32>
    %cst_205 = arith.constant 3.906250e-03 : f32
    %381 = vector.broadcast %cst_205 : f32 to vector<4x1xf32>
    %382 = arith.mulf %380, %381 : vector<4x1xf32>
    %383 = arith.addf %382, %376 : vector<4x1xf32>
    %c1 = arith.constant 1 : index
    %c0_206 = arith.constant 0 : index
    %c0_207 = arith.constant 0 : index
    %384 = vector.load %arg7[%c1, %c0_206, %c0_207] : memref<4x4x1xf32, #tpu.memory_space<vmem>>, vector<1x4x1xf32>
    %385 = vector.shape_cast %384 : vector<1x4x1xf32> to vector<4x1xf32>
    %386 = arith.mulf %385, %383 : vector<4x1xf32>
    %cst_208 = arith.constant dense<0.000000e+00> : vector<1xf32>
    %387 = vector.multi_reduction <add>, %386, %cst_208 [0] : vector<4x1xf32> to vector<1xf32>
    %388 = vector.shape_cast %387 : vector<1xf32> to vector<1x1xf32>
    %cst_209 = arith.constant 0.000000e+00 : f32
    %389 = vector.broadcast %cst_209 : f32 to vector<1x1xf32>
    %390 = arith.maximumf %388, %389 : vector<1x1xf32>
    %c1_210 = arith.constant 1 : index
    %c0_211 = arith.constant 0 : index
    %c0_212 = arith.constant 0 : index
    %391 = vector.load %arg8[%c1_210, %c0_211, %c0_212] : memref<4x4x1xf32, #tpu.memory_space<vmem>>, vector<1x4x1xf32>
    %392 = vector.shape_cast %391 : vector<1x4x1xf32> to vector<4x1xf32>
    %393 = vector.broadcast %390 : vector<1x1xf32> to vector<4x1xf32>
    %394 = arith.mulf %392, %393 : vector<4x1xf32>
    %cst_213 = arith.constant dense<0.000000e+00> : vector<4xf32>
    %395 = vector.multi_reduction <add>, %394, %cst_213 [1] : vector<4x1xf32> to vector<4xf32>
    %396 = vector.shape_cast %395 : vector<4xf32> to vector<4x1xf32>
    %cst_214 = arith.constant 0.000000e+00 : f32
    %397 = vector.broadcast %cst_214 : f32 to vector<4x1xf32>
    %398 = arith.subf %397, %396 : vector<4x1xf32>
    %399 = math.exp %398 : vector<4x1xf32>
    %cst_215 = arith.constant 1.000000e+00 : f32
    %400 = vector.broadcast %cst_215 : f32 to vector<4x1xf32>
    %401 = arith.addf %400, %399 : vector<4x1xf32>
    %cst_216 = arith.constant 1.000000e+00 : f32
    %402 = vector.broadcast %cst_216 : f32 to vector<4x1xf32>
    %403 = arith.divf %402, %401 : vector<4x1xf32>
    %404 = vector.extract_strided_slice %2 {offsets = [8, 0], sizes = [4, 1], strides = [1, 1]} : vector<16x1xf32> to vector<4x1xf32>
    %405 = vector.broadcast %3 : vector<1x384xf32> to vector<4x384xf32>
    %406 = arith.mulf %344, %405 : vector<4x384xf32>
    %cst_217 = arith.constant dense<0.000000e+00> : vector<4xf32>
    %407 = vector.multi_reduction <add>, %406, %cst_217 [1] : vector<4x384xf32> to vector<4xf32>
    %408 = vector.shape_cast %407 : vector<4xf32> to vector<4x1xf32>
    %cst_218 = arith.constant 3.906250e-03 : f32
    %409 = vector.broadcast %cst_218 : f32 to vector<4x1xf32>
    %410 = arith.mulf %408, %409 : vector<4x1xf32>
    %411 = arith.addf %410, %404 : vector<4x1xf32>
    %c2 = arith.constant 2 : index
    %c0_219 = arith.constant 0 : index
    %c0_220 = arith.constant 0 : index
    %412 = vector.load %arg7[%c2, %c0_219, %c0_220] : memref<4x4x1xf32, #tpu.memory_space<vmem>>, vector<1x4x1xf32>
    %413 = vector.shape_cast %412 : vector<1x4x1xf32> to vector<4x1xf32>
    %414 = arith.mulf %413, %411 : vector<4x1xf32>
    %cst_221 = arith.constant dense<0.000000e+00> : vector<1xf32>
    %415 = vector.multi_reduction <add>, %414, %cst_221 [0] : vector<4x1xf32> to vector<1xf32>
    %416 = vector.shape_cast %415 : vector<1xf32> to vector<1x1xf32>
    %cst_222 = arith.constant 0.000000e+00 : f32
    %417 = vector.broadcast %cst_222 : f32 to vector<1x1xf32>
    %418 = arith.maximumf %416, %417 : vector<1x1xf32>
    %c2_223 = arith.constant 2 : index
    %c0_224 = arith.constant 0 : index
    %c0_225 = arith.constant 0 : index
    %419 = vector.load %arg8[%c2_223, %c0_224, %c0_225] : memref<4x4x1xf32, #tpu.memory_space<vmem>>, vector<1x4x1xf32>
    %420 = vector.shape_cast %419 : vector<1x4x1xf32> to vector<4x1xf32>
    %421 = vector.broadcast %418 : vector<1x1xf32> to vector<4x1xf32>
    %422 = arith.mulf %420, %421 : vector<4x1xf32>
    %cst_226 = arith.constant dense<0.000000e+00> : vector<4xf32>
    %423 = vector.multi_reduction <add>, %422, %cst_226 [1] : vector<4x1xf32> to vector<4xf32>
    %424 = vector.shape_cast %423 : vector<4xf32> to vector<4x1xf32>
    %cst_227 = arith.constant 0.000000e+00 : f32
    %425 = vector.broadcast %cst_227 : f32 to vector<4x1xf32>
    %426 = arith.subf %425, %424 : vector<4x1xf32>
    %427 = math.exp %426 : vector<4x1xf32>
    %cst_228 = arith.constant 1.000000e+00 : f32
    %428 = vector.broadcast %cst_228 : f32 to vector<4x1xf32>
    %429 = arith.addf %428, %427 : vector<4x1xf32>
    %cst_229 = arith.constant 1.000000e+00 : f32
    %430 = vector.broadcast %cst_229 : f32 to vector<4x1xf32>
    %431 = arith.divf %430, %429 : vector<4x1xf32>
    %432 = vector.extract_strided_slice %2 {offsets = [12, 0], sizes = [4, 1], strides = [1, 1]} : vector<16x1xf32> to vector<4x1xf32>
    %433 = vector.broadcast %3 : vector<1x384xf32> to vector<4x384xf32>
    %434 = arith.mulf %347, %433 : vector<4x384xf32>
    %cst_230 = arith.constant dense<0.000000e+00> : vector<4xf32>
    %435 = vector.multi_reduction <add>, %434, %cst_230 [1] : vector<4x384xf32> to vector<4xf32>
    %436 = vector.shape_cast %435 : vector<4xf32> to vector<4x1xf32>
    %cst_231 = arith.constant 3.906250e-03 : f32
    %437 = vector.broadcast %cst_231 : f32 to vector<4x1xf32>
    %438 = arith.mulf %436, %437 : vector<4x1xf32>
    %439 = arith.addf %438, %432 : vector<4x1xf32>
    %c3 = arith.constant 3 : index
    %c0_232 = arith.constant 0 : index
    %c0_233 = arith.constant 0 : index
    %440 = vector.load %arg7[%c3, %c0_232, %c0_233] : memref<4x4x1xf32, #tpu.memory_space<vmem>>, vector<1x4x1xf32>
    %441 = vector.shape_cast %440 : vector<1x4x1xf32> to vector<4x1xf32>
    %442 = arith.mulf %441, %439 : vector<4x1xf32>
    %cst_234 = arith.constant dense<0.000000e+00> : vector<1xf32>
    %443 = vector.multi_reduction <add>, %442, %cst_234 [0] : vector<4x1xf32> to vector<1xf32>
    %444 = vector.shape_cast %443 : vector<1xf32> to vector<1x1xf32>
    %cst_235 = arith.constant 0.000000e+00 : f32
    %445 = vector.broadcast %cst_235 : f32 to vector<1x1xf32>
    %446 = arith.maximumf %444, %445 : vector<1x1xf32>
    %c3_236 = arith.constant 3 : index
    %c0_237 = arith.constant 0 : index
    %c0_238 = arith.constant 0 : index
    %447 = vector.load %arg8[%c3_236, %c0_237, %c0_238] : memref<4x4x1xf32, #tpu.memory_space<vmem>>, vector<1x4x1xf32>
    %448 = vector.shape_cast %447 : vector<1x4x1xf32> to vector<4x1xf32>
    %449 = vector.broadcast %446 : vector<1x1xf32> to vector<4x1xf32>
    %450 = arith.mulf %448, %449 : vector<4x1xf32>
    %cst_239 = arith.constant dense<0.000000e+00> : vector<4xf32>
    %451 = vector.multi_reduction <add>, %450, %cst_239 [1] : vector<4x1xf32> to vector<4xf32>
    %452 = vector.shape_cast %451 : vector<4xf32> to vector<4x1xf32>
    %cst_240 = arith.constant 0.000000e+00 : f32
    %453 = vector.broadcast %cst_240 : f32 to vector<4x1xf32>
    %454 = arith.subf %453, %452 : vector<4x1xf32>
    %455 = math.exp %454 : vector<4x1xf32>
    %cst_241 = arith.constant 1.000000e+00 : f32
    %456 = vector.broadcast %cst_241 : f32 to vector<4x1xf32>
    %457 = arith.addf %456, %455 : vector<4x1xf32>
    %cst_242 = arith.constant 1.000000e+00 : f32
    %458 = vector.broadcast %cst_242 : f32 to vector<4x1xf32>
    %459 = arith.divf %458, %457 : vector<4x1xf32>
    %460 = arith.maximumf %375, %403 : vector<4x1xf32>
    %461 = arith.maximumf %460, %431 : vector<4x1xf32>
    %462 = arith.maximumf %461, %459 : vector<4x1xf32>
    %463 = arith.subf %375, %462 : vector<4x1xf32>
    %464 = math.exp %463 : vector<4x1xf32>
    %465 = arith.subf %403, %462 : vector<4x1xf32>
    %466 = math.exp %465 : vector<4x1xf32>
    %467 = arith.subf %431, %462 : vector<4x1xf32>
    %468 = math.exp %467 : vector<4x1xf32>
    %469 = arith.subf %459, %462 : vector<4x1xf32>
    %470 = math.exp %469 : vector<4x1xf32>
    %471 = arith.addf %464, %466 : vector<4x1xf32>
    %472 = arith.addf %471, %468 : vector<4x1xf32>
    %473 = arith.addf %472, %470 : vector<4x1xf32>
    %474 = tpu.reciprocal %473 {approx = true} : vector<4x1xf32> -> vector<4x1xf32>
    %cst_243 = arith.constant 0.000000e+00 : f32
    %475 = vector.broadcast %cst_243 : f32 to vector<4x384xf32>
    %cst_244 = arith.constant 0.000000e+00 : f32
    %476 = vector.broadcast %cst_244 : f32 to vector<4x1xf32>
    %477 = arith.mulf %464, %474 : vector<4x1xf32>
    %478 = vector.broadcast %477 : vector<4x1xf32> to vector<4x384xf32>
    %479 = arith.mulf %478, %338 : vector<4x384xf32>
    %480 = arith.addf %475, %479 : vector<4x384xf32>
    %481 = vector.extract_strided_slice %2 {offsets = [0, 0], sizes = [4, 1], strides = [1, 1]} : vector<16x1xf32> to vector<4x1xf32>
    %482 = arith.mulf %477, %481 : vector<4x1xf32>
    %483 = arith.addf %476, %482 : vector<4x1xf32>
    %484 = arith.mulf %466, %474 : vector<4x1xf32>
    %485 = vector.broadcast %484 : vector<4x1xf32> to vector<4x384xf32>
    %486 = arith.mulf %485, %341 : vector<4x384xf32>
    %487 = arith.addf %480, %486 : vector<4x384xf32>
    %488 = vector.extract_strided_slice %2 {offsets = [4, 0], sizes = [4, 1], strides = [1, 1]} : vector<16x1xf32> to vector<4x1xf32>
    %489 = arith.mulf %484, %488 : vector<4x1xf32>
    %490 = arith.addf %483, %489 : vector<4x1xf32>
    %491 = arith.mulf %468, %474 : vector<4x1xf32>
    %492 = vector.broadcast %491 : vector<4x1xf32> to vector<4x384xf32>
    %493 = arith.mulf %492, %344 : vector<4x384xf32>
    %494 = arith.addf %487, %493 : vector<4x384xf32>
    %495 = vector.extract_strided_slice %2 {offsets = [8, 0], sizes = [4, 1], strides = [1, 1]} : vector<16x1xf32> to vector<4x1xf32>
    %496 = arith.mulf %491, %495 : vector<4x1xf32>
    %497 = arith.addf %490, %496 : vector<4x1xf32>
    %498 = arith.mulf %470, %474 : vector<4x1xf32>
    %499 = vector.broadcast %498 : vector<4x1xf32> to vector<4x384xf32>
    %500 = arith.mulf %499, %347 : vector<4x384xf32>
    %501 = arith.addf %494, %500 : vector<4x384xf32>
    %502 = vector.extract_strided_slice %2 {offsets = [12, 0], sizes = [4, 1], strides = [1, 1]} : vector<16x1xf32> to vector<4x1xf32>
    %503 = arith.mulf %498, %502 : vector<4x1xf32>
    %504 = arith.addf %497, %503 : vector<4x1xf32>
    %505 = vector.broadcast %504 : vector<4x1xf32> to vector<4x384xf32>
    %506 = arith.addf %501, %505 : vector<4x384xf32>
    %c0_245 = arith.constant 0 : index
    %c0_246 = arith.constant 0 : index
    %c0_247 = arith.constant 0 : index
    %507 = vector.load %arg10[%c0_245, %c0_246, %c0_247] : memref<1x4x384xf32, #tpu.memory_space<vmem>>, vector<1x4x384xf32>
    %508 = vector.shape_cast %507 : vector<1x4x384xf32> to vector<4x384xf32>
    %509 = vector.shape_cast %506 : vector<4x384xf32> to vector<1x4x384xf32>
    tpu.vector_store %arg10[%c0_245, %c0_246, %c0_247], %509 {strides = array<i32>} : memref<1x4x384xf32, #tpu.memory_space<vmem>>, vector<1x4x384xf32>,
    return
  }
  func.func @transform_0(%arg0: i32) -> (i32, i32, i32) {
    %c0_i32 = arith.constant 0 : i32
    %c0_i32_0 = arith.constant 0 : i32
    %c0_i32_1 = arith.constant 0 : i32
    return %arg0, %c0_i32, %c0_i32_0 : i32, i32, i32
  }
  func.func @transform_1(%arg0: i32) -> (i32, i32) {
    %c0_i32 = arith.constant 0 : i32
    %c0_i32_0 = arith.constant 0 : i32
    %c0_i32_1 = arith.constant 0 : i32
    return %c0_i32, %c0_i32_0 : i32, i32
  }
  func.func @transform_2(%arg0: i32) -> (i32, i32) {
    %c0_i32 = arith.constant 0 : i32
    %c0_i32_0 = arith.constant 0 : i32
    %c0_i32_1 = arith.constant 0 : i32
    return %c0_i32, %c0_i32_0 : i32, i32
  }
  func.func @transform_3(%arg0: i32) -> (i32, i32) {
    %c0_i32 = arith.constant 0 : i32
    %c0_i32_0 = arith.constant 0 : i32
    %c0_i32_1 = arith.constant 0 : i32
    return %c0_i32, %c0_i32_0 : i32, i32
  }
  func.func @transform_4(%arg0: i32) -> (i32, i32) {
    %c0_i32 = arith.constant 0 : i32
    %c0_i32_0 = arith.constant 0 : i32
    %c0_i32_1 = arith.constant 0 : i32
    return %c0_i32, %c0_i32_0 : i32, i32
  }
  func.func @transform_5(%arg0: i32) -> (i32, i32) {
    %c0_i32 = arith.constant 0 : i32
    %c0_i32_0 = arith.constant 0 : i32
    %c0_i32_1 = arith.constant 0 : i32
    return %c0_i32, %c0_i32_0 : i32, i32
  }
  func.func @transform_6(%arg0: i32) -> (i32, i32, i32) {
    %c0_i32 = arith.constant 0 : i32
    %c0_i32_0 = arith.constant 0 : i32
    %c0_i32_1 = arith.constant 0 : i32
    %c0_i32_2 = arith.constant 0 : i32
    return %c0_i32, %c0_i32_0, %c0_i32_1 : i32, i32, i32
  }
  func.func @transform_7(%arg0: i32) -> (i32, i32, i32) {
    %c0_i32 = arith.constant 0 : i32
    %c0_i32_0 = arith.constant 0 : i32
    %c0_i32_1 = arith.constant 0 : i32
    %c0_i32_2 = arith.constant 0 : i32
    return %c0_i32, %c0_i32_0, %c0_i32_1 : i32, i32, i32
  }
  func.func @transform_8(%arg0: i32) -> (i32, i32) {
    %c0_i32 = arith.constant 0 : i32
    %c0_i32_0 = arith.constant 0 : i32
    %c0_i32_1 = arith.constant 0 : i32
    return %c0_i32, %c0_i32_0 : i32, i32
  }
  func.func @transform_9(%arg0: i32) -> (i32, i32, i32) {
    %c0_i32 = arith.constant 0 : i32
    %c0_i32_0 = arith.constant 0 : i32
    %c0_i32_1 = arith.constant 0 : i32
    return %arg0, %c0_i32, %c0_i32_0 : i32, i32, i32
  }
}

</mosaic_0001>

<llo_original>
// kernel: tpu_custom_call.1
$region0: #{tpu_custom_call.1}
  #allocation0 [shape = 'u32[]', space=smem, size = 0x4, offset = 0x4, fixed_abs, tag = 'smem constant byte address 0x4 - core index']
  #allocation1 [shape = 'u32[144,128]{1,0:T(1,128)}', space=vmem, size = 0x12000, scoped, tag = 'internal scratch']
  #allocation2 [shape = 'bf16[656,384]{1,0:T(16,128)(2,1)}', space=vmem, size = 0x7b000, scoped, tag = 'scratch operand']
  %s0 = inlined_call_operand.hbm [shape: bf16[2,16,640], index: 0, kind: input, shape index: {}]
  %s1 = inlined_call_operand.vmem [shape: bf16[4,36], index: 1, kind: input, shape index: {}]
  %s2 = inlined_call_operand.vmem [shape: bf16[4,100], index: 2, kind: input, shape index: {}]
  %s3 = inlined_call_operand.vmem [shape: bf16[4,196], index: 3, kind: input, shape index: {}]
  %s4 = inlined_call_operand.vmem [shape: bf16[4,324], index: 4, kind: input, shape index: {}]
  %s5 = inlined_call_operand.vmem [shape: f32[16,1], index: 5, kind: input, shape index: {}]
  %s6 = inlined_call_operand.vmem [shape: f32[4,4,1], index: 6, kind: input, shape index: {}]
  %s7 = inlined_call_operand.vmem [shape: f32[4,4,1], index: 7, kind: input, shape index: {}]
  %s8 = inlined_call_operand.vmem [shape: f32[1,384], index: 8, kind: input, shape index: {}]
  %s9 = inlined_call_operand.hbm [shape: f32[2,4,384], index: 9, kind: output, shape index: {}]
  %s10 = sld [smem:[#allocation0]]
  $region73: #{tpu_custom_call.1} parent=0
    _
  %s12 = ssub.s32 1, %s10
  %s13 = scalar_select 0, %s12, %s10
  $region1: #{tpu_custom_call.1} parent=0
    #allocation3 [shape = 'u8[40960]{0}', space=vmem, size = 0xa000, scoped, tag = 'input window, operand 0']
    #allocation4 [shape = 's32[2]{0}', space=sflag, size = 0x8, scoped, tag = 'scoped memory for tpu_custom_call.1']
    #allocation5 [shape = 's32[2]{0}', space=sflag, size = 0x8, scoped, tag = 'scoped memory for tpu_custom_call.1']
    #allocation6 [shape = 'u8[12288]{0}', space=vmem, size = 0x3000, scoped, tag = 'output window, operand 0']
    %14 = vsyncpa [#allocation4], 0
    %s15 = scalar_lea.sflag [#allocation4], 1
    %16 = vsyncpa %s15, 0
    %17 = vsyncpa [#allocation5], 0
    %s18 = scalar_lea.sflag [#allocation5], 1
    %19 = vsyncpa %s18, 0
    loop: start=0, step=1, limit=4
    $region2: #{tpu_custom_call.1} parent=1 // loop_pre_header
      _
    $region3: #{tpu_custom_call.1} parent=1 // loop_header
      %s21 = sphi 0, %s25
      %p22 = scmp.ge.s32.totalorder %s21, 4
      %s31 = sphi 0, %s33
      %s34 = sphi 0, %s31
      %s35 = sphi 0, %s34
      %s51 = sphi 0, %s35
      %s55 = sphi 0, %s55
      %s57 = sphi 0, %s55
      %s58 = sphi 0, %s57
      %s72 = sphi 0, %s58
      %s76 = sphi 0, %s76
      %s78 = sphi 0, %s76
      %s79 = sphi 0, %s78
      %s93 = sphi 0, %s79
      %s97 = sphi 0, %s97
      %s99 = sphi 0, %s97
      %s100 = sphi 0, %s99
      %s114 = sphi 0, %s100
      %s118 = sphi 0, %s118
      %s120 = sphi 0, %s118
      %s121 = sphi 0, %s120
      %s135 = sphi 0, %s121
      %s139 = sphi 0, %s139
      %s141 = sphi 0, %s139
      %s142 = sphi 0, %s141
      %s156 = sphi 0, %s142
      %s160 = sphi 0, %s160
      %s162 = sphi 0, %s160
      %s163 = sphi 0, %s162
      %s177 = sphi 0, %s163
      %s181 = sphi 0, %s181
      %s183 = sphi 0, %s181
      %s184 = sphi 0, %s183
      %s198 = sphi 0, %s184
      %s202 = sphi 0, %s202
      %s204 = sphi 0, %s202
      %s205 = sphi 0, %s204
      %s219 = sphi 0, %s205
      %s225 = sphi 0, %s227
      %s228 = sphi 0, %s225
      %s229 = sphi 0, %s228
      %s245 = sphi 0, %s229
    $region4: #{tpu_custom_call.1} parent=1 // loop_header_branch
      %24 = sbr.rel (%p22) target = $region8
    $region5: #{tpu_custom_call.1} parent=1 // loop_body
      %s26 = ssub.s32 %s21, 1
      %s27 = ssub.s32 %s21, 2
      %s28 = sadd.s32 %s21, 1
      %s29 = ssub.s32 %s21, %s28
      %p30 = scmp.eq.s32.totalorder %s29, 0
      %s32 = sadd.s32 %s31, 1
      %s33 = scalar_select %p30, %s31, %s32
      %p36 = pneg %p30
      %p37 = scmp.eq.s32.totalorder %s21, 1
      %p38 = por %p36, %p37
      %p39 = scmp.ne.s32.totalorder %s31, %s34
      %p40 = scmp.eq.s32.totalorder %s21, 0
      %p41 = por %p39, %p40
      %p42 = scmp.ne.s32.totalorder %s31, %s34
      %p43 = scmp.eq.s32.totalorder %s26, 1
      %p44 = por %p42, %p43
      %p45 = scmp.ne.s32.totalorder %s34, %s35
      %p46 = scmp.eq.s32.totalorder %s26, 0
      %p47 = por %p45, %p46
      %p48 = scmp.ne.s32.totalorder %s34, %s35
      %p49 = scmp.eq.s32.totalorder %s27, 1
      %p50 = por %p48, %p49
      %p52 = scmp.ne.s32.totalorder %s35, %s51
      %p53 = scmp.eq.s32.totalorder %s27, 0
      %p54 = por %p52, %p53
      %s56 = sadd.s32 %s55, 1
      %p59 = scmp.eq.s32.totalorder %s21, 1
      %p60 = scmp.ne.s32.totalorder %s55, %s57
      %p61 = scmp.eq.s32.totalorder %s21, 0
      %p62 = por %p60, %p61
      %p63 = scmp.ne.s32.totalorder %s55, %s57
      %p64 = scmp.eq.s32.totalorder %s26, 1
      %p65 = por %p63, %p64
      %p66 = scmp.ne.s32.totalorder %s57, %s58
      %p67 = scmp.eq.s32.totalorder %s26, 0
      %p68 = por %p66, %p67
      %p69 = scmp.ne.s32.totalorder %s57, %s58
      %p70 = scmp.eq.s32.totalorder %s27, 1
      %p71 = por %p69, %p70
      %p73 = scmp.ne.s32.totalorder %s58, %s72
      %p74 = scmp.eq.s32.totalorder %s27, 0
      %p75 = por %p73, %p74
      %s77 = sadd.s32 %s76, 1
      %p80 = scmp.eq.s32.totalorder %s21, 1
      %p81 = scmp.ne.s32.totalorder %s76, %s78
      %p82 = scmp.eq.s32.totalorder %s21, 0
      %p83 = por %p81, %p82
      %p84 = scmp.ne.s32.totalorder %s76, %s78
      %p85 = scmp.eq.s32.totalorder %s26, 1
      %p86 = por %p84, %p85
      %p87 = scmp.ne.s32.totalorder %s78, %s79
      %p88 = scmp.eq.s32.totalorder %s26, 0
      %p89 = por %p87, %p88
      %p90 = scmp.ne.s32.totalorder %s78, %s79
      %p91 = scmp.eq.s32.totalorder %s27, 1
      %p92 = por %p90, %p91
      %p94 = scmp.ne.s32.totalorder %s79, %s93
      %p95 = scmp.eq.s32.totalorder %s27, 0
      %p96 = por %p94, %p95
      %s98 = sadd.s32 %s97, 1
      %p101 = scmp.eq.s32.totalorder %s21, 1
      %p102 = scmp.ne.s32.totalorder %s97, %s99
      %p103 = scmp.eq.s32.totalorder %s21, 0
      %p104 = por %p102, %p103
      %p105 = scmp.ne.s32.totalorder %s97, %s99
      %p106 = scmp.eq.s32.totalorder %s26, 1
      %p107 = por %p105, %p106
      %p108 = scmp.ne.s32.totalorder %s99, %s100
      %p109 = scmp.eq.s32.totalorder %s26, 0
      %p110 = por %p108, %p109
      %p111 = scmp.ne.s32.totalorder %s99, %s100
      %p112 = scmp.eq.s32.totalorder %s27, 1
      %p113 = por %p111, %p112
      %p115 = scmp.ne.s32.totalorder %s100, %s114
      %p116 = scmp.eq.s32.totalorder %s27, 0
      %p117 = por %p115, %p116
      %s119 = sadd.s32 %s118, 1
      %p122 = scmp.eq.s32.totalorder %s21, 1
      %p123 = scmp.ne.s32.totalorder %s118, %s120
      %p124 = scmp.eq.s32.totalorder %s21, 0
      %p125 = por %p123, %p124
      %p126 = scmp.ne.s32.totalorder %s118, %s120
      %p127 = scmp.eq.s32.totalorder %s26, 1
      %p128 = por %p126, %p127
      %p129 = scmp.ne.s32.totalorder %s120, %s121
      %p130 = scmp.eq.s32.totalorder %s26, 0
      %p131 = por %p129, %p130
      %p132 = scmp.ne.s32.totalorder %s120, %s121
      %p133 = scmp.eq.s32.totalorder %s27, 1
      %p134 = por %p132, %p133
      %p136 = scmp.ne.s32.totalorder %s121, %s135
      %p137 = scmp.eq.s32.totalorder %s27, 0
      %p138 = por %p136, %p137
      %s140 = sadd.s32 %s139, 1
      %p143 = scmp.eq.s32.totalorder %s21, 1
      %p144 = scmp.ne.s32.totalorder %s139, %s141
      %p145 = scmp.eq.s32.totalorder %s21, 0
      %p146 = por %p144, %p145
      %p147 = scmp.ne.s32.totalorder %s139, %s141
      %p148 = scmp.eq.s32.totalorder %s26, 1
      %p149 = por %p147, %p148
      %p150 = scmp.ne.s32.totalorder %s141, %s142
      %p151 = scmp.eq.s32.totalorder %s26, 0
      %p152 = por %p150, %p151
      %p153 = scmp.ne.s32.totalorder %s141, %s142
      %p154 = scmp.eq.s32.totalorder %s27, 1
      %p155 = por %p153, %p154
      %p157 = scmp.ne.s32.totalorder %s142, %s156
      %p158 = scmp.eq.s32.totalorder %s27, 0
      %p159 = por %p157, %p158
      %s161 = sadd.s32 %s160, 1
      %p164 = scmp.eq.s32.totalorder %s21, 1
      %p165 = scmp.ne.s32.totalorder %s160, %s162
      %p166 = scmp.eq.s32.totalorder %s21, 0
      %p167 = por %p165, %p166
      %p168 = scmp.ne.s32.totalorder %s160, %s162
      %p169 = scmp.eq.s32.totalorder %s26, 1
      %p170 = por %p168, %p169
      %p171 = scmp.ne.s32.totalorder %s162, %s163
      %p172 = scmp.eq.s32.totalorder %s26, 0
      %p173 = por %p171, %p172
      %p174 = scmp.ne.s32.totalorder %s162, %s163
      %p175 = scmp.eq.s32.totalorder %s27, 1
      %p176 = por %p174, %p175
      %p178 = scmp.ne.s32.totalorder %s163, %s177
      %p179 = scmp.eq.s32.totalorder %s27, 0
      %p180 = por %p178, %p179
      %s182 = sadd.s32 %s181, 1
      %p185 = scmp.eq.s32.totalorder %s21, 1
      %p186 = scmp.ne.s32.totalorder %s181, %s183
      %p187 = scmp.eq.s32.totalorder %s21, 0
      %p188 = por %p186, %p187
      %p189 = scmp.ne.s32.totalorder %s181, %s183
      %p190 = scmp.eq.s32.totalorder %s26, 1
      %p191 = por %p189, %p190
      %p192 = scmp.ne.s32.totalorder %s183, %s184
      %p193 = scmp.eq.s32.totalorder %s26, 0
      %p194 = por %p192, %p193
      %p195 = scmp.ne.s32.totalorder %s183, %s184
      %p196 = scmp.eq.s32.totalorder %s27, 1
      %p197 = por %p195, %p196
      %p199 = scmp.ne.s32.totalorder %s184, %s198
      %p200 = scmp.eq.s32.totalorder %s27, 0
      %p201 = por %p199, %p200
      %s203 = sadd.s32 %s202, 1
      %p206 = scmp.eq.s32.totalorder %s21, 1
      %p207 = scmp.ne.s32.totalorder %s202, %s204
      %p208 = scmp.eq.s32.totalorder %s21, 0
      %p209 = por %p207, %p208
      %p210 = scmp.ne.s32.totalorder %s202, %s204
      %p211 = scmp.eq.s32.totalorder %s26, 1
      %p212 = por %p210, %p211
      %p213 = scmp.ne.s32.totalorder %s204, %s205
      %p214 = scmp.eq.s32.totalorder %s26, 0
      %p215 = por %p213, %p214
      %p216 = scmp.ne.s32.totalorder %s204, %s205
      %p217 = scmp.eq.s32.totalorder %s27, 1
      %p218 = por %p216, %p217
      %p220 = scmp.ne.s32.totalorder %s205, %s219
      %p221 = scmp.eq.s32.totalorder %s27, 0
      %p222 = por %p220, %p221
      %s223 = ssub.s32 %s21, %s28
      %p224 = scmp.eq.s32.totalorder %s223, 0
      %s226 = sadd.s32 %s225, 1
      %s227 = scalar_select %p224, %s225, %s226
      %p230 = pneg %p224
      %p231 = scmp.eq.s32.totalorder %s21, 1
      %p232 = por %p230, %p231
      %p233 = scmp.ne.s32.totalorder %s225, %s228
      %p234 = scmp.eq.s32.totalorder %s21, 0
      %p235 = por %p233, %p234
      %p236 = scmp.ne.s32.totalorder %s225, %s228
      %p237 = scmp.eq.s32.totalorder %s26, 1
      %p238 = por %p236, %p237
      %p239 = scmp.ne.s32.totalorder %s228, %s229
      %p240 = scmp.eq.s32.totalorder %s26, 0
      %p241 = por %p239, %p240
      %p242 = scmp.ne.s32.totalorder %s228, %s229
      %p243 = scmp.eq.s32.totalorder %s27, 1
      %p244 = por %p242, %p243
      %p246 = scmp.ne.s32.totalorder %s229, %s245
      %p247 = scmp.eq.s32.totalorder %s27, 0
      %p248 = por %p246, %p247
      %p249 = scmp.le.s32.totalorder 1, %s21
      %p250 = scmp.lt.s32.totalorder %s21, 3
      %p251 = pnand %p249, %p250
      %p252 = pneg %p251
      // Predicated region
      $region9: #{tpu_custom_call.1} parent=5 // pred_check
        _
      $region10: #{tpu_custom_call.1} parent=5 // pred_check_branch
        %254 = sbr.rel (%p251) target = $region12
      $region11: #{tpu_custom_call.1} parent=5 // pred_region
        %s255 = ssub.s32 %s21, 1
        // Predicated region
        $region13: #{tpu_custom_call.1} parent=11 // pred_check
          %p256 = pneg %p68
        $region14: #{tpu_custom_call.1} parent=11 // pred_check_branch
          %258 = sbr.rel (%p256) target = $region16
        $region15: #{tpu_custom_call.1} parent=11 // pred_region
          _
        $region16: #{tpu_custom_call.1} parent=11 // pred_fallthru
          _
        // Predicated region
        $region17: #{tpu_custom_call.1} parent=11 // pred_check
          %p259 = pneg %p89
        $region18: #{tpu_custom_call.1} parent=11 // pred_check_branch
          %261 = sbr.rel (%p259) target = $region20
        $region19: #{tpu_custom_call.1} parent=11 // pred_region
          _
        $region20: #{tpu_custom_call.1} parent=11 // pred_fallthru
          _
        // Predicated region
        $region21: #{tpu_custom_call.1} parent=11 // pred_check
          %p262 = pneg %p110
        $region22: #{tpu_custom_call.1} parent=11 // pred_check_branch
          %264 = sbr.rel (%p262) target = $region24
        $region23: #{tpu_custom_call.1} parent=11 // pred_region
          _
        $region24: #{tpu_custom_call.1} parent=11 // pred_fallthru
          _
        // Predicated region
        $region25: #{tpu_custom_call.1} parent=11 // pred_check
          %p265 = pneg %p131
        $region26: #{tpu_custom_call.1} parent=11 // pred_check_branch
          %267 = sbr.rel (%p265) target = $region28
        $region27: #{tpu_custom_call.1} parent=11 // pred_region
          _
        $region28: #{tpu_custom_call.1} parent=11 // pred_fallthru
          _
        // Predicated region
        $region29: #{tpu_custom_call.1} parent=11 // pred_check
          %p268 = pneg %p152
        $region30: #{tpu_custom_call.1} parent=11 // pred_check_branch
          %270 = sbr.rel (%p268) target = $region32
        $region31: #{tpu_custom_call.1} parent=11 // pred_region
          _
        $region32: #{tpu_custom_call.1} parent=11 // pred_fallthru
          _
        // Predicated region
        $region33: #{tpu_custom_call.1} parent=11 // pred_check
          %p271 = pneg %p173
        $region34: #{tpu_custom_call.1} parent=11 // pred_check_branch
          %273 = sbr.rel (%p271) target = $region36
        $region35: #{tpu_custom_call.1} parent=11 // pred_region
          _
        $region36: #{tpu_custom_call.1} parent=11 // pred_fallthru
          _
        // Predicated region
        $region37: #{tpu_custom_call.1} parent=11 // pred_check
          %p274 = pneg %p194
        $region38: #{tpu_custom_call.1} parent=11 // pred_check_branch
          %276 = sbr.rel (%p274) target = $region40
        $region39: #{tpu_custom_call.1} parent=11 // pred_region
          _
        $region40: #{tpu_custom_call.1} parent=11 // pred_fallthru
          _
        // Predicated region
        $region41: #{tpu_custom_call.1} parent=11 // pred_check
          %p277 = pneg %p215
        $region42: #{tpu_custom_call.1} parent=11 // pred_check_branch
          %279 = sbr.rel (%p277) target = $region44
        $region43: #{tpu_custom_call.1} parent=11 // pred_region
          _
        $region44: #{tpu_custom_call.1} parent=11 // pred_fallthru
          _
      $region12: #{tpu_custom_call.1} parent=5 // pred_fallthru
        _
      %p280 = scmp.lt.s32.totalorder %s21, 2
      // Predicated region
      $region45: #{tpu_custom_call.1} parent=5 // pred_check
        %p281 = pneg %p280
      $region46: #{tpu_custom_call.1} parent=5 // pred_check_branch
        %283 = sbr.rel (%p281) target = $region48
      $region47: #{tpu_custom_call.1} parent=5 // pred_region
        // Predicated region
        $region49: #{tpu_custom_call.1} parent=47 // pred_check
          %p284 = pneg %p41
        $region50: #{tpu_custom_call.1} parent=47 // pred_check_branch
          %286 = sbr.rel (%p284) target = $region52
        $region51: #{tpu_custom_call.1} parent=47 // pred_region
          %s287 = sand.u32 %s31, 1
          %s288 = scalar_lea.sflag [#allocation4], %s287
          %s289 = sand.u32 %s31, 1
          %s290 = smul.addr %s289, 40
          %s291 = scalar_lea.vmem [#allocation3], %s290
          %s293 = ssub.s32 640, 640
          %294 = vsyncadd %s288, %s293
          %s295 = smul.addr %s21, 10
          %s296 = smul.addr %s295, 64
          %s297 = scalar_lea.hbm %s0, %s296
          %s298 = sshll.u32 %s291, 4
          %s299 = int_to_ptr.vmem [resolvable:$true] %s298
          %304 = dma.hbm_to_vmem [thread:$0]  %s297, 640, %s299, %s288, 320, 320, 20
        $region52: #{tpu_custom_call.1} parent=47 // pred_fallthru
          _
      $region48: #{tpu_custom_call.1} parent=5 // pred_fallthru
        _
      %p305 = scmp.le.s32.totalorder 1, %s21
      %p306 = scmp.lt.s32.totalorder %s21, 3
      %p307 = pnand %p305, %p306
      %p308 = pneg %p307
      // Predicated region
      $region53: #{tpu_custom_call.1} parent=5 // pred_check
        _
      $region54: #{tpu_custom_call.1} parent=5 // pred_check_branch
        %310 = sbr.rel (%p307) target = $region56
      $region55: #{tpu_custom_call.1} parent=5 // pred_region
        %s311 = ssub.s32 %s21, 1
        %s312 = sand.u32 %s34, 1
        %s313 = scalar_lea.sflag [#allocation4], %s312
        %s314 = sand.u32 %s34, 1
        %s315 = smul.addr %s314, 40
        %s316 = scalar_lea.vmem [#allocation3], %s315
        // Predicated region
        $region57: #{tpu_custom_call.1} parent=55 // pred_check
          %p317 = pneg %p47
        $region58: #{tpu_custom_call.1} parent=55 // pred_check_branch
          %319 = sbr.rel (%p317) target = $region60
        $region59: #{tpu_custom_call.1} parent=55 // pred_region
          %320 = dma.done %s313, 640
        $region60: #{tpu_custom_call.1} parent=55 // pred_fallthru
          _
        %s321 = sand.u32 %s34, 1
        %s322 = scalar_lea.sflag [#allocation4], %s321
        %s323 = sand.u32 %s34, 1
        %s324 = smul.addr %s323, 40
        %s325 = scalar_lea.vmem [#allocation3], %s324
        %p326 = pneg %p47
        %p327 = pneg %p44
        %p328 = pneg %p68
        %p329 = pneg %p65
        %p330 = pneg %p89
        %p331 = pneg %p86
        %p332 = pneg %p110
        %p333 = pneg %p107
        %p334 = pneg %p131
        %p335 = pneg %p128
        %p336 = pneg %p152
        %p337 = pneg %p149
        %p338 = pneg %p173
        %p339 = pneg %p170
        %p340 = pneg %p194
        %p341 = pneg %p191
        %p342 = pneg %p215
        %p343 = pneg %p212
        %p344 = pneg %p241
        %p345 = pneg %p238
        %s346 = sand.u32 %s228, 1
        %s347 = scalar_lea.sflag [#allocation5], %s346
        %s348 = sand.u32 %s228, 1
        %s349 = smul.addr %s348, 12
        %s350 = scalar_lea.vmem [#allocation6], %s349
        %v352 = vld [vmem:[%s316] sm:$0xff]
        %v353 = vld [vmem:[%s316 + $0x8] sm:$0xff]
        %v354 = vld [vmem:[%s316 + $0x10] sm:$0xf]
        %v355 = vld [vmem:[%s316 + $0x14] sm:$0xff]
        %v356 = vld [vmem:[%s316 + $0x1c] sm:$0xff]
        %v357 = vld [vmem:[%s316 + $0x24] sm:$0xf]
        %v358 = vld [vmem:[%s5] sm:$0xff]
        %v359 = vld [vmem:[%s5 + $0x8] sm:$0xff]
        %v360 = vld [vmem:[%s8] sm:$0x7]
        %v363 = vunpack.c.l.b16 %v352
        %v364 = vunpack.c.h.b16 %v352
        %v365 = vunpack.c.l.b16 %v353
        %v366 = vunpack.c.h.b16 %v353
        %v367 = vpack.c.b16 %v363, %v363
        %v368 = vpack.c.b16 %v364, %v364
        %v369 = vpack.c.b16 %v365, %v365
        %v370 = vpack.c.b16 %v366, %v366
        %371 = vrot.lane.b32.xlu0 %v367, 53
        %v372 = vpop.permute.xlu0 %371
        %373 = vrot.lane.b32.xlu0 %v368, 53
        %v374 = vpop.permute.xlu0 %373
        %375 = vrot.lane.b32.xlu0 %v369, 53
        %v376 = vpop.permute.xlu0 %375
        %377 = vrot.lane.b32.xlu0 %v370, 53
        %v378 = vpop.permute.xlu0 %377
        %vm379 = vcmask 433152
        %v380 = vsel %vm379, %v372, %v374
        %v381 = vsel %vm379, %v374, %v376
        %v382 = vsel %vm379, %v376, %v378
        %386 = vst [vmem:[#allocation2] sm:$0x3] %v380
        %387 = vst [vmem:[#allocation2 + $0x8] sm:$0x3] %v381
        %388 = vst [vmem:[#allocation2 + $0x10] sm:$0x3] %v382
        %v389 = vrot.slane %v367, 6
        %v390 = vrot.slane %v368, 6
        %v391 = vrot.slane %v369, 6
        %v392 = vrot.slane %v370, 6
        %393 = vrot.lane.b32.xlu0 %v389, 52
        %v394 = vpop.permute.xlu0 %393
        %395 = vrot.lane.b32.xlu0 %v390, 52
        %v396 = vpop.permute.xlu0 %395
        %397 = vrot.lane.b32.xlu0 %v391, 52
        %v398 = vpop.permute.xlu0 %397
        %399 = vrot.lane.b32.xlu0 %v392, 52
        %v400 = vpop.permute.xlu0 %399
        %vm401 = vcmask 424960
        %v402 = vsel %vm401, %v394, %v396
        %v403 = vsel %vm401, %v396, %v398
        %v404 = vsel %vm401, %v398, %v400
        %408 = vst [vmem:[#allocation2] sm:$0xc] %v402
        %409 = vst [vmem:[#allocation2 + $0x8] sm:$0xc] %v403
        %410 = vst [vmem:[#allocation2 + $0x10] sm:$0xc] %v404
        %411 = vrot.lane.b32.xlu0 %v367, 51
        %v412 = vpop.permute.xlu0 %411
        %413 = vrot.lane.b32.xlu0 %v368, 51
        %v414 = vpop.permute.xlu0 %413
        %415 = vrot.lane.b32.xlu0 %v369, 51
        %v416 = vpop.permute.xlu0 %415
        %417 = vrot.lane.b32.xlu0 %v370, 51
        %v418 = vpop.permute.xlu0 %417
        %vm419 = vcmask 416768
        %v420 = vsel %vm419, %v412, %v414
        %v421 = vsel %vm419, %v414, %v416
        %v422 = vsel %vm419, %v416, %v418
        %426 = vst [vmem:[#allocation2] sm:$0x30] %v420
        %427 = vst [vmem:[#allocation2 + $0x8] sm:$0x30] %v421
        %428 = vst [vmem:[#allocation2 + $0x10] sm:$0x30] %v422
        %v429 = vrot.slane %v367, 2
        %v430 = vrot.slane %v368, 2
        %v431 = vrot.slane %v369, 2
        %v432 = vrot.slane %v370, 2
        %433 = vrot.lane.b32.xlu0 %v429, 29
        %v434 = vpop.permute.xlu0 %433
        %435 = vrot.lane.b32.xlu0 %v430, 29
        %v436 = vpop.permute.xlu0 %435
        %437 = vrot.lane.b32.xlu0 %v431, 29
        %v438 = vpop.permute.xlu0 %437
        %439 = vrot.lane.b32.xlu0 %v432, 29
        %v440 = vpop.permute.xlu0 %439
        %vm441 = vcmask 236544
        %v442 = vsel %vm441, %v434, %v436
        %v443 = vsel %vm441, %v436, %v438
        %v444 = vsel %vm441, %v438, %v440
        %448 = vst [vmem:[#allocation2] sm:$0xc0] %v442
        %449 = vst [vmem:[#allocation2 + $0x8] sm:$0xc0] %v443
        %450 = vst [vmem:[#allocation2 + $0x10] sm:$0xc0] %v444
        %451 = vrot.lane.b32.xlu0 %v367, 28
        %v452 = vpop.permute.xlu0 %451
        %453 = vrot.lane.b32.xlu0 %v368, 28
        %v454 = vpop.permute.xlu0 %453
        %455 = vrot.lane.b32.xlu0 %v369, 28
        %v456 = vpop.permute.xlu0 %455
        %457 = vrot.lane.b32.xlu0 %v370, 28
        %v458 = vpop.permute.xlu0 %457
        %vm459 = vcmask 228352
        %v460 = vsel %vm459, %v452, %v454
        %v461 = vsel %vm459, %v454, %v456
        %v462 = vsel %vm459, %v456, %v458
        %466 = vst [vmem:[#allocation2 + $0x18] sm:$0x3] %v460
        %467 = vst [vmem:[#allocation2 + $0x20] sm:$0x3] %v461
        %468 = vst [vmem:[#allocation2 + $0x28] sm:$0x3] %v462
        %469 = vrot.lane.b32.xlu0 %v389, 27
        %v470 = vpop.permute.xlu0 %469
        %471 = vrot.lane.b32.xlu0 %v390, 27
        %v472 = vpop.permute.xlu0 %471
        %473 = vrot.lane.b32.xlu0 %v391, 27
        %v474 = vpop.permute.xlu0 %473
        %475 = vrot.lane.b32.xlu0 %v392, 27
        %v476 = vpop.permute.xlu0 %475
        %vm477 = vcmask 220160
        %v478 = vsel %vm477, %v470, %v472
        %v479 = vsel %vm477, %v472, %v474
        %v480 = vsel %vm477, %v474, %v476
        %484 = vst [vmem:[#allocation2 + $0x18] sm:$0xc] %v478
        %485 = vst [vmem:[#allocation2 + $0x20] sm:$0xc] %v479
        %486 = vst [vmem:[#allocation2 + $0x28] sm:$0xc] %v480
        %487 = vrot.lane.b32.xlu0 %v367, 5
        %v488 = vpop.permute.xlu0 %487
        %489 = vrot.lane.b32.xlu0 %v368, 5
        %v490 = vpop.permute.xlu0 %489
        %491 = vrot.lane.b32.xlu0 %v369, 5
        %v492 = vpop.permute.xlu0 %491
        %493 = vrot.lane.b32.xlu0 %v370, 5
        %v494 = vpop.permute.xlu0 %493
        %vm495 = vcmask 39936
        %v496 = vsel %vm495, %v488, %v490
        %v497 = vsel %vm495, %v490, %v492
        %v498 = vsel %vm495, %v492, %v494
        %502 = vst [vmem:[#allocation2 + $0x18] sm:$0x30] %v496
        %503 = vst [vmem:[#allocation2 + $0x20] sm:$0x30] %v497
        %504 = vst [vmem:[#allocation2 + $0x28] sm:$0x30] %v498
        %505 = vrot.lane.b32.xlu0 %v429, 4
        %v506 = vpop.permute.xlu0 %505
        %507 = vrot.lane.b32.xlu0 %v430, 4
        %v508 = vpop.permute.xlu0 %507
        %509 = vrot.lane.b32.xlu0 %v431, 4
        %v510 = vpop.permute.xlu0 %509
        %511 = vrot.lane.b32.xlu0 %v432, 4
        %v512 = vpop.permute.xlu0 %511
        %vm513 = vcmask 31744
        %v514 = vsel %vm513, %v506, %v508
        %v515 = vsel %vm513, %v508, %v510
        %v516 = vsel %vm513, %v510, %v512
        %520 = vst [vmem:[#allocation2 + $0x18] sm:$0xc0] %v514
        %521 = vst [vmem:[#allocation2 + $0x20] sm:$0xc0] %v515
        %522 = vst [vmem:[#allocation2 + $0x28] sm:$0xc0] %v516
        %523 = vrot.lane.b32.xlu0 %v367, 3
        %v524 = vpop.permute.xlu0 %523
        %525 = vrot.lane.b32.xlu0 %v368, 3
        %v526 = vpop.permute.xlu0 %525
        %527 = vrot.lane.b32.xlu0 %v369, 3
        %v528 = vpop.permute.xlu0 %527
        %529 = vrot.lane.b32.xlu0 %v370, 3
        %v530 = vpop.permute.xlu0 %529
        %vm531 = vcmask 23552
        %v532 = vsel %vm531, %v524, %v526
        %v533 = vsel %vm531, %v526, %v528
        %v534 = vsel %vm531, %v528, %v530
        %538 = vst [vmem:[#allocation2 + $0x30] sm:$0x3] %v532
        %539 = vst [vmem:[#allocation2 + $0x38] sm:$0x3] %v533
        %540 = vst [vmem:[#allocation2 + $0x40] sm:$0x3] %v534
        %541 = vrot.lane.b32.xlu0 %v367, 78
        %v542 = vpop.permute.xlu0 %541
        %543 = vrot.lane.b32.xlu0 %v368, 78
        %v544 = vpop.permute.xlu0 %543
        %545 = vrot.lane.b32.xlu0 %v369, 78
        %v546 = vpop.permute.xlu0 %545
        %547 = vrot.lane.b32.xlu0 %v370, 78
        %v548 = vpop.permute.xlu0 %547
        %vm549 = vcmask 637952
        %v550 = vsel %vm549, %v542, %v544
        %v551 = vsel %vm549, %v544, %v546
        %v552 = vsel %vm549, %v546, %v548
        %556 = vst [vmem:[#allocation2 + $0x30] sm:$0xc] %v550
        %557 = vst [vmem:[#allocation2 + $0x38] sm:$0xc] %v551
        %558 = vst [vmem:[#allocation2 + $0x40] sm:$0xc] %v552
        %559 = vrot.lane.b32.xlu0 %v389, 77
        %v560 = vpop.permute.xlu0 %559
        %561 = vrot.lane.b32.xlu0 %v390, 77
        %v562 = vpop.permute.xlu0 %561
        %563 = vrot.lane.b32.xlu0 %v391, 77
        %v564 = vpop.permute.xlu0 %563
        %565 = vrot.lane.b32.xlu0 %v392, 77
        %v566 = vpop.permute.xlu0 %565
        %vm567 = vcmask 629760
        %v568 = vsel %vm567, %v560, %v562
        %v569 = vsel %vm567, %v562, %v564
        %v570 = vsel %vm567, %v564, %v566
        %574 = vst [vmem:[#allocation2 + $0x30] sm:$0x30] %v568
        %575 = vst [vmem:[#allocation2 + $0x38] sm:$0x30] %v569
        %576 = vst [vmem:[#allocation2 + $0x40] sm:$0x30] %v570
        %577 = vrot.lane.b32.xlu0 %v367, 76
        %v578 = vpop.permute.xlu0 %577
        %579 = vrot.lane.b32.xlu0 %v368, 76
        %v580 = vpop.permute.xlu0 %579
        %581 = vrot.lane.b32.xlu0 %v369, 76
        %v582 = vpop.permute.xlu0 %581
        %583 = vrot.lane.b32.xlu0 %v370, 76
        %v584 = vpop.permute.xlu0 %583
        %vm585 = vcmask 621568
        %v586 = vsel %vm585, %v578, %v580
        %v587 = vsel %vm585, %v580, %v582
        %v588 = vsel %vm585, %v582, %v584
        %592 = vst [vmem:[#allocation2 + $0x30] sm:$0xc0] %v586
        %593 = vst [vmem:[#allocation2 + $0x38] sm:$0xc0] %v587
        %594 = vst [vmem:[#allocation2 + $0x40] sm:$0xc0] %v588
        %595 = vrot.lane.b32.xlu0 %v429, 75
        %v596 = vpop.permute.xlu0 %595
        %597 = vrot.lane.b32.xlu0 %v430, 75
        %v598 = vpop.permute.xlu0 %597
        %599 = vrot.lane.b32.xlu0 %v431, 75
        %v600 = vpop.permute.xlu0 %599
        %601 = vrot.lane.b32.xlu0 %v432, 75
        %v602 = vpop.permute.xlu0 %601
        %vm603 = vcmask 613376
        %v604 = vsel %vm603, %v596, %v598
        %v605 = vsel %vm603, %v598, %v600
        %v606 = vsel %vm603, %v600, %v602
        %610 = vst [vmem:[#allocation2 + $0x48] sm:$0x3] %v604
        %611 = vst [vmem:[#allocation2 + $0x50] sm:$0x3] %v605
        %612 = vst [vmem:[#allocation2 + $0x58] sm:$0x3] %v606
        %613 = vrot.lane.b32.xlu0 %v367, 74
        %v614 = vpop.permute.xlu0 %613
        %615 = vrot.lane.b32.xlu0 %v368, 74
        %v616 = vpop.permute.xlu0 %615
        %617 = vrot.lane.b32.xlu0 %v369, 74
        %v618 = vpop.permute.xlu0 %617
        %619 = vrot.lane.b32.xlu0 %v370, 74
        %v620 = vpop.permute.xlu0 %619
        %vm621 = vcmask 605184
        %v622 = vsel %vm621, %v614, %v616
        %v623 = vsel %vm621, %v616, %v618
        %v624 = vsel %vm621, %v618, %v620
        %628 = vst [vmem:[#allocation2 + $0x48] sm:$0xc] %v622
        %629 = vst [vmem:[#allocation2 + $0x50] sm:$0xc] %v623
        %630 = vst [vmem:[#allocation2 + $0x58] sm:$0xc] %v624
        %631 = vrot.lane.b32.xlu0 %v389, 54
        %v632 = vpop.permute.xlu0 %631
        %633 = vrot.lane.b32.xlu0 %v390, 54
        %v634 = vpop.permute.xlu0 %633
        %635 = vrot.lane.b32.xlu0 %v391, 54
        %v636 = vpop.permute.xlu0 %635
        %637 = vrot.lane.b32.xlu0 %v392, 54
        %v638 = vpop.permute.xlu0 %637
        %vm639 = vcmask 441344
        %v640 = vsel %vm639, %v632, %v634
        %v641 = vsel %vm639, %v634, %v636
        %v642 = vsel %vm639, %v636, %v638
        %646 = vst [vmem:[#allocation2 + $0x48] sm:$0x30] %v640
        %647 = vst [vmem:[#allocation2 + $0x50] sm:$0x30] %v641
        %648 = vst [vmem:[#allocation2 + $0x58] sm:$0x30] %v642
        %649 = vst [vmem:[#allocation2 + $0x48] sm:$0xc0] %v380
        %650 = vst [vmem:[#allocation2 + $0x50] sm:$0xc0] %v381
        %651 = vst [vmem:[#allocation2 + $0x58] sm:$0xc0] %v382
        %652 = vrot.lane.b32.xlu0 %v429, 52
        %v653 = vpop.permute.xlu0 %652
        %654 = vrot.lane.b32.xlu0 %v430, 52
        %v655 = vpop.permute.xlu0 %654
        %656 = vrot.lane.b32.xlu0 %v431, 52
        %v657 = vpop.permute.xlu0 %656
        %658 = vrot.lane.b32.xlu0 %v432, 52
        %v659 = vpop.permute.xlu0 %658
        %v660 = vsel %vm401, %v653, %v655
        %v661 = vsel %vm401, %v655, %v657
        %v662 = vsel %vm401, %v657, %v659
        %666 = vst [vmem:[#allocation2 + $0x60] sm:$0x3] %v660
        %667 = vst [vmem:[#allocation2 + $0x68] sm:$0x3] %v661
        %668 = vst [vmem:[#allocation2 + $0x70] sm:$0x3] %v662
        %669 = vst [vmem:[#allocation2 + $0x60] sm:$0xc] %v420
        %670 = vst [vmem:[#allocation2 + $0x68] sm:$0xc] %v421
        %671 = vst [vmem:[#allocation2 + $0x70] sm:$0xc] %v422
        %672 = vrot.lane.b32.xlu0 %v389, 50
        %v673 = vpop.permute.xlu0 %672
        %674 = vrot.lane.b32.xlu0 %v390, 50
        %v675 = vpop.permute.xlu0 %674
        %676 = vrot.lane.b32.xlu0 %v391, 50
        %v677 = vpop.permute.xlu0 %676
        %678 = vrot.lane.b32.xlu0 %v392, 50
        %v679 = vpop.permute.xlu0 %678
        %vm680 = vcmask 408576
        %v681 = vsel %vm680, %v673, %v675
        %v682 = vsel %vm680, %v675, %v677
        %v683 = vsel %vm680, %v677, %v679
        %687 = vst [vmem:[#allocation2 + $0x60] sm:$0x30] %v681
        %688 = vst [vmem:[#allocation2 + $0x68] sm:$0x30] %v682
        %689 = vst [vmem:[#allocation2 + $0x70] sm:$0x30] %v683
        %690 = vrot.lane.b32.xlu0 %v367, 30
        %v691 = vpop.permute.xlu0 %690
        %692 = vrot.lane.b32.xlu0 %v368, 30
        %v693 = vpop.permute.xlu0 %692
        %694 = vrot.lane.b32.xlu0 %v369, 30
        %v695 = vpop.permute.xlu0 %694
        %696 = vrot.lane.b32.xlu0 %v370, 30
        %v697 = vpop.permute.xlu0 %696
        %vm698 = vcmask 244736
        %v699 = vsel %vm698, %v691, %v693
        %v700 = vsel %vm698, %v693, %v695
        %v701 = vsel %vm698, %v695, %v697
        %705 = vst [vmem:[#allocation2 + $0x60] sm:$0xc0] %v699
        %706 = vst [vmem:[#allocation2 + $0x68] sm:$0xc0] %v700
        %707 = vst [vmem:[#allocation2 + $0x70] sm:$0xc0] %v701
        %708 = vst [vmem:[#allocation2 + $0x78] sm:$0x3] %v442
        %709 = vst [vmem:[#allocation2 + $0x80] sm:$0x3] %v443
        %710 = vst [vmem:[#allocation2 + $0x88] sm:$0x3] %v444
        %711 = vst [vmem:[#allocation2 + $0x78] sm:$0xc] %v460
        %712 = vst [vmem:[#allocation2 + $0x80] sm:$0xc] %v461
        %713 = vst [vmem:[#allocation2 + $0x88] sm:$0xc] %v462
        %714 = vst [vmem:[#allocation2 + $0x78] sm:$0x30] %v478
        %715 = vst [vmem:[#allocation2 + $0x80] sm:$0x30] %v479
        %716 = vst [vmem:[#allocation2 + $0x88] sm:$0x30] %v480
        %717 = vrot.lane.b32.xlu0 %v367, 26
        %v718 = vpop.permute.xlu0 %717
        %719 = vrot.lane.b32.xlu0 %v368, 26
        %v720 = vpop.permute.xlu0 %719
        %721 = vrot.lane.b32.xlu0 %v369, 26
        %v722 = vpop.permute.xlu0 %721
        %723 = vrot.lane.b32.xlu0 %v370, 26
        %v724 = vpop.permute.xlu0 %723
        %vm725 = vcmask 211968
        %v726 = vsel %vm725, %v718, %v720
        %v727 = vsel %vm725, %v720, %v722
        %v728 = vsel %vm725, %v722, %v724
        %732 = vst [vmem:[#allocation2 + $0x78] sm:$0xc0] %v726
        %733 = vst [vmem:[#allocation2 + $0x80] sm:$0xc0] %v727
        %734 = vst [vmem:[#allocation2 + $0x88] sm:$0xc0] %v728
        %735 = vrot.lane.b32.xlu0 %v429, 6
        %v736 = vpop.permute.xlu0 %735
        %737 = vrot.lane.b32.xlu0 %v430, 6
        %v738 = vpop.permute.xlu0 %737
        %739 = vrot.lane.b32.xlu0 %v431, 6
        %v740 = vpop.permute.xlu0 %739
        %741 = vrot.lane.b32.xlu0 %v432, 6
        %v742 = vpop.permute.xlu0 %741
        %vm743 = vcmask 48128
        %v744 = vsel %vm743, %v736, %v738
        %v745 = vsel %vm743, %v738, %v740
        %v746 = vsel %vm743, %v740, %v742
        %750 = vst [vmem:[#allocation2 + $0x90] sm:$0x3] %v744
        %751 = vst [vmem:[#allocation2 + $0x98] sm:$0x3] %v745
        %752 = vst [vmem:[#allocation2 + $0xa0] sm:$0x3] %v746
        %753 = vst [vmem:[#allocation2 + $0x90] sm:$0xc] %v496
        %754 = vst [vmem:[#allocation2 + $0x98] sm:$0xc] %v497
        %755 = vst [vmem:[#allocation2 + $0xa0] sm:$0xc] %v498
        %756 = vrot.lane.b32.xlu0 %v389, 4
        %v757 = vpop.permute.xlu0 %756
        %758 = vrot.lane.b32.xlu0 %v390, 4
        %v759 = vpop.permute.xlu0 %758
        %760 = vrot.lane.b32.xlu0 %v391, 4
        %v761 = vpop.permute.xlu0 %760
        %762 = vrot.lane.b32.xlu0 %v392, 4
        %v763 = vpop.permute.xlu0 %762
        %v764 = vsel %vm513, %v757, %v759
        %v765 = vsel %vm513, %v759, %v761
        %v766 = vsel %vm513, %v761, %v763
        %770 = vst [vmem:[#allocation2 + $0x90] sm:$0x30] %v764
        %771 = vst [vmem:[#allocation2 + $0x98] sm:$0x30] %v765
        %772 = vst [vmem:[#allocation2 + $0xa0] sm:$0x30] %v766
        %773 = vst [vmem:[#allocation2 + $0x90] sm:$0xc0] %v532
        %774 = vst [vmem:[#allocation2 + $0x98] sm:$0xc0] %v533
        %775 = vst [vmem:[#allocation2 + $0xa0] sm:$0xc0] %v534
        %776 = vrot.lane.b32.xlu0 %v429, 2
        %v777 = vpop.permute.xlu0 %776
        %778 = vrot.lane.b32.xlu0 %v430, 2
        %v779 = vpop.permute.xlu0 %778
        %780 = vrot.lane.b32.xlu0 %v431, 2
        %v781 = vpop.permute.xlu0 %780
        %782 = vrot.lane.b32.xlu0 %v432, 2
        %v783 = vpop.permute.xlu0 %782
        %vm784 = vcmask 15360
        %v785 = vsel %vm784, %v777, %v779
        %v786 = vsel %vm784, %v779, %v781
        %v787 = vsel %vm784, %v781, %v783
        %791 = vst [vmem:[#allocation2 + $0xa8] sm:$0x3] %v785
        %792 = vst [vmem:[#allocation2 + $0xb0] sm:$0x3] %v786
        %793 = vst [vmem:[#allocation2 + $0xb8] sm:$0x3] %v787
        %v795 = vunpack.c.l.b16 %v354
        %v796 = vpack.c.b16 %v795, %v795
        %797 = vrot.lane.b32.xlu0 %v368, 110
        %v798 = vpop.permute.xlu0 %797
        %799 = vrot.lane.b32.xlu0 %v369, 110
        %v800 = vpop.permute.xlu0 %799
        %801 = vrot.lane.b32.xlu0 %v370, 110
        %v802 = vpop.permute.xlu0 %801
        %803 = vrot.lane.b32.xlu0 %v796, 110
        %v804 = vpop.permute.xlu0 %803
        %vm805 = vcmask 900096
        %v806 = vsel %vm805, %v798, %v800
        %v807 = vsel %vm805, %v800, %v802
        %v808 = vsel %vm805, %v802, %v804
        %812 = vst [vmem:[#allocation2 + $0xa8] sm:$0xc] %v806
        %813 = vst [vmem:[#allocation2 + $0xb0] sm:$0xc] %v807
        %814 = vst [vmem:[#allocation2 + $0xb8] sm:$0xc] %v808
        %v815 = vrot.slane %v796, 6
        %816 = vrot.lane.b32.xlu0 %v390, 109
        %v817 = vpop.permute.xlu0 %816
        %818 = vrot.lane.b32.xlu0 %v391, 109
        %v819 = vpop.permute.xlu0 %818
        %820 = vrot.lane.b32.xlu0 %v392, 109
        %v821 = vpop.permute.xlu0 %820
        %822 = vrot.lane.b32.xlu0 %v815, 109
        %v823 = vpop.permute.xlu0 %822
        %vm824 = vcmask 891904
        %v825 = vsel %vm824, %v817, %v819
        %v826 = vsel %vm824, %v819, %v821
        %v827 = vsel %vm824, %v821, %v823
        %831 = vst [vmem:[#allocation2 + $0xa8] sm:$0x30] %v825
        %832 = vst [vmem:[#allocation2 + $0xb0] sm:$0x30] %v826
        %833 = vst [vmem:[#allocation2 + $0xb8] sm:$0x30] %v827
        %834 = vrot.lane.b32.xlu0 %v368, 108
        %v835 = vpop.permute.xlu0 %834
        %836 = vrot.lane.b32.xlu0 %v369, 108
        %v837 = vpop.permute.xlu0 %836
        %838 = vrot.lane.b32.xlu0 %v370, 108
        %v839 = vpop.permute.xlu0 %838
        %840 = vrot.lane.b32.xlu0 %v796, 108
        %v841 = vpop.permute.xlu0 %840
        %vm842 = vcmask 883712
        %v843 = vsel %vm842, %v835, %v837
        %v844 = vsel %vm842, %v837, %v839
        %v845 = vsel %vm842, %v839, %v841
        %849 = vst [vmem:[#allocation2 + $0xa8] sm:$0xc0] %v843
        %850 = vst [vmem:[#allocation2 + $0xb0] sm:$0xc0] %v844
        %851 = vst [vmem:[#allocation2 + $0xb8] sm:$0xc0] %v845
        %v852 = vrot.slane %v796, 2
        %853 = vrot.lane.b32.xlu0 %v430, 107
        %v854 = vpop.permute.xlu0 %853
        %855 = vrot.lane.b32.xlu0 %v431, 107
        %v856 = vpop.permute.xlu0 %855
        %857 = vrot.lane.b32.xlu0 %v432, 107
        %v858 = vpop.permute.xlu0 %857
        %859 = vrot.lane.b32.xlu0 %v852, 107
        %v860 = vpop.permute.xlu0 %859
        %vm861 = vcmask 875520
        %v862 = vsel %vm861, %v854, %v856
        %v863 = vsel %vm861, %v856, %v858
        %v864 = vsel %vm861, %v858, %v860
        %868 = vst [vmem:[#allocation2 + $0xc0] sm:$0x3] %v862
        %869 = vst [vmem:[#allocation2 + $0xc8] sm:$0x3] %v863
        %870 = vst [vmem:[#allocation2 + $0xd0] sm:$0x3] %v864
        %871 = vrot.lane.b32.xlu0 %v368, 106
        %v872 = vpop.permute.xlu0 %871
        %873 = vrot.lane.b32.xlu0 %v369, 106
        %v874 = vpop.permute.xlu0 %873
        %875 = vrot.lane.b32.xlu0 %v370, 106
        %v876 = vpop.permute.xlu0 %875
        %877 = vrot.lane.b32.xlu0 %v796, 106
        %v878 = vpop.permute.xlu0 %877
        %vm879 = vcmask 867328
        %v880 = vsel %vm879, %v872, %v874
        %v881 = vsel %vm879, %v874, %v876
        %v882 = vsel %vm879, %v876, %v878
        %886 = vst [vmem:[#allocation2 + $0xc0] sm:$0xc] %v880
        %887 = vst [vmem:[#allocation2 + $0xc8] sm:$0xc] %v881
        %888 = vst [vmem:[#allocation2 + $0xd0] sm:$0xc] %v882
        %v891 = vunpack.c.l.b16 %v355
        %v892 = vunpack.c.h.b16 %v355
        %v893 = vunpack.c.l.b16 %v356
        %v894 = vunpack.c.h.b16 %v356
        %v895 = vpack.c.b16 %v891, %v891
        %v896 = vpack.c.b16 %v892, %v892
        %v897 = vpack.c.b16 %v893, %v893
        %v898 = vpack.c.b16 %v894, %v894
        %899 = vrot.lane.b32.xlu0 %v895, 103
        %v900 = vpop.permute.xlu0 %899
        %901 = vrot.lane.b32.xlu0 %v896, 103
        %v902 = vpop.permute.xlu0 %901
        %903 = vrot.lane.b32.xlu0 %v897, 103
        %v904 = vpop.permute.xlu0 %903
        %905 = vrot.lane.b32.xlu0 %v898, 103
        %v906 = vpop.permute.xlu0 %905
        %vm907 = vcmask 842752
        %v908 = vsel %vm907, %v900, %v902
        %v909 = vsel %vm907, %v902, %v904
        %v910 = vsel %vm907, %v904, %v906
        %914 = vst [vmem:[#allocation2 + $0xc0] sm:$0x30] %v908
        %915 = vst [vmem:[#allocation2 + $0xc8] sm:$0x30] %v909
        %916 = vst [vmem:[#allocation2 + $0xd0] sm:$0x30] %v910
        %v917 = vrot.slane %v895, 2
        %v918 = vrot.slane %v896, 2
        %v919 = vrot.slane %v897, 2
        %v920 = vrot.slane %v898, 2
        %921 = vrot.lane.b32.xlu0 %v917, 102
        %v922 = vpop.permute.xlu0 %921
        %923 = vrot.lane.b32.xlu0 %v918, 102
        %v924 = vpop.permute.xlu0 %923
        %925 = vrot.lane.b32.xlu0 %v919, 102
        %v926 = vpop.permute.xlu0 %925
        %927 = vrot.lane.b32.xlu0 %v920, 102
        %v928 = vpop.permute.xlu0 %927
        %vm929 = vcmask 834560
        %v930 = vsel %vm929, %v922, %v924
        %v931 = vsel %vm929, %v924, %v926
        %v932 = vsel %vm929, %v926, %v928
        %936 = vst [vmem:[#allocation2 + $0xc0] sm:$0xc0] %v930
        %937 = vst [vmem:[#allocation2 + $0xc8] sm:$0xc0] %v931
        %938 = vst [vmem:[#allocation2 + $0xd0] sm:$0xc0] %v932
        %939 = vrot.lane.b32.xlu0 %v895, 101
        %v940 = vpop.permute.xlu0 %939
        %941 = vrot.lane.b32.xlu0 %v896, 101
        %v942 = vpop.permute.xlu0 %941
        %943 = vrot.lane.b32.xlu0 %v897, 101
        %v944 = vpop.permute.xlu0 %943
        %945 = vrot.lane.b32.xlu0 %v898, 101
        %v946 = vpop.permute.xlu0 %945
        %vm947 = vcmask 826368
        %v948 = vsel %vm947, %v940, %v942
        %v949 = vsel %vm947, %v942, %v944
        %v950 = vsel %vm947, %v944, %v946
        %954 = vst [vmem:[#allocation2 + $0xd8] sm:$0x3] %v948
        %955 = vst [vmem:[#allocation2 + $0xe0] sm:$0x3] %v949
        %956 = vst [vmem:[#allocation2 + $0xe8] sm:$0x3] %v950
        %v957 = vrot.slane %v895, 6
        %v958 = vrot.slane %v896, 6
        %v959 = vrot.slane %v897, 6
        %v960 = vrot.slane %v898, 6
        %961 = vrot.lane.b32.xlu0 %v957, 100
        %v962 = vpop.permute.xlu0 %961
        %963 = vrot.lane.b32.xlu0 %v958, 100
        %v964 = vpop.permute.xlu0 %963
        %965 = vrot.lane.b32.xlu0 %v959, 100
        %v966 = vpop.permute.xlu0 %965
        %967 = vrot.lane.b32.xlu0 %v960, 100
        %v968 = vpop.permute.xlu0 %967
        %vm969 = vcmask 818176
        %v970 = vsel %vm969, %v962, %v964
        %v971 = vsel %vm969, %v964, %v966
        %v972 = vsel %vm969, %v966, %v968
        %976 = vst [vmem:[#allocation2 + $0xd8] sm:$0xc] %v970
        %977 = vst [vmem:[#allocation2 + $0xe0] sm:$0xc] %v971
        %978 = vst [vmem:[#allocation2 + $0xe8] sm:$0xc] %v972
        %979 = vrot.lane.b32.xlu0 %v895, 99
        %v980 = vpop.permute.xlu0 %979
        %981 = vrot.lane.b32.xlu0 %v896, 99
        %v982 = vpop.permute.xlu0 %981
        %983 = vrot.lane.b32.xlu0 %v897, 99
        %v984 = vpop.permute.xlu0 %983
        %985 = vrot.lane.b32.xlu0 %v898, 99
        %v986 = vpop.permute.xlu0 %985
        %vm987 = vcmask 809984
        %v988 = vsel %vm987, %v980, %v982
        %v989 = vsel %vm987, %v982, %v984
        %v990 = vsel %vm987, %v984, %v986
        %994 = vst [vmem:[#allocation2 + $0xd8] sm:$0x30] %v988
        %995 = vst [vmem:[#allocation2 + $0xe0] sm:$0x30] %v989
        %996 = vst [vmem:[#allocation2 + $0xe8] sm:$0x30] %v990
        %997 = vrot.lane.b32.xlu0 %v917, 98
        %v998 = vpop.permute.xlu0 %997
        %999 = vrot.lane.b32.xlu0 %v918, 98
        %v1000 = vpop.permute.xlu0 %999
        %1001 = vrot.lane.b32.xlu0 %v919, 98
        %v1002 = vpop.permute.xlu0 %1001
        %1003 = vrot.lane.b32.xlu0 %v920, 98
        %v1004 = vpop.permute.xlu0 %1003
        %vm1005 = vcmask 801792
        %v1006 = vsel %vm1005, %v998, %v1000
        %v1007 = vsel %vm1005, %v1000, %v1002
        %v1008 = vsel %vm1005, %v1002, %v1004
        %1012 = vst [vmem:[#allocation2 + $0xd8] sm:$0xc0] %v1006
        %1013 = vst [vmem:[#allocation2 + $0xe0] sm:$0xc0] %v1007
        %1014 = vst [vmem:[#allocation2 + $0xe8] sm:$0xc0] %v1008
        %1015 = vrot.lane.b32.xlu0 %v895, 97
        %v1016 = vpop.permute.xlu0 %1015
        %1017 = vrot.lane.b32.xlu0 %v896, 97
        %v1018 = vpop.permute.xlu0 %1017
        %1019 = vrot.lane.b32.xlu0 %v897, 97
        %v1020 = vpop.permute.xlu0 %1019
        %1021 = vrot.lane.b32.xlu0 %v898, 97
        %v1022 = vpop.permute.xlu0 %1021
        %vm1023 = vcmask 793600
        %v1024 = vsel %vm1023, %v1016, %v1018
        %v1025 = vsel %vm1023, %v1018, %v1020
        %v1026 = vsel %vm1023, %v1020, %v1022
        %1030 = vst [vmem:[#allocation2 + $0xf0] sm:$0x3] %v1024
        %1031 = vst [vmem:[#allocation2 + $0xf8] sm:$0x3] %v1025
        %1032 = vst [vmem:[#allocation2 + $0x100] sm:$0x3] %v1026
        %1033 = vrot.lane.b32.xlu0 %v957, 79
        %v1034 = vpop.permute.xlu0 %1033
        %1035 = vrot.lane.b32.xlu0 %v958, 79
        %v1036 = vpop.permute.xlu0 %1035
        %1037 = vrot.lane.b32.xlu0 %v959, 79
        %v1038 = vpop.permute.xlu0 %1037
        %1039 = vrot.lane.b32.xlu0 %v960, 79
        %v1040 = vpop.permute.xlu0 %1039
        %vm1041 = vcmask 646144
        %v1042 = vsel %vm1041, %v1034, %v1036
        %v1043 = vsel %vm1041, %v1036, %v1038
        %v1044 = vsel %vm1041, %v1038, %v1040
        %1048 = vst [vmem:[#allocation2 + $0xf0] sm:$0xc] %v1042
        %1049 = vst [vmem:[#allocation2 + $0xf8] sm:$0xc] %v1043
        %1050 = vst [vmem:[#allocation2 + $0x100] sm:$0xc] %v1044
        %1051 = vrot.lane.b32.xlu0 %v895, 78
        %v1052 = vpop.permute.xlu0 %1051
        %1053 = vrot.lane.b32.xlu0 %v896, 78
        %v1054 = vpop.permute.xlu0 %1053
        %1055 = vrot.lane.b32.xlu0 %v897, 78
        %v1056 = vpop.permute.xlu0 %1055
        %1057 = vrot.lane.b32.xlu0 %v898, 78
        %v1058 = vpop.permute.xlu0 %1057
        %v1059 = vsel %vm549, %v1052, %v1054
        %v1060 = vsel %vm549, %v1054, %v1056
        %v1061 = vsel %vm549, %v1056, %v1058
        %1065 = vst [vmem:[#allocation2 + $0xf0] sm:$0x30] %v1059
        %1066 = vst [vmem:[#allocation2 + $0xf8] sm:$0x30] %v1060
        %1067 = vst [vmem:[#allocation2 + $0x100] sm:$0x30] %v1061
        %1068 = vrot.lane.b32.xlu0 %v917, 77
        %v1069 = vpop.permute.xlu0 %1068
        %1070 = vrot.lane.b32.xlu0 %v918, 77
        %v1071 = vpop.permute.xlu0 %1070
        %1072 = vrot.lane.b32.xlu0 %v919, 77
        %v1073 = vpop.permute.xlu0 %1072
        %1074 = vrot.lane.b32.xlu0 %v920, 77
        %v1075 = vpop.permute.xlu0 %1074
        %v1076 = vsel %vm567, %v1069, %v1071
        %v1077 = vsel %vm567, %v1071, %v1073
        %v1078 = vsel %vm567, %v1073, %v1075
        %1082 = vst [vmem:[#allocation2 + $0xf0] sm:$0xc0] %v1076
        %1083 = vst [vmem:[#allocation2 + $0xf8] sm:$0xc0] %v1077
        %1084 = vst [vmem:[#allocation2 + $0x100] sm:$0xc0] %v1078
        %1085 = vrot.lane.b32.xlu0 %v895, 76
        %v1086 = vpop.permute.xlu0 %1085
        %1087 = vrot.lane.b32.xlu0 %v896, 76
        %v1088 = vpop.permute.xlu0 %1087
        %1089 = vrot.lane.b32.xlu0 %v897, 76
        %v1090 = vpop.permute.xlu0 %1089
        %1091 = vrot.lane.b32.xlu0 %v898, 76
        %v1092 = vpop.permute.xlu0 %1091
        %v1093 = vsel %vm585, %v1086, %v1088
        %v1094 = vsel %vm585, %v1088, %v1090
        %v1095 = vsel %vm585, %v1090, %v1092
        %1099 = vst [vmem:[#allocation2 + $0x108] sm:$0x3] %v1093
        %1100 = vst [vmem:[#allocation2 + $0x110] sm:$0x3] %v1094
        %1101 = vst [vmem:[#allocation2 + $0x118] sm:$0x3] %v1095
        %1102 = vrot.lane.b32.xlu0 %v957, 75
        %v1103 = vpop.permute.xlu0 %1102
        %1104 = vrot.lane.b32.xlu0 %v958, 75
        %v1105 = vpop.permute.xlu0 %1104
        %1106 = vrot.lane.b32.xlu0 %v959, 75
        %v1107 = vpop.permute.xlu0 %1106
        %1108 = vrot.lane.b32.xlu0 %v960, 75
        %v1109 = vpop.permute.xlu0 %1108
        %v1110 = vsel %vm603, %v1103, %v1105
        %v1111 = vsel %vm603, %v1105, %v1107
        %v1112 = vsel %vm603, %v1107, %v1109
        %1116 = vst [vmem:[#allocation2 + $0x108] sm:$0xc] %v1110
        %1117 = vst [vmem:[#allocation2 + $0x110] sm:$0xc] %v1111
        %1118 = vst [vmem:[#allocation2 + $0x118] sm:$0xc] %v1112
        %1119 = vrot.lane.b32.xlu0 %v895, 74
        %v1120 = vpop.permute.xlu0 %1119
        %1121 = vrot.lane.b32.xlu0 %v896, 74
        %v1122 = vpop.permute.xlu0 %1121
        %1123 = vrot.lane.b32.xlu0 %v897, 74
        %v1124 = vpop.permute.xlu0 %1123
        %1125 = vrot.lane.b32.xlu0 %v898, 74
        %v1126 = vpop.permute.xlu0 %1125
        %v1127 = vsel %vm621, %v1120, %v1122
        %v1128 = vsel %vm621, %v1122, %v1124
        %v1129 = vsel %vm621, %v1124, %v1126
        %1133 = vst [vmem:[#allocation2 + $0x108] sm:$0x30] %v1127
        %1134 = vst [vmem:[#allocation2 + $0x110] sm:$0x30] %v1128
        %1135 = vst [vmem:[#allocation2 + $0x118] sm:$0x30] %v1129
        %1136 = vrot.lane.b32.xlu0 %v917, 73
        %v1137 = vpop.permute.xlu0 %1136
        %1138 = vrot.lane.b32.xlu0 %v918, 73
        %v1139 = vpop.permute.xlu0 %1138
        %1140 = vrot.lane.b32.xlu0 %v919, 73
        %v1141 = vpop.permute.xlu0 %1140
        %1142 = vrot.lane.b32.xlu0 %v920, 73
        %v1143 = vpop.permute.xlu0 %1142
        %vm1144 = vcmask 596992
        %v1145 = vsel %vm1144, %v1137, %v1139
        %v1146 = vsel %vm1144, %v1139, %v1141
        %v1147 = vsel %vm1144, %v1141, %v1143
        %1151 = vst [vmem:[#allocation2 + $0x108] sm:$0xc0] %v1145
        %1152 = vst [vmem:[#allocation2 + $0x110] sm:$0xc0] %v1146
        %1153 = vst [vmem:[#allocation2 + $0x118] sm:$0xc0] %v1147
        %1154 = vrot.lane.b32.xlu0 %v895, 55
        %v1155 = vpop.permute.xlu0 %1154
        %1156 = vrot.lane.b32.xlu0 %v896, 55
        %v1157 = vpop.permute.xlu0 %1156
        %1158 = vrot.lane.b32.xlu0 %v897, 55
        %v1159 = vpop.permute.xlu0 %1158
        %1160 = vrot.lane.b32.xlu0 %v898, 55
        %v1161 = vpop.permute.xlu0 %1160
        %vm1162 = vcmask 449536
        %v1163 = vsel %vm1162, %v1155, %v1157
        %v1164 = vsel %vm1162, %v1157, %v1159
        %v1165 = vsel %vm1162, %v1159, %v1161
        %1169 = vst [vmem:[#allocation2 + $0x120] sm:$0x3] %v1163
        %1170 = vst [vmem:[#allocation2 + $0x128] sm:$0x3] %v1164
        %1171 = vst [vmem:[#allocation2 + $0x130] sm:$0x3] %v1165
        %1172 = vrot.lane.b32.xlu0 %v957, 54
        %v1173 = vpop.permute.xlu0 %1172
        %1174 = vrot.lane.b32.xlu0 %v958, 54
        %v1175 = vpop.permute.xlu0 %1174
        %1176 = vrot.lane.b32.xlu0 %v959, 54
        %v1177 = vpop.permute.xlu0 %1176
        %1178 = vrot.lane.b32.xlu0 %v960, 54
        %v1179 = vpop.permute.xlu0 %1178
        %v1180 = vsel %vm639, %v1173, %v1175
        %v1181 = vsel %vm639, %v1175, %v1177
        %v1182 = vsel %vm639, %v1177, %v1179
        %1186 = vst [vmem:[#allocation2 + $0x120] sm:$0xc] %v1180
        %1187 = vst [vmem:[#allocation2 + $0x128] sm:$0xc] %v1181
        %1188 = vst [vmem:[#allocation2 + $0x130] sm:$0xc] %v1182
        %1189 = vrot.lane.b32.xlu0 %v895, 53
        %v1190 = vpop.permute.xlu0 %1189
        %1191 = vrot.lane.b32.xlu0 %v896, 53
        %v1192 = vpop.permute.xlu0 %1191
        %1193 = vrot.lane.b32.xlu0 %v897, 53
        %v1194 = vpop.permute.xlu0 %1193
        %1195 = vrot.lane.b32.xlu0 %v898, 53
        %v1196 = vpop.permute.xlu0 %1195
        %v1197 = vsel %vm379, %v1190, %v1192
        %v1198 = vsel %vm379, %v1192, %v1194
        %v1199 = vsel %vm379, %v1194, %v1196
        %1203 = vst [vmem:[#allocation2 + $0x120] sm:$0x30] %v1197
        %1204 = vst [vmem:[#allocation2 + $0x128] sm:$0x30] %v1198
        %1205 = vst [vmem:[#allocation2 + $0x130] sm:$0x30] %v1199
        %1206 = vrot.lane.b32.xlu0 %v917, 52
        %v1207 = vpop.permute.xlu0 %1206
        %1208 = vrot.lane.b32.xlu0 %v918, 52
        %v1209 = vpop.permute.xlu0 %1208
        %1210 = vrot.lane.b32.xlu0 %v919, 52
        %v1211 = vpop.permute.xlu0 %1210
        %1212 = vrot.lane.b32.xlu0 %v920, 52
        %v1213 = vpop.permute.xlu0 %1212
        %v1214 = vsel %vm401, %v1207, %v1209
        %v1215 = vsel %vm401, %v1209, %v1211
        %v1216 = vsel %vm401, %v1211, %v1213
        %1220 = vst [vmem:[#allocation2 + $0x120] sm:$0xc0] %v1214
        %1221 = vst [vmem:[#allocation2 + $0x128] sm:$0xc0] %v1215
        %1222 = vst [vmem:[#allocation2 + $0x130] sm:$0xc0] %v1216
        %1223 = vrot.lane.b32.xlu0 %v895, 51
        %v1224 = vpop.permute.xlu0 %1223
        %1225 = vrot.lane.b32.xlu0 %v896, 51
        %v1226 = vpop.permute.xlu0 %1225
        %1227 = vrot.lane.b32.xlu0 %v897, 51
        %v1228 = vpop.permute.xlu0 %1227
        %1229 = vrot.lane.b32.xlu0 %v898, 51
        %v1230 = vpop.permute.xlu0 %1229
        %v1231 = vsel %vm419, %v1224, %v1226
        %v1232 = vsel %vm419, %v1226, %v1228
        %v1233 = vsel %vm419, %v1228, %v1230
        %1237 = vst [vmem:[#allocation2 + $0x138] sm:$0x3] %v1231
        %1238 = vst [vmem:[#allocation2 + $0x140] sm:$0x3] %v1232
        %1239 = vst [vmem:[#allocation2 + $0x148] sm:$0x3] %v1233
        %1240 = vrot.lane.b32.xlu0 %v957, 50
        %v1241 = vpop.permute.xlu0 %1240
        %1242 = vrot.lane.b32.xlu0 %v958, 50
        %v1243 = vpop.permute.xlu0 %1242
        %1244 = vrot.lane.b32.xlu0 %v959, 50
        %v1245 = vpop.permute.xlu0 %1244
        %1246 = vrot.lane.b32.xlu0 %v960, 50
        %v1247 = vpop.permute.xlu0 %1246
        %v1248 = vsel %vm680, %v1241, %v1243
        %v1249 = vsel %vm680, %v1243, %v1245
        %v1250 = vsel %vm680, %v1245, %v1247
        %1254 = vst [vmem:[#allocation2 + $0x138] sm:$0xc] %v1248
        %1255 = vst [vmem:[#allocation2 + $0x140] sm:$0xc] %v1249
        %1256 = vst [vmem:[#allocation2 + $0x148] sm:$0xc] %v1250
        %1257 = vrot.lane.b32.xlu0 %v895, 49
        %v1258 = vpop.permute.xlu0 %1257
        %1259 = vrot.lane.b32.xlu0 %v896, 49
        %v1260 = vpop.permute.xlu0 %1259
        %1261 = vrot.lane.b32.xlu0 %v897, 49
        %v1262 = vpop.permute.xlu0 %1261
        %1263 = vrot.lane.b32.xlu0 %v898, 49
        %v1264 = vpop.permute.xlu0 %1263
        %vm1265 = vcmask 400384
        %v1266 = vsel %vm1265, %v1258, %v1260
        %v1267 = vsel %vm1265, %v1260, %v1262
        %v1268 = vsel %vm1265, %v1262, %v1264
        %1272 = vst [vmem:[#allocation2 + $0x138] sm:$0x30] %v1266
        %1273 = vst [vmem:[#allocation2 + $0x140] sm:$0x30] %v1267
        %1274 = vst [vmem:[#allocation2 + $0x148] sm:$0x30] %v1268
        %1275 = vrot.lane.b32.xlu0 %v917, 31
        %v1276 = vpop.permute.xlu0 %1275
        %1277 = vrot.lane.b32.xlu0 %v918, 31
        %v1278 = vpop.permute.xlu0 %1277
        %1279 = vrot.lane.b32.xlu0 %v919, 31
        %v1280 = vpop.permute.xlu0 %1279
        %1281 = vrot.lane.b32.xlu0 %v920, 31
        %v1282 = vpop.permute.xlu0 %1281
        %vm1283 = vcmask 252928
        %v1284 = vsel %vm1283, %v1276, %v1278
        %v1285 = vsel %vm1283, %v1278, %v1280
        %v1286 = vsel %vm1283, %v1280, %v1282
        %1290 = vst [vmem:[#allocation2 + $0x138] sm:$0xc0] %v1284
        %1291 = vst [vmem:[#allocation2 + $0x140] sm:$0xc0] %v1285
        %1292 = vst [vmem:[#allocation2 + $0x148] sm:$0xc0] %v1286
        %1293 = vrot.lane.b32.xlu0 %v895, 30
        %v1294 = vpop.permute.xlu0 %1293
        %1295 = vrot.lane.b32.xlu0 %v896, 30
        %v1296 = vpop.permute.xlu0 %1295
        %1297 = vrot.lane.b32.xlu0 %v897, 30
        %v1298 = vpop.permute.xlu0 %1297
        %1299 = vrot.lane.b32.xlu0 %v898, 30
        %v1300 = vpop.permute.xlu0 %1299
        %v1301 = vsel %vm698, %v1294, %v1296
        %v1302 = vsel %vm698, %v1296, %v1298
        %v1303 = vsel %vm698, %v1298, %v1300
        %1307 = vst [vmem:[#allocation2 + $0x150] sm:$0x3] %v1301
        %1308 = vst [vmem:[#allocation2 + $0x158] sm:$0x3] %v1302
        %1309 = vst [vmem:[#allocation2 + $0x160] sm:$0x3] %v1303
        %1310 = vrot.lane.b32.xlu0 %v957, 29
        %v1311 = vpop.permute.xlu0 %1310
        %1312 = vrot.lane.b32.xlu0 %v958, 29
        %v1313 = vpop.permute.xlu0 %1312
        %1314 = vrot.lane.b32.xlu0 %v959, 29
        %v1315 = vpop.permute.xlu0 %1314
        %1316 = vrot.lane.b32.xlu0 %v960, 29
        %v1317 = vpop.permute.xlu0 %1316
        %v1318 = vsel %vm441, %v1311, %v1313
        %v1319 = vsel %vm441, %v1313, %v1315
        %v1320 = vsel %vm441, %v1315, %v1317
        %1324 = vst [vmem:[#allocation2 + $0x150] sm:$0xc] %v1318
        %1325 = vst [vmem:[#allocation2 + $0x158] sm:$0xc] %v1319
        %1326 = vst [vmem:[#allocation2 + $0x160] sm:$0xc] %v1320
        %1327 = vrot.lane.b32.xlu0 %v895, 28
        %v1328 = vpop.permute.xlu0 %1327
        %1329 = vrot.lane.b32.xlu0 %v896, 28
        %v1330 = vpop.permute.xlu0 %1329
        %1331 = vrot.lane.b32.xlu0 %v897, 28
        %v1332 = vpop.permute.xlu0 %1331
        %1333 = vrot.lane.b32.xlu0 %v898, 28
        %v1334 = vpop.permute.xlu0 %1333
        %v1335 = vsel %vm459, %v1328, %v1330
        %v1336 = vsel %vm459, %v1330, %v1332
        %v1337 = vsel %vm459, %v1332, %v1334
        %1341 = vst [vmem:[#allocation2 + $0x150] sm:$0x30] %v1335
        %1342 = vst [vmem:[#allocation2 + $0x158] sm:$0x30] %v1336
        %1343 = vst [vmem:[#allocation2 + $0x160] sm:$0x30] %v1337
        %1344 = vrot.lane.b32.xlu0 %v917, 27
        %v1345 = vpop.permute.xlu0 %1344
        %1346 = vrot.lane.b32.xlu0 %v918, 27
        %v1347 = vpop.permute.xlu0 %1346
        %1348 = vrot.lane.b32.xlu0 %v919, 27
        %v1349 = vpop.permute.xlu0 %1348
        %1350 = vrot.lane.b32.xlu0 %v920, 27
        %v1351 = vpop.permute.xlu0 %1350
        %v1352 = vsel %vm477, %v1345, %v1347
        %v1353 = vsel %vm477, %v1347, %v1349
        %v1354 = vsel %vm477, %v1349, %v1351
        %1358 = vst [vmem:[#allocation2 + $0x150] sm:$0xc0] %v1352
        %1359 = vst [vmem:[#allocation2 + $0x158] sm:$0xc0] %v1353
        %1360 = vst [vmem:[#allocation2 + $0x160] sm:$0xc0] %v1354
        %1361 = vrot.lane.b32.xlu0 %v895, 26
        %v1362 = vpop.permute.xlu0 %1361
        %1363 = vrot.lane.b32.xlu0 %v896, 26
        %v1364 = vpop.permute.xlu0 %1363
        %1365 = vrot.lane.b32.xlu0 %v897, 26
        %v1366 = vpop.permute.xlu0 %1365
        %1367 = vrot.lane.b32.xlu0 %v898, 26
        %v1368 = vpop.permute.xlu0 %1367
        %v1369 = vsel %vm725, %v1362, %v1364
        %v1370 = vsel %vm725, %v1364, %v1366
        %v1371 = vsel %vm725, %v1366, %v1368
        %1375 = vst [vmem:[#allocation2 + $0x168] sm:$0x3] %v1369
        %1376 = vst [vmem:[#allocation2 + $0x170] sm:$0x3] %v1370
        %1377 = vst [vmem:[#allocation2 + $0x178] sm:$0x3] %v1371
        %1378 = vrot.lane.b32.xlu0 %v957, 25
        %v1379 = vpop.permute.xlu0 %1378
        %1380 = vrot.lane.b32.xlu0 %v958, 25
        %v1381 = vpop.permute.xlu0 %1380
        %1382 = vrot.lane.b32.xlu0 %v959, 25
        %v1383 = vpop.permute.xlu0 %1382
        %1384 = vrot.lane.b32.xlu0 %v960, 25
        %v1385 = vpop.permute.xlu0 %1384
        %vm1386 = vcmask 203776
        %v1387 = vsel %vm1386, %v1379, %v1381
        %v1388 = vsel %vm1386, %v1381, %v1383
        %v1389 = vsel %vm1386, %v1383, %v1385
        %1393 = vst [vmem:[#allocation2 + $0x168] sm:$0xc] %v1387
        %1394 = vst [vmem:[#allocation2 + $0x170] sm:$0xc] %v1388
        %1395 = vst [vmem:[#allocation2 + $0x178] sm:$0xc] %v1389
        %1396 = vrot.lane.b32.xlu0 %v895, 7
        %v1397 = vpop.permute.xlu0 %1396
        %1398 = vrot.lane.b32.xlu0 %v896, 7
        %v1399 = vpop.permute.xlu0 %1398
        %1400 = vrot.lane.b32.xlu0 %v897, 7
        %v1401 = vpop.permute.xlu0 %1400
        %1402 = vrot.lane.b32.xlu0 %v898, 7
        %v1403 = vpop.permute.xlu0 %1402
        %vm1404 = vcmask 56320
        %v1405 = vsel %vm1404, %v1397, %v1399
        %v1406 = vsel %vm1404, %v1399, %v1401
        %v1407 = vsel %vm1404, %v1401, %v1403
        %1411 = vst [vmem:[#allocation2 + $0x168] sm:$0x30] %v1405
        %1412 = vst [vmem:[#allocation2 + $0x170] sm:$0x30] %v1406
        %1413 = vst [vmem:[#allocation2 + $0x178] sm:$0x30] %v1407
        %1414 = vrot.lane.b32.xlu0 %v917, 6
        %v1415 = vpop.permute.xlu0 %1414
        %1416 = vrot.lane.b32.xlu0 %v918, 6
        %v1417 = vpop.permute.xlu0 %1416
        %1418 = vrot.lane.b32.xlu0 %v919, 6
        %v1419 = vpop.permute.xlu0 %1418
        %1420 = vrot.lane.b32.xlu0 %v920, 6
        %v1421 = vpop.permute.xlu0 %1420
        %v1422 = vsel %vm743, %v1415, %v1417
        %v1423 = vsel %vm743, %v1417, %v1419
        %v1424 = vsel %vm743, %v1419, %v1421
        %1428 = vst [vmem:[#allocation2 + $0x168] sm:$0xc0] %v1422
        %1429 = vst [vmem:[#allocation2 + $0x170] sm:$0xc0] %v1423
        %1430 = vst [vmem:[#allocation2 + $0x178] sm:$0xc0] %v1424
        %1431 = vrot.lane.b32.xlu0 %v895, 5
        %v1432 = vpop.permute.xlu0 %1431
        %1433 = vrot.lane.b32.xlu0 %v896, 5
        %v1434 = vpop.permute.xlu0 %1433
        %1435 = vrot.lane.b32.xlu0 %v897, 5
        %v1436 = vpop.permute.xlu0 %1435
        %1437 = vrot.lane.b32.xlu0 %v898, 5
        %v1438 = vpop.permute.xlu0 %1437
        %v1439 = vsel %vm495, %v1432, %v1434
        %v1440 = vsel %vm495, %v1434, %v1436
        %v1441 = vsel %vm495, %v1436, %v1438
        %1445 = vst [vmem:[#allocation2 + $0x180] sm:$0x3] %v1439
        %1446 = vst [vmem:[#allocation2 + $0x188] sm:$0x3] %v1440
        %1447 = vst [vmem:[#allocation2 + $0x190] sm:$0x3] %v1441
        %1448 = vrot.lane.b32.xlu0 %v957, 4
        %v1449 = vpop.permute.xlu0 %1448
        %1450 = vrot.lane.b32.xlu0 %v958, 4
        %v1451 = vpop.permute.xlu0 %1450
        %1452 = vrot.lane.b32.xlu0 %v959, 4
        %v1453 = vpop.permute.xlu0 %1452
        %1454 = vrot.lane.b32.xlu0 %v960, 4
        %v1455 = vpop.permute.xlu0 %1454
        %v1456 = vsel %vm513, %v1449, %v1451
        %v1457 = vsel %vm513, %v1451, %v1453
        %v1458 = vsel %vm513, %v1453, %v1455
        %1462 = vst [vmem:[#allocation2 + $0x180] sm:$0xc] %v1456
        %1463 = vst [vmem:[#allocation2 + $0x188] sm:$0xc] %v1457
        %1464 = vst [vmem:[#allocation2 + $0x190] sm:$0xc] %v1458
        %1465 = vrot.lane.b32.xlu0 %v895, 3
        %v1466 = vpop.permute.xlu0 %1465
        %1467 = vrot.lane.b32.xlu0 %v896, 3
        %v1468 = vpop.permute.xlu0 %1467
        %1469 = vrot.lane.b32.xlu0 %v897, 3
        %v1470 = vpop.permute.xlu0 %1469
        %1471 = vrot.lane.b32.xlu0 %v898, 3
        %v1472 = vpop.permute.xlu0 %1471
        %v1473 = vsel %vm531, %v1466, %v1468
        %v1474 = vsel %vm531, %v1468, %v1470
        %v1475 = vsel %vm531, %v1470, %v1472
        %1479 = vst [vmem:[#allocation2 + $0x180] sm:$0x30] %v1473
        %1480 = vst [vmem:[#allocation2 + $0x188] sm:$0x30] %v1474
        %1481 = vst [vmem:[#allocation2 + $0x190] sm:$0x30] %v1475
        %1482 = vrot.lane.b32.xlu0 %v917, 2
        %v1483 = vpop.permute.xlu0 %1482
        %1484 = vrot.lane.b32.xlu0 %v918, 2
        %v1485 = vpop.permute.xlu0 %1484
        %1486 = vrot.lane.b32.xlu0 %v919, 2
        %v1487 = vpop.permute.xlu0 %1486
        %1488 = vrot.lane.b32.xlu0 %v920, 2
        %v1489 = vpop.permute.xlu0 %1488
        %v1490 = vsel %vm784, %v1483, %v1485
        %v1491 = vsel %vm784, %v1485, %v1487
        %v1492 = vsel %vm784, %v1487, %v1489
        %1496 = vst [vmem:[#allocation2 + $0x180] sm:$0xc0] %v1490
        %1497 = vst [vmem:[#allocation2 + $0x188] sm:$0xc0] %v1491
        %1498 = vst [vmem:[#allocation2 + $0x190] sm:$0xc0] %v1492
        %1499 = vrot.lane.b32.xlu0 %v895, 1
        %v1500 = vpop.permute.xlu0 %1499
        %1501 = vrot.lane.b32.xlu0 %v896, 1
        %v1502 = vpop.permute.xlu0 %1501
        %1503 = vrot.lane.b32.xlu0 %v897, 1
        %v1504 = vpop.permute.xlu0 %1503
        %1505 = vrot.lane.b32.xlu0 %v898, 1
        %v1506 = vpop.permute.xlu0 %1505
        %vm1507 = vcmask 7168
        %v1508 = vsel %vm1507, %v1500, %v1502
        %v1509 = vsel %vm1507, %v1502, %v1504
        %v1510 = vsel %vm1507, %v1504, %v1506
        %1514 = vst [vmem:[#allocation2 + $0x198] sm:$0x3] %v1508
        %1515 = vst [vmem:[#allocation2 + $0x1a0] sm:$0x3] %v1509
        %1516 = vst [vmem:[#allocation2 + $0x1a8] sm:$0x3] %v1510
        %v1518 = vunpack.c.l.b16 %v357
        %v1519 = vpack.c.b16 %v1518, %v1518
        %v1520 = vrot.slane %v1519, 6
        %1521 = vrot.lane.b32.xlu0 %v958, 111
        %v1522 = vpop.permute.xlu0 %1521
        %1523 = vrot.lane.b32.xlu0 %v959, 111
        %v1524 = vpop.permute.xlu0 %1523
        %1525 = vrot.lane.b32.xlu0 %v960, 111
        %v1526 = vpop.permute.xlu0 %1525
        %1527 = vrot.lane.b32.xlu0 %v1520, 111
        %v1528 = vpop.permute.xlu0 %1527
        %vm1529 = vcmask 908288
        %v1530 = vsel %vm1529, %v1522, %v1524
        %v1531 = vsel %vm1529, %v1524, %v1526
        %v1532 = vsel %vm1529, %v1526, %v1528
        %1536 = vst [vmem:[#allocation2 + $0x198] sm:$0xc] %v1530
        %1537 = vst [vmem:[#allocation2 + $0x1a0] sm:$0xc] %v1531
        %1538 = vst [vmem:[#allocation2 + $0x1a8] sm:$0xc] %v1532
        %1539 = vrot.lane.b32.xlu0 %v896, 110
        %v1540 = vpop.permute.xlu0 %1539
        %1541 = vrot.lane.b32.xlu0 %v897, 110
        %v1542 = vpop.permute.xlu0 %1541
        %1543 = vrot.lane.b32.xlu0 %v898, 110
        %v1544 = vpop.permute.xlu0 %1543
        %1545 = vrot.lane.b32.xlu0 %v1519, 110
        %v1546 = vpop.permute.xlu0 %1545
        %v1547 = vsel %vm805, %v1540, %v1542
        %v1548 = vsel %vm805, %v1542, %v1544
        %v1549 = vsel %vm805, %v1544, %v1546
        %1553 = vst [vmem:[#allocation2 + $0x198] sm:$0x30] %v1547
        %1554 = vst [vmem:[#allocation2 + $0x1a0] sm:$0x30] %v1548
        %1555 = vst [vmem:[#allocation2 + $0x1a8] sm:$0x30] %v1549
        %v1556 = vrot.slane %v1519, 2
        %1557 = vrot.lane.b32.xlu0 %v918, 109
        %v1558 = vpop.permute.xlu0 %1557
        %1559 = vrot.lane.b32.xlu0 %v919, 109
        %v1560 = vpop.permute.xlu0 %1559
        %1561 = vrot.lane.b32.xlu0 %v920, 109
        %v1562 = vpop.permute.xlu0 %1561
        %1563 = vrot.lane.b32.xlu0 %v1556, 109
        %v1564 = vpop.permute.xlu0 %1563
        %v1565 = vsel %vm824, %v1558, %v1560
        %v1566 = vsel %vm824, %v1560, %v1562
        %v1567 = vsel %vm824, %v1562, %v1564
        %1571 = vst [vmem:[#allocation2 + $0x198] sm:$0xc0] %v1565
        %1572 = vst [vmem:[#allocation2 + $0x1a0] sm:$0xc0] %v1566
        %1573 = vst [vmem:[#allocation2 + $0x1a8] sm:$0xc0] %v1567
        %1574 = vrot.lane.b32.xlu0 %v896, 108
        %v1575 = vpop.permute.xlu0 %1574
        %1576 = vrot.lane.b32.xlu0 %v897, 108
        %v1577 = vpop.permute.xlu0 %1576
        %1578 = vrot.lane.b32.xlu0 %v898, 108
        %v1579 = vpop.permute.xlu0 %1578
        %1580 = vrot.lane.b32.xlu0 %v1519, 108
        %v1581 = vpop.permute.xlu0 %1580
        %v1582 = vsel %vm842, %v1575, %v1577
        %v1583 = vsel %vm842, %v1577, %v1579
        %v1584 = vsel %vm842, %v1579, %v1581
        %1588 = vst [vmem:[#allocation2 + $0x1b0] sm:$0x3] %v1582
        %1589 = vst [vmem:[#allocation2 + $0x1b8] sm:$0x3] %v1583
        %1590 = vst [vmem:[#allocation2 + $0x1c0] sm:$0x3] %v1584
        %1591 = vrot.lane.b32.xlu0 %v958, 107
        %v1592 = vpop.permute.xlu0 %1591
        %1593 = vrot.lane.b32.xlu0 %v959, 107
        %v1594 = vpop.permute.xlu0 %1593
        %1595 = vrot.lane.b32.xlu0 %v960, 107
        %v1596 = vpop.permute.xlu0 %1595
        %1597 = vrot.lane.b32.xlu0 %v1520, 107
        %v1598 = vpop.permute.xlu0 %1597
        %v1599 = vsel %vm861, %v1592, %v1594
        %v1600 = vsel %vm861, %v1594, %v1596
        %v1601 = vsel %vm861, %v1596, %v1598
        %1605 = vst [vmem:[#allocation2 + $0x1b0] sm:$0xc] %v1599
        %1606 = vst [vmem:[#allocation2 + $0x1b8] sm:$0xc] %v1600
        %1607 = vst [vmem:[#allocation2 + $0x1c0] sm:$0xc] %v1601
        %1608 = vrot.lane.b32.xlu0 %v896, 106
        %v1609 = vpop.permute.xlu0 %1608
        %1610 = vrot.lane.b32.xlu0 %v897, 106
        %v1611 = vpop.permute.xlu0 %1610
        %1612 = vrot.lane.b32.xlu0 %v898, 106
        %v1613 = vpop.permute.xlu0 %1612
        %1614 = vrot.lane.b32.xlu0 %v1519, 106
        %v1615 = vpop.permute.xlu0 %1614
        %v1616 = vsel %vm879, %v1609, %v1611
        %v1617 = vsel %vm879, %v1611, %v1613
        %v1618 = vsel %vm879, %v1613, %v1615
        %1622 = vst [vmem:[#allocation2 + $0x1b0] sm:$0x30] %v1616
        %1623 = vst [vmem:[#allocation2 + $0x1b8] sm:$0x30] %v1617
        %1624 = vst [vmem:[#allocation2 + $0x1c0] sm:$0x30] %v1618
        %1625 = vrot.lane.b32.xlu0 %v918, 105
        %v1626 = vpop.permute.xlu0 %1625
        %1627 = vrot.lane.b32.xlu0 %v919, 105
        %v1628 = vpop.permute.xlu0 %1627
        %1629 = vrot.lane.b32.xlu0 %v920, 105
        %v1630 = vpop.permute.xlu0 %1629
        %1631 = vrot.lane.b32.xlu0 %v1556, 105
        %v1632 = vpop.permute.xlu0 %1631
        %vm1633 = vcmask 859136
        %v1634 = vsel %vm1633, %v1626, %v1628
        %v1635 = vsel %vm1633, %v1628, %v1630
        %v1636 = vsel %vm1633, %v1630, %v1632
        %1640 = vst [vmem:[#allocation2 + $0x1b0] sm:$0xc0] %v1634
        %1641 = vst [vmem:[#allocation2 + $0x1b8] sm:$0xc0] %v1635
        %1642 = vst [vmem:[#allocation2 + $0x1c0] sm:$0xc0] %v1636
        %1643 = vrot.lane.b32.xlu0 %v896, 87
        %v1644 = vpop.permute.xlu0 %1643
        %1645 = vrot.lane.b32.xlu0 %v897, 87
        %v1646 = vpop.permute.xlu0 %1645
        %1647 = vrot.lane.b32.xlu0 %v898, 87
        %v1648 = vpop.permute.xlu0 %1647
        %1649 = vrot.lane.b32.xlu0 %v1519, 87
        %v1650 = vpop.permute.xlu0 %1649
        %vm1651 = vcmask 711680
        %v1652 = vsel %vm1651, %v1644, %v1646
        %v1653 = vsel %vm1651, %v1646, %v1648
        %v1654 = vsel %vm1651, %v1648, %v1650
        %1658 = vst [vmem:[#allocation2 + $0x1c8] sm:$0x3] %v1652
        %1659 = vst [vmem:[#allocation2 + $0x1d0] sm:$0x3] %v1653
        %1660 = vst [vmem:[#allocation2 + $0x1d8] sm:$0x3] %v1654
        %1661 = vrot.lane.b32.xlu0 %v958, 86
        %v1662 = vpop.permute.xlu0 %1661
        %1663 = vrot.lane.b32.xlu0 %v959, 86
        %v1664 = vpop.permute.xlu0 %1663
        %1665 = vrot.lane.b32.xlu0 %v960, 86
        %v1666 = vpop.permute.xlu0 %1665
        %1667 = vrot.lane.b32.xlu0 %v1520, 86
        %v1668 = vpop.permute.xlu0 %1667
        %vm1669 = vcmask 703488
        %v1670 = vsel %vm1669, %v1662, %v1664
        %v1671 = vsel %vm1669, %v1664, %v1666
        %v1672 = vsel %vm1669, %v1666, %v1668
        %1676 = vst [vmem:[#allocation2 + $0x1c8] sm:$0xc] %v1670
        %1677 = vst [vmem:[#allocation2 + $0x1d0] sm:$0xc] %v1671
        %1678 = vst [vmem:[#allocation2 + $0x1d8] sm:$0xc] %v1672
        %1679 = vrot.lane.b32.xlu0 %v896, 85
        %v1680 = vpop.permute.xlu0 %1679
        %1681 = vrot.lane.b32.xlu0 %v897, 85
        %v1682 = vpop.permute.xlu0 %1681
        %1683 = vrot.lane.b32.xlu0 %v898, 85
        %v1684 = vpop.permute.xlu0 %1683
        %1685 = vrot.lane.b32.xlu0 %v1519, 85
        %v1686 = vpop.permute.xlu0 %1685
        %vm1687 = vcmask 695296
        %v1688 = vsel %vm1687, %v1680, %v1682
        %v1689 = vsel %vm1687, %v1682, %v1684
        %v1690 = vsel %vm1687, %v1684, %v1686
        %1694 = vst [vmem:[#allocation2 + $0x1c8] sm:$0x30] %v1688
        %1695 = vst [vmem:[#allocation2 + $0x1d0] sm:$0x30] %v1689
        %1696 = vst [vmem:[#allocation2 + $0x1d8] sm:$0x30] %v1690
        %1697 = vrot.lane.b32.xlu0 %v918, 84
        %v1698 = vpop.permute.xlu0 %1697
        %1699 = vrot.lane.b32.xlu0 %v919, 84
        %v1700 = vpop.permute.xlu0 %1699
        %1701 = vrot.lane.b32.xlu0 %v920, 84
        %v1702 = vpop.permute.xlu0 %1701
        %1703 = vrot.lane.b32.xlu0 %v1556, 84
        %v1704 = vpop.permute.xlu0 %1703
        %vm1705 = vcmask 687104
        %v1706 = vsel %vm1705, %v1698, %v1700
        %v1707 = vsel %vm1705, %v1700, %v1702
        %v1708 = vsel %vm1705, %v1702, %v1704
        %1712 = vst [vmem:[#allocation2 + $0x1c8] sm:$0xc0] %v1706
        %1713 = vst [vmem:[#allocation2 + $0x1d0] sm:$0xc0] %v1707
        %1714 = vst [vmem:[#allocation2 + $0x1d8] sm:$0xc0] %v1708
        %1715 = vrot.lane.b32.xlu0 %v896, 83
        %v1716 = vpop.permute.xlu0 %1715
        %1717 = vrot.lane.b32.xlu0 %v897, 83
        %v1718 = vpop.permute.xlu0 %1717
        %1719 = vrot.lane.b32.xlu0 %v898, 83
        %v1720 = vpop.permute.xlu0 %1719
        %1721 = vrot.lane.b32.xlu0 %v1519, 83
        %v1722 = vpop.permute.xlu0 %1721
        %vm1723 = vcmask 678912
        %v1724 = vsel %vm1723, %v1716, %v1718
        %v1725 = vsel %vm1723, %v1718, %v1720
        %v1726 = vsel %vm1723, %v1720, %v1722
        %1730 = vst [vmem:[#allocation2 + $0x1e0] sm:$0x3] %v1724
        %1731 = vst [vmem:[#allocation2 + $0x1e8] sm:$0x3] %v1725
        %1732 = vst [vmem:[#allocation2 + $0x1f0] sm:$0x3] %v1726
        %1733 = vrot.lane.b32.xlu0 %v958, 82
        %v1734 = vpop.permute.xlu0 %1733
        %1735 = vrot.lane.b32.xlu0 %v959, 82
        %v1736 = vpop.permute.xlu0 %1735
        %1737 = vrot.lane.b32.xlu0 %v960, 82
        %v1738 = vpop.permute.xlu0 %1737
        %1739 = vrot.lane.b32.xlu0 %v1520, 82
        %v1740 = vpop.permute.xlu0 %1739
        %vm1741 = vcmask 670720
        %v1742 = vsel %vm1741, %v1734, %v1736
        %v1743 = vsel %vm1741, %v1736, %v1738
        %v1744 = vsel %vm1741, %v1738, %v1740
        %1748 = vst [vmem:[#allocation2 + $0x1e0] sm:$0xc] %v1742
        %1749 = vst [vmem:[#allocation2 + $0x1e8] sm:$0xc] %v1743
        %1750 = vst [vmem:[#allocation2 + $0x1f0] sm:$0xc] %v1744
        %1751 = vrot.lane.b32.xlu0 %v896, 81
        %v1752 = vpop.permute.xlu0 %1751
        %1753 = vrot.lane.b32.xlu0 %v897, 81
        %v1754 = vpop.permute.xlu0 %1753
        %1755 = vrot.lane.b32.xlu0 %v898, 81
        %v1756 = vpop.permute.xlu0 %1755
        %1757 = vrot.lane.b32.xlu0 %v1519, 81
        %v1758 = vpop.permute.xlu0 %1757
        %vm1759 = vcmask 662528
        %v1760 = vsel %vm1759, %v1752, %v1754
        %v1761 = vsel %vm1759, %v1754, %v1756
        %v1762 = vsel %vm1759, %v1756, %v1758
        %1766 = vst [vmem:[#allocation2 + $0x1e0] sm:$0x30] %v1760
        %1767 = vst [vmem:[#allocation2 + $0x1e8] sm:$0x30] %v1761
        %1768 = vst [vmem:[#allocation2 + $0x1f0] sm:$0x30] %v1762
        %1772 = vst [vmem:[#allocation2 + $0x1e0] sm:$0xc0] %v895
        %1773 = vst [vmem:[#allocation2 + $0x1e8] sm:$0xc0] %v896
        %1774 = vst [vmem:[#allocation2 + $0x1f0] sm:$0xc0] %v897
        %1775 = vrot.lane.b32.xlu0 %v917, 127
        %v1776 = vpop.permute.xlu0 %1775
        %1777 = vrot.lane.b32.xlu0 %v918, 127
        %v1778 = vpop.permute.xlu0 %1777
        %1779 = vrot.lane.b32.xlu0 %v919, 127
        %v1780 = vpop.permute.xlu0 %1779
        %1781 = vrot.lane.b32.xlu0 %v920, 127
        %v1782 = vpop.permute.xlu0 %1781
        %vm1783 = vcmask 1039360
        %v1784 = vsel %vm1783, %v1776, %v1778
        %v1785 = vsel %vm1783, %v1778, %v1780
        %v1786 = vsel %vm1783, %v1780, %v1782
        %1790 = vst [vmem:[#allocation2 + $0x1f8] sm:$0x3] %v1784
        %1791 = vst [vmem:[#allocation2 + $0x200] sm:$0x3] %v1785
        %1792 = vst [vmem:[#allocation2 + $0x208] sm:$0x3] %v1786
        %1793 = vrot.lane.b32.xlu0 %v895, 126
        %v1794 = vpop.permute.xlu0 %1793
        %1795 = vrot.lane.b32.xlu0 %v896, 126
        %v1796 = vpop.permute.xlu0 %1795
        %1797 = vrot.lane.b32.xlu0 %v897, 126
        %v1798 = vpop.permute.xlu0 %1797
        %1799 = vrot.lane.b32.xlu0 %v898, 126
        %v1800 = vpop.permute.xlu0 %1799
        %vm1801 = vcmask 1031168
        %v1802 = vsel %vm1801, %v1794, %v1796
        %v1803 = vsel %vm1801, %v1796, %v1798
        %v1804 = vsel %vm1801, %v1798, %v1800
        %1808 = vst [vmem:[#allocation2 + $0x1f8] sm:$0xc] %v1802
        %1809 = vst [vmem:[#allocation2 + $0x200] sm:$0xc] %v1803
        %1810 = vst [vmem:[#allocation2 + $0x208] sm:$0xc] %v1804
        %1811 = vrot.lane.b32.xlu0 %v957, 125
        %v1812 = vpop.permute.xlu0 %1811
        %1813 = vrot.lane.b32.xlu0 %v958, 125
        %v1814 = vpop.permute.xlu0 %1813
        %1815 = vrot.lane.b32.xlu0 %v959, 125
        %v1816 = vpop.permute.xlu0 %1815
        %1817 = vrot.lane.b32.xlu0 %v960, 125
        %v1818 = vpop.permute.xlu0 %1817
        %vm1819 = vcmask 1022976
        %v1820 = vsel %vm1819, %v1812, %v1814
        %v1821 = vsel %vm1819, %v1814, %v1816
        %v1822 = vsel %vm1819, %v1816, %v1818
        %1826 = vst [vmem:[#allocation2 + $0x1f8] sm:$0x30] %v1820
        %1827 = vst [vmem:[#allocation2 + $0x200] sm:$0x30] %v1821
        %1828 = vst [vmem:[#allocation2 + $0x208] sm:$0x30] %v1822
        %1829 = vrot.lane.b32.xlu0 %v895, 124
        %v1830 = vpop.permute.xlu0 %1829
        %1831 = vrot.lane.b32.xlu0 %v896, 124
        %v1832 = vpop.permute.xlu0 %1831
        %1833 = vrot.lane.b32.xlu0 %v897, 124
        %v1834 = vpop.permute.xlu0 %1833
        %1835 = vrot.lane.b32.xlu0 %v898, 124
        %v1836 = vpop.permute.xlu0 %1835
        %vm1837 = vcmask 1014784
        %v1838 = vsel %vm1837, %v1830, %v1832
        %v1839 = vsel %vm1837, %v1832, %v1834
        %v1840 = vsel %vm1837, %v1834, %v1836
        %1844 = vst [vmem:[#allocation2 + $0x1f8] sm:$0xc0] %v1838
        %1845 = vst [vmem:[#allocation2 + $0x200] sm:$0xc0] %v1839
        %1846 = vst [vmem:[#allocation2 + $0x208] sm:$0xc0] %v1840
        %1847 = vrot.lane.b32.xlu0 %v917, 123
        %v1848 = vpop.permute.xlu0 %1847
        %1849 = vrot.lane.b32.xlu0 %v918, 123
        %v1850 = vpop.permute.xlu0 %1849
        %1851 = vrot.lane.b32.xlu0 %v919, 123
        %v1852 = vpop.permute.xlu0 %1851
        %1853 = vrot.lane.b32.xlu0 %v920, 123
        %v1854 = vpop.permute.xlu0 %1853
        %vm1855 = vcmask 1006592
        %v1856 = vsel %vm1855, %v1848, %v1850
        %v1857 = vsel %vm1855, %v1850, %v1852
        %v1858 = vsel %vm1855, %v1852, %v1854
        %1862 = vst [vmem:[#allocation2 + $0x210] sm:$0x3] %v1856
        %1863 = vst [vmem:[#allocation2 + $0x218] sm:$0x3] %v1857
        %1864 = vst [vmem:[#allocation2 + $0x220] sm:$0x3] %v1858
        %1865 = vrot.lane.b32.xlu0 %v895, 122
        %v1866 = vpop.permute.xlu0 %1865
        %1867 = vrot.lane.b32.xlu0 %v896, 122
        %v1868 = vpop.permute.xlu0 %1867
        %1869 = vrot.lane.b32.xlu0 %v897, 122
        %v1870 = vpop.permute.xlu0 %1869
        %1871 = vrot.lane.b32.xlu0 %v898, 122
        %v1872 = vpop.permute.xlu0 %1871
        %vm1873 = vcmask 998400
        %v1874 = vsel %vm1873, %v1866, %v1868
        %v1875 = vsel %vm1873, %v1868, %v1870
        %v1876 = vsel %vm1873, %v1870, %v1872
        %1880 = vst [vmem:[#allocation2 + $0x210] sm:$0xc] %v1874
        %1881 = vst [vmem:[#allocation2 + $0x218] sm:$0xc] %v1875
        %1882 = vst [vmem:[#allocation2 + $0x220] sm:$0xc] %v1876
        %1883 = vrot.lane.b32.xlu0 %v957, 121
        %v1884 = vpop.permute.xlu0 %1883
        %1885 = vrot.lane.b32.xlu0 %v958, 121
        %v1886 = vpop.permute.xlu0 %1885
        %1887 = vrot.lane.b32.xlu0 %v959, 121
        %v1888 = vpop.permute.xlu0 %1887
        %1889 = vrot.lane.b32.xlu0 %v960, 121
        %v1890 = vpop.permute.xlu0 %1889
        %vm1891 = vcmask 990208
        %v1892 = vsel %vm1891, %v1884, %v1886
        %v1893 = vsel %vm1891, %v1886, %v1888
        %v1894 = vsel %vm1891, %v1888, %v1890
        %1898 = vst [vmem:[#allocation2 + $0x210] sm:$0x30] %v1892
        %1899 = vst [vmem:[#allocation2 + $0x218] sm:$0x30] %v1893
        %1900 = vst [vmem:[#allocation2 + $0x220] sm:$0x30] %v1894
        %1901 = vrot.lane.b32.xlu0 %v895, 120
        %v1902 = vpop.permute.xlu0 %1901
        %1903 = vrot.lane.b32.xlu0 %v896, 120
        %v1904 = vpop.permute.xlu0 %1903
        %1905 = vrot.lane.b32.xlu0 %v897, 120
        %v1906 = vpop.permute.xlu0 %1905
        %1907 = vrot.lane.b32.xlu0 %v898, 120
        %v1908 = vpop.permute.xlu0 %1907
        %vm1909 = vcmask 982016
        %v1910 = vsel %vm1909, %v1902, %v1904
        %v1911 = vsel %vm1909, %v1904, %v1906
        %v1912 = vsel %vm1909, %v1906, %v1908
        %1916 = vst [vmem:[#allocation2 + $0x210] sm:$0xc0] %v1910
        %1917 = vst [vmem:[#allocation2 + $0x218] sm:$0xc0] %v1911
        %1918 = vst [vmem:[#allocation2 + $0x220] sm:$0xc0] %v1912
        %1919 = vrot.lane.b32.xlu0 %v917, 104
        %v1920 = vpop.permute.xlu0 %1919
        %1921 = vrot.lane.b32.xlu0 %v918, 104
        %v1922 = vpop.permute.xlu0 %1921
        %1923 = vrot.lane.b32.xlu0 %v919, 104
        %v1924 = vpop.permute.xlu0 %1923
        %1925 = vrot.lane.b32.xlu0 %v920, 104
        %v1926 = vpop.permute.xlu0 %1925
        %vm1927 = vcmask 850944
        %v1928 = vsel %vm1927, %v1920, %v1922
        %v1929 = vsel %vm1927, %v1922, %v1924
        %v1930 = vsel %vm1927, %v1924, %v1926
        %1934 = vst [vmem:[#allocation2 + $0x228] sm:$0x3] %v1928
        %1935 = vst [vmem:[#allocation2 + $0x230] sm:$0x3] %v1929
        %1936 = vst [vmem:[#allocation2 + $0x238] sm:$0x3] %v1930
        %1937 = vst [vmem:[#allocation2 + $0x228] sm:$0xc] %v908
        %1938 = vst [vmem:[#allocation2 + $0x230] sm:$0xc] %v909
        %1939 = vst [vmem:[#allocation2 + $0x238] sm:$0xc] %v910
        %1940 = vrot.lane.b32.xlu0 %v957, 102
        %v1941 = vpop.permute.xlu0 %1940
        %1942 = vrot.lane.b32.xlu0 %v958, 102
        %v1943 = vpop.permute.xlu0 %1942
        %1944 = vrot.lane.b32.xlu0 %v959, 102
        %v1945 = vpop.permute.xlu0 %1944
        %1946 = vrot.lane.b32.xlu0 %v960, 102
        %v1947 = vpop.permute.xlu0 %1946
        %v1948 = vsel %vm929, %v1941, %v1943
        %v1949 = vsel %vm929, %v1943, %v1945
        %v1950 = vsel %vm929, %v1945, %v1947
        %1954 = vst [vmem:[#allocation2 + $0x228] sm:$0x30] %v1948
        %1955 = vst [vmem:[#allocation2 + $0x230] sm:$0x30] %v1949
        %1956 = vst [vmem:[#allocation2 + $0x238] sm:$0x30] %v1950
        %1957 = vst [vmem:[#allocation2 + $0x228] sm:$0xc0] %v948
        %1958 = vst [vmem:[#allocation2 + $0x230] sm:$0xc0] %v949
        %1959 = vst [vmem:[#allocation2 + $0x238] sm:$0xc0] %v950
        %1960 = vrot.lane.b32.xlu0 %v917, 100
        %v1961 = vpop.permute.xlu0 %1960
        %1962 = vrot.lane.b32.xlu0 %v918, 100
        %v1963 = vpop.permute.xlu0 %1962
        %1964 = vrot.lane.b32.xlu0 %v919, 100
        %v1965 = vpop.permute.xlu0 %1964
        %1966 = vrot.lane.b32.xlu0 %v920, 100
        %v1967 = vpop.permute.xlu0 %1966
        %v1968 = vsel %vm969, %v1961, %v1963
        %v1969 = vsel %vm969, %v1963, %v1965
        %v1970 = vsel %vm969, %v1965, %v1967
        %1974 = vst [vmem:[#allocation2 + $0x240] sm:$0x3] %v1968
        %1975 = vst [vmem:[#allocation2 + $0x248] sm:$0x3] %v1969
        %1976 = vst [vmem:[#allocation2 + $0x250] sm:$0x3] %v1970
        %1977 = vst [vmem:[#allocation2 + $0x240] sm:$0xc] %v988
        %1978 = vst [vmem:[#allocation2 + $0x248] sm:$0xc] %v989
        %1979 = vst [vmem:[#allocation2 + $0x250] sm:$0xc] %v990
        %1980 = vrot.lane.b32.xlu0 %v957, 98
        %v1981 = vpop.permute.xlu0 %1980
        %1982 = vrot.lane.b32.xlu0 %v958, 98
        %v1983 = vpop.permute.xlu0 %1982
        %1984 = vrot.lane.b32.xlu0 %v959, 98
        %v1985 = vpop.permute.xlu0 %1984
        %1986 = vrot.lane.b32.xlu0 %v960, 98
        %v1987 = vpop.permute.xlu0 %1986
        %v1988 = vsel %vm1005, %v1981, %v1983
        %v1989 = vsel %vm1005, %v1983, %v1985
        %v1990 = vsel %vm1005, %v1985, %v1987
        %1994 = vst [vmem:[#allocation2 + $0x240] sm:$0x30] %v1988
        %1995 = vst [vmem:[#allocation2 + $0x248] sm:$0x30] %v1989
        %1996 = vst [vmem:[#allocation2 + $0x250] sm:$0x30] %v1990
        %1997 = vst [vmem:[#allocation2 + $0x240] sm:$0xc0] %v1024
        %1998 = vst [vmem:[#allocation2 + $0x248] sm:$0xc0] %v1025
        %1999 = vst [vmem:[#allocation2 + $0x250] sm:$0xc0] %v1026
        %2000 = vrot.lane.b32.xlu0 %v917, 96
        %v2001 = vpop.permute.xlu0 %2000
        %2002 = vrot.lane.b32.xlu0 %v918, 96
        %v2003 = vpop.permute.xlu0 %2002
        %2004 = vrot.lane.b32.xlu0 %v919, 96
        %v2005 = vpop.permute.xlu0 %2004
        %2006 = vrot.lane.b32.xlu0 %v920, 96
        %v2007 = vpop.permute.xlu0 %2006
        %vm2008 = vcmask 785408
        %v2009 = vsel %vm2008, %v2001, %v2003
        %v2010 = vsel %vm2008, %v2003, %v2005
        %v2011 = vsel %vm2008, %v2005, %v2007
        %2015 = vst [vmem:[#allocation2 + $0x258] sm:$0x3] %v2009
        %2016 = vst [vmem:[#allocation2 + $0x260] sm:$0x3] %v2010
        %2017 = vst [vmem:[#allocation2 + $0x268] sm:$0x3] %v2011
        %2018 = vrot.lane.b32.xlu0 %v895, 80
        %v2019 = vpop.permute.xlu0 %2018
        %2020 = vrot.lane.b32.xlu0 %v896, 80
        %v2021 = vpop.permute.xlu0 %2020
        %2022 = vrot.lane.b32.xlu0 %v897, 80
        %v2023 = vpop.permute.xlu0 %2022
        %2024 = vrot.lane.b32.xlu0 %v898, 80
        %v2025 = vpop.permute.xlu0 %2024
        %vm2026 = vcmask 654336
        %v2027 = vsel %vm2026, %v2019, %v2021
        %v2028 = vsel %vm2026, %v2021, %v2023
        %v2029 = vsel %vm2026, %v2023, %v2025
        %2033 = vst [vmem:[#allocation2 + $0x258] sm:$0xc] %v2027
        %2034 = vst [vmem:[#allocation2 + $0x260] sm:$0xc] %v2028
        %2035 = vst [vmem:[#allocation2 + $0x268] sm:$0xc] %v2029
        %2036 = vst [vmem:[#allocation2 + $0x258] sm:$0x30] %v1042
        %2037 = vst [vmem:[#allocation2 + $0x260] sm:$0x30] %v1043
        %2038 = vst [vmem:[#allocation2 + $0x268] sm:$0x30] %v1044
        %2039 = vst [vmem:[#allocation2 + $0x258] sm:$0xc0] %v1059
        %2040 = vst [vmem:[#allocation2 + $0x260] sm:$0xc0] %v1060
        %2041 = vst [vmem:[#allocation2 + $0x268] sm:$0xc0] %v1061
        %2042 = vst [vmem:[#allocation2 + $0x270] sm:$0x3] %v1076
        %2043 = vst [vmem:[#allocation2 + $0x278] sm:$0x3] %v1077
        %2044 = vst [vmem:[#allocation2 + $0x280] sm:$0x3] %v1078
        %2045 = vst [vmem:[#allocation2 + $0x270] sm:$0xc] %v1093
        %2046 = vst [vmem:[#allocation2 + $0x278] sm:$0xc] %v1094
        %2047 = vst [vmem:[#allocation2 + $0x280] sm:$0xc] %v1095
        %2048 = vst [vmem:[#allocation2 + $0x270] sm:$0x30] %v1110
        %2049 = vst [vmem:[#allocation2 + $0x278] sm:$0x30] %v1111
        %2050 = vst [vmem:[#allocation2 + $0x280] sm:$0x30] %v1112
        %2051 = vst [vmem:[#allocation2 + $0x270] sm:$0xc0] %v1127
        %2052 = vst [vmem:[#allocation2 + $0x278] sm:$0xc0] %v1128
        %2053 = vst [vmem:[#allocation2 + $0x280] sm:$0xc0] %v1129
        %2054 = vst [vmem:[#allocation2 + $0x288] sm:$0x3] %v1145
        %2055 = vst [vmem:[#allocation2 + $0x290] sm:$0x3] %v1146
        %2056 = vst [vmem:[#allocation2 + $0x298] sm:$0x3] %v1147
        %2057 = vrot.lane.b32.xlu0 %v895, 72
        %v2058 = vpop.permute.xlu0 %2057
        %2059 = vrot.lane.b32.xlu0 %v896, 72
        %v2060 = vpop.permute.xlu0 %2059
        %2061 = vrot.lane.b32.xlu0 %v897, 72
        %v2062 = vpop.permute.xlu0 %2061
        %2063 = vrot.lane.b32.xlu0 %v898, 72
        %v2064 = vpop.permute.xlu0 %2063
        %vm2065 = vcmask 588800
        %v2066 = vsel %vm2065, %v2058, %v2060
        %v2067 = vsel %vm2065, %v2060, %v2062
        %v2068 = vsel %vm2065, %v2062, %v2064
        %2072 = vst [vmem:[#allocation2 + $0x288] sm:$0xc] %v2066
        %2073 = vst [vmem:[#allocation2 + $0x290] sm:$0xc] %v2067
        %2074 = vst [vmem:[#allocation2 + $0x298] sm:$0xc] %v2068
        %2075 = vrot.lane.b32.xlu0 %v957, 56
        %v2076 = vpop.permute.xlu0 %2075
        %2077 = vrot.lane.b32.xlu0 %v958, 56
        %v2078 = vpop.permute.xlu0 %2077
        %2079 = vrot.lane.b32.xlu0 %v959, 56
        %v2080 = vpop.permute.xlu0 %2079
        %2081 = vrot.lane.b32.xlu0 %v960, 56
        %v2082 = vpop.permute.xlu0 %2081
        %vm2083 = vcmask 457728
        %v2084 = vsel %vm2083, %v2076, %v2078
        %v2085 = vsel %vm2083, %v2078, %v2080
        %v2086 = vsel %vm2083, %v2080, %v2082
        %2090 = vst [vmem:[#allocation2 + $0x288] sm:$0x30] %v2084
        %2091 = vst [vmem:[#allocation2 + $0x290] sm:$0x30] %v2085
        %2092 = vst [vmem:[#allocation2 + $0x298] sm:$0x30] %v2086
        %2093 = vst [vmem:[#allocation2 + $0x288] sm:$0xc0] %v1163
        %2094 = vst [vmem:[#allocation2 + $0x290] sm:$0xc0] %v1164
        %2095 = vst [vmem:[#allocation2 + $0x298] sm:$0xc0] %v1165
        %2096 = vrot.lane.b32.xlu0 %v917, 54
        %v2097 = vpop.permute.xlu0 %2096
        %2098 = vrot.lane.b32.xlu0 %v918, 54
        %v2099 = vpop.permute.xlu0 %2098
        %2100 = vrot.lane.b32.xlu0 %v919, 54
        %v2101 = vpop.permute.xlu0 %2100
        %2102 = vrot.lane.b32.xlu0 %v920, 54
        %v2103 = vpop.permute.xlu0 %2102
        %v2104 = vsel %vm639, %v2097, %v2099
        %v2105 = vsel %vm639, %v2099, %v2101
        %v2106 = vsel %vm639, %v2101, %v2103
        %2110 = vst [vmem:[#allocation2 + $0x2a0] sm:$0x3] %v2104
        %2111 = vst [vmem:[#allocation2 + $0x2a8] sm:$0x3] %v2105
        %2112 = vst [vmem:[#allocation2 + $0x2b0] sm:$0x3] %v2106
        %2113 = vst [vmem:[#allocation2 + $0x2a0] sm:$0xc] %v1197
        %2114 = vst [vmem:[#allocation2 + $0x2a8] sm:$0xc] %v1198
        %2115 = vst [vmem:[#allocation2 + $0x2b0] sm:$0xc] %v1199
        %2116 = vrot.lane.b32.xlu0 %v957, 52
        %v2117 = vpop.permute.xlu0 %2116
        %2118 = vrot.lane.b32.xlu0 %v958, 52
        %v2119 = vpop.permute.xlu0 %2118
        %2120 = vrot.lane.b32.xlu0 %v959, 52
        %v2121 = vpop.permute.xlu0 %2120
        %2122 = vrot.lane.b32.xlu0 %v960, 52
        %v2123 = vpop.permute.xlu0 %2122
        %v2124 = vsel %vm401, %v2117, %v2119
        %v2125 = vsel %vm401, %v2119, %v2121
        %v2126 = vsel %vm401, %v2121, %v2123
        %2130 = vst [vmem:[#allocation2 + $0x2a0] sm:$0x30] %v2124
        %2131 = vst [vmem:[#allocation2 + $0x2a8] sm:$0x30] %v2125
        %2132 = vst [vmem:[#allocation2 + $0x2b0] sm:$0x30] %v2126
        %2133 = vst [vmem:[#allocation2 + $0x2a0] sm:$0xc0] %v1231
        %2134 = vst [vmem:[#allocation2 + $0x2a8] sm:$0xc0] %v1232
        %2135 = vst [vmem:[#allocation2 + $0x2b0] sm:$0xc0] %v1233
        %2136 = vrot.lane.b32.xlu0 %v917, 50
        %v2137 = vpop.permute.xlu0 %2136
        %2138 = vrot.lane.b32.xlu0 %v918, 50
        %v2139 = vpop.permute.xlu0 %2138
        %2140 = vrot.lane.b32.xlu0 %v919, 50
        %v2141 = vpop.permute.xlu0 %2140
        %2142 = vrot.lane.b32.xlu0 %v920, 50
        %v2143 = vpop.permute.xlu0 %2142
        %v2144 = vsel %vm680, %v2137, %v2139
        %v2145 = vsel %vm680, %v2139, %v2141
        %v2146 = vsel %vm680, %v2141, %v2143
        %2150 = vst [vmem:[#allocation2 + $0x2b8] sm:$0x3] %v2144
        %2151 = vst [vmem:[#allocation2 + $0x2c0] sm:$0x3] %v2145
        %2152 = vst [vmem:[#allocation2 + $0x2c8] sm:$0x3] %v2146
        %2153 = vst [vmem:[#allocation2 + $0x2b8] sm:$0xc] %v1266
        %2154 = vst [vmem:[#allocation2 + $0x2c0] sm:$0xc] %v1267
        %2155 = vst [vmem:[#allocation2 + $0x2c8] sm:$0xc] %v1268
        %2156 = vrot.lane.b32.xlu0 %v957, 48
        %v2157 = vpop.permute.xlu0 %2156
        %2158 = vrot.lane.b32.xlu0 %v958, 48
        %v2159 = vpop.permute.xlu0 %2158
        %2160 = vrot.lane.b32.xlu0 %v959, 48
        %v2161 = vpop.permute.xlu0 %2160
        %2162 = vrot.lane.b32.xlu0 %v960, 48
        %v2163 = vpop.permute.xlu0 %2162
        %vm2164 = vcmask 392192
        %v2165 = vsel %vm2164, %v2157, %v2159
        %v2166 = vsel %vm2164, %v2159, %v2161
        %v2167 = vsel %vm2164, %v2161, %v2163
        %2171 = vst [vmem:[#allocation2 + $0x2b8] sm:$0x30] %v2165
        %2172 = vst [vmem:[#allocation2 + $0x2c0] sm:$0x30] %v2166
        %2173 = vst [vmem:[#allocation2 + $0x2c8] sm:$0x30] %v2167
        %2174 = vrot.lane.b32.xlu0 %v895, 32
        %v2175 = vpop.permute.xlu0 %2174
        %2176 = vrot.lane.b32.xlu0 %v896, 32
        %v2177 = vpop.permute.xlu0 %2176
        %2178 = vrot.lane.b32.xlu0 %v897, 32
        %v2179 = vpop.permute.xlu0 %2178
        %2180 = vrot.lane.b32.xlu0 %v898, 32
        %v2181 = vpop.permute.xlu0 %2180
        %vm2182 = vcmask 261120
        %v2183 = vsel %vm2182, %v2175, %v2177
        %v2184 = vsel %vm2182, %v2177, %v2179
        %v2185 = vsel %vm2182, %v2179, %v2181
        %2189 = vst [vmem:[#allocation2 + $0x2b8] sm:$0xc0] %v2183
        %2190 = vst [vmem:[#allocation2 + $0x2c0] sm:$0xc0] %v2184
        %2191 = vst [vmem:[#allocation2 + $0x2c8] sm:$0xc0] %v2185
        %2192 = vst [vmem:[#allocation2 + $0x2d0] sm:$0x3] %v1284
        %2193 = vst [vmem:[#allocation2 + $0x2d8] sm:$0x3] %v1285
        %2194 = vst [vmem:[#allocation2 + $0x2e0] sm:$0x3] %v1286
        %2195 = vst [vmem:[#allocation2 + $0x2d0] sm:$0xc] %v1301
        %2196 = vst [vmem:[#allocation2 + $0x2d8] sm:$0xc] %v1302
        %2197 = vst [vmem:[#allocation2 + $0x2e0] sm:$0xc] %v1303
        %2198 = vst [vmem:[#allocation2 + $0x2d0] sm:$0x30] %v1318
        %2199 = vst [vmem:[#allocation2 + $0x2d8] sm:$0x30] %v1319
        %2200 = vst [vmem:[#allocation2 + $0x2e0] sm:$0x30] %v1320
        %2201 = vst [vmem:[#allocation2 + $0x2d0] sm:$0xc0] %v1335
        %2202 = vst [vmem:[#allocation2 + $0x2d8] sm:$0xc0] %v1336
        %2203 = vst [vmem:[#allocation2 + $0x2e0] sm:$0xc0] %v1337
        %2204 = vst [vmem:[#allocation2 + $0x2e8] sm:$0x3] %v1352
        %2205 = vst [vmem:[#allocation2 + $0x2f0] sm:$0x3] %v1353
        %2206 = vst [vmem:[#allocation2 + $0x2f8] sm:$0x3] %v1354
        %2207 = vst [vmem:[#allocation2 + $0x2e8] sm:$0xc] %v1369
        %2208 = vst [vmem:[#allocation2 + $0x2f0] sm:$0xc] %v1370
        %2209 = vst [vmem:[#allocation2 + $0x2f8] sm:$0xc] %v1371
        %2210 = vst [vmem:[#allocation2 + $0x2e8] sm:$0x30] %v1387
        %2211 = vst [vmem:[#allocation2 + $0x2f0] sm:$0x30] %v1388
        %2212 = vst [vmem:[#allocation2 + $0x2f8] sm:$0x30] %v1389
        %2213 = vrot.lane.b32.xlu0 %v895, 24
        %v2214 = vpop.permute.xlu0 %2213
        %2215 = vrot.lane.b32.xlu0 %v896, 24
        %v2216 = vpop.permute.xlu0 %2215
        %2217 = vrot.lane.b32.xlu0 %v897, 24
        %v2218 = vpop.permute.xlu0 %2217
        %2219 = vrot.lane.b32.xlu0 %v898, 24
        %v2220 = vpop.permute.xlu0 %2219
        %vm2221 = vcmask 195584
        %v2222 = vsel %vm2221, %v2214, %v2216
        %v2223 = vsel %vm2221, %v2216, %v2218
        %v2224 = vsel %vm2221, %v2218, %v2220
        %2228 = vst [vmem:[#allocation2 + $0x2e8] sm:$0xc0] %v2222
        %2229 = vst [vmem:[#allocation2 + $0x2f0] sm:$0xc0] %v2223
        %2230 = vst [vmem:[#allocation2 + $0x2f8] sm:$0xc0] %v2224
        %2231 = vrot.lane.b32.xlu0 %v917, 8
        %v2232 = vpop.permute.xlu0 %2231
        %2233 = vrot.lane.b32.xlu0 %v918, 8
        %v2234 = vpop.permute.xlu0 %2233
        %2235 = vrot.lane.b32.xlu0 %v919, 8
        %v2236 = vpop.permute.xlu0 %2235
        %2237 = vrot.lane.b32.xlu0 %v920, 8
        %v2238 = vpop.permute.xlu0 %2237
        %vm2239 = vcmask 64512
        %v2240 = vsel %vm2239, %v2232, %v2234
        %v2241 = vsel %vm2239, %v2234, %v2236
        %v2242 = vsel %vm2239, %v2236, %v2238
        %2246 = vst [vmem:[#allocation2 + $0x300] sm:$0x3] %v2240
        %2247 = vst [vmem:[#allocation2 + $0x308] sm:$0x3] %v2241
        %2248 = vst [vmem:[#allocation2 + $0x310] sm:$0x3] %v2242
        %2249 = vst [vmem:[#allocation2 + $0x300] sm:$0xc] %v1405
        %2250 = vst [vmem:[#allocation2 + $0x308] sm:$0xc] %v1406
        %2251 = vst [vmem:[#allocation2 + $0x310] sm:$0xc] %v1407
        %2252 = vrot.lane.b32.xlu0 %v957, 6
        %v2253 = vpop.permute.xlu0 %2252
        %2254 = vrot.lane.b32.xlu0 %v958, 6
        %v2255 = vpop.permute.xlu0 %2254
        %2256 = vrot.lane.b32.xlu0 %v959, 6
        %v2257 = vpop.permute.xlu0 %2256
        %2258 = vrot.lane.b32.xlu0 %v960, 6
        %v2259 = vpop.permute.xlu0 %2258
        %v2260 = vsel %vm743, %v2253, %v2255
        %v2261 = vsel %vm743, %v2255, %v2257
        %v2262 = vsel %vm743, %v2257, %v2259
        %2266 = vst [vmem:[#allocation2 + $0x300] sm:$0x30] %v2260
        %2267 = vst [vmem:[#allocation2 + $0x308] sm:$0x30] %v2261
        %2268 = vst [vmem:[#allocation2 + $0x310] sm:$0x30] %v2262
        %2269 = vst [vmem:[#allocation2 + $0x300] sm:$0xc0] %v1439
        %2270 = vst [vmem:[#allocation2 + $0x308] sm:$0xc0] %v1440
        %2271 = vst [vmem:[#allocation2 + $0x310] sm:$0xc0] %v1441
        %2272 = vrot.lane.b32.xlu0 %v917, 4
        %v2273 = vpop.permute.xlu0 %2272
        %2274 = vrot.lane.b32.xlu0 %v918, 4
        %v2275 = vpop.permute.xlu0 %2274
        %2276 = vrot.lane.b32.xlu0 %v919, 4
        %v2277 = vpop.permute.xlu0 %2276
        %2278 = vrot.lane.b32.xlu0 %v920, 4
        %v2279 = vpop.permute.xlu0 %2278
        %v2280 = vsel %vm513, %v2273, %v2275
        %v2281 = vsel %vm513, %v2275, %v2277
        %v2282 = vsel %vm513, %v2277, %v2279
        %2286 = vst [vmem:[#allocation2 + $0x318] sm:$0x3] %v2280
        %2287 = vst [vmem:[#allocation2 + $0x320] sm:$0x3] %v2281
        %2288 = vst [vmem:[#allocation2 + $0x328] sm:$0x3] %v2282
        %2289 = vst [vmem:[#allocation2 + $0x318] sm:$0xc] %v1473
        %2290 = vst [vmem:[#allocation2 + $0x320] sm:$0xc] %v1474
        %2291 = vst [vmem:[#allocation2 + $0x328] sm:$0xc] %v1475
        %2292 = vrot.lane.b32.xlu0 %v957, 2
        %v2293 = vpop.permute.xlu0 %2292
        %2294 = vrot.lane.b32.xlu0 %v958, 2
        %v2295 = vpop.permute.xlu0 %2294
        %2296 = vrot.lane.b32.xlu0 %v959, 2
        %v2297 = vpop.permute.xlu0 %2296
        %2298 = vrot.lane.b32.xlu0 %v960, 2
        %v2299 = vpop.permute.xlu0 %2298
        %v2300 = vsel %vm784, %v2293, %v2295
        %v2301 = vsel %vm784, %v2295, %v2297
        %v2302 = vsel %vm784, %v2297, %v2299
        %2306 = vst [vmem:[#allocation2 + $0x318] sm:$0x30] %v2300
        %2307 = vst [vmem:[#allocation2 + $0x320] sm:$0x30] %v2301
        %2308 = vst [vmem:[#allocation2 + $0x328] sm:$0x30] %v2302
        %2309 = vst [vmem:[#allocation2 + $0x318] sm:$0xc0] %v1508
        %2310 = vst [vmem:[#allocation2 + $0x320] sm:$0xc0] %v1509
        %2311 = vst [vmem:[#allocation2 + $0x328] sm:$0xc0] %v1510
        %2315 = vst [vmem:[#allocation2 + $0x330] sm:$0x3] %v918
        %2316 = vst [vmem:[#allocation2 + $0x338] sm:$0x3] %v919
        %2317 = vst [vmem:[#allocation2 + $0x340] sm:$0x3] %v920
        %2318 = vrot.lane.b32.xlu0 %v896, 112
        %v2319 = vpop.permute.xlu0 %2318
        %2320 = vrot.lane.b32.xlu0 %v897, 112
        %v2321 = vpop.permute.xlu0 %2320
        %2322 = vrot.lane.b32.xlu0 %v898, 112
        %v2323 = vpop.permute.xlu0 %2322
        %2324 = vrot.lane.b32.xlu0 %v1519, 112
        %v2325 = vpop.permute.xlu0 %2324
        %vm2326 = vcmask 916480
        %v2327 = vsel %vm2326, %v2319, %v2321
        %v2328 = vsel %vm2326, %v2321, %v2323
        %v2329 = vsel %vm2326, %v2323, %v2325
        %2333 = vst [vmem:[#allocation2 + $0x330] sm:$0xc] %v2327
        %2334 = vst [vmem:[#allocation2 + $0x338] sm:$0xc] %v2328
        %2335 = vst [vmem:[#allocation2 + $0x340] sm:$0xc] %v2329
        %2336 = vst [vmem:[#allocation2 + $0x330] sm:$0x30] %v1530
        %2337 = vst [vmem:[#allocation2 + $0x338] sm:$0x30] %v1531
        %2338 = vst [vmem:[#allocation2 + $0x340] sm:$0x30] %v1532
        %2339 = vst [vmem:[#allocation2 + $0x330] sm:$0xc0] %v1547
        %2340 = vst [vmem:[#allocation2 + $0x338] sm:$0xc0] %v1548
        %2341 = vst [vmem:[#allocation2 + $0x340] sm:$0xc0] %v1549
        %2342 = vst [vmem:[#allocation2 + $0x348] sm:$0x3] %v1565
        %2343 = vst [vmem:[#allocation2 + $0x350] sm:$0x3] %v1566
        %2344 = vst [vmem:[#allocation2 + $0x358] sm:$0x3] %v1567
        %2345 = vst [vmem:[#allocation2 + $0x348] sm:$0xc] %v1582
        %2346 = vst [vmem:[#allocation2 + $0x350] sm:$0xc] %v1583
        %2347 = vst [vmem:[#allocation2 + $0x358] sm:$0xc] %v1584
        %2348 = vst [vmem:[#allocation2 + $0x348] sm:$0x30] %v1599
        %2349 = vst [vmem:[#allocation2 + $0x350] sm:$0x30] %v1600
        %2350 = vst [vmem:[#allocation2 + $0x358] sm:$0x30] %v1601
        %2351 = vst [vmem:[#allocation2 + $0x348] sm:$0xc0] %v1616
        %2352 = vst [vmem:[#allocation2 + $0x350] sm:$0xc0] %v1617
        %2353 = vst [vmem:[#allocation2 + $0x358] sm:$0xc0] %v1618
        %2354 = vst [vmem:[#allocation2 + $0x360] sm:$0x3] %v1634
        %2355 = vst [vmem:[#allocation2 + $0x368] sm:$0x3] %v1635
        %2356 = vst [vmem:[#allocation2 + $0x370] sm:$0x3] %v1636
        %2357 = vrot.lane.b32.xlu0 %v896, 104
        %v2358 = vpop.permute.xlu0 %2357
        %2359 = vrot.lane.b32.xlu0 %v897, 104
        %v2360 = vpop.permute.xlu0 %2359
        %2361 = vrot.lane.b32.xlu0 %v898, 104
        %v2362 = vpop.permute.xlu0 %2361
        %2363 = vrot.lane.b32.xlu0 %v1519, 104
        %v2364 = vpop.permute.xlu0 %2363
        %v2365 = vsel %vm1927, %v2358, %v2360
        %v2366 = vsel %vm1927, %v2360, %v2362
        %v2367 = vsel %vm1927, %v2362, %v2364
        %2371 = vst [vmem:[#allocation2 + $0x360] sm:$0xc] %v2365
        %2372 = vst [vmem:[#allocation2 + $0x368] sm:$0xc] %v2366
        %2373 = vst [vmem:[#allocation2 + $0x370] sm:$0xc] %v2367
        %2374 = vrot.lane.b32.xlu0 %v958, 88
        %v2375 = vpop.permute.xlu0 %2374
        %2376 = vrot.lane.b32.xlu0 %v959, 88
        %v2377 = vpop.permute.xlu0 %2376
        %2378 = vrot.lane.b32.xlu0 %v960, 88
        %v2379 = vpop.permute.xlu0 %2378
        %2380 = vrot.lane.b32.xlu0 %v1520, 88
        %v2381 = vpop.permute.xlu0 %2380
        %vm2382 = vcmask 719872
        %v2383 = vsel %vm2382, %v2375, %v2377
        %v2384 = vsel %vm2382, %v2377, %v2379
        %v2385 = vsel %vm2382, %v2379, %v2381
        %2389 = vst [vmem:[#allocation2 + $0x360] sm:$0x30] %v2383
        %2390 = vst [vmem:[#allocation2 + $0x368] sm:$0x30] %v2384
        %2391 = vst [vmem:[#allocation2 + $0x370] sm:$0x30] %v2385
        %2392 = vst [vmem:[#allocation2 + $0x360] sm:$0xc0] %v1652
        %2393 = vst [vmem:[#allocation2 + $0x368] sm:$0xc0] %v1653
        %2394 = vst [vmem:[#allocation2 + $0x370] sm:$0xc0] %v1654
        %2395 = vrot.lane.b32.xlu0 %v918, 86
        %v2396 = vpop.permute.xlu0 %2395
        %2397 = vrot.lane.b32.xlu0 %v919, 86
        %v2398 = vpop.permute.xlu0 %2397
        %2399 = vrot.lane.b32.xlu0 %v920, 86
        %v2400 = vpop.permute.xlu0 %2399
        %2401 = vrot.lane.b32.xlu0 %v1556, 86
        %v2402 = vpop.permute.xlu0 %2401
        %v2403 = vsel %vm1669, %v2396, %v2398
        %v2404 = vsel %vm1669, %v2398, %v2400
        %v2405 = vsel %vm1669, %v2400, %v2402
        %2409 = vst [vmem:[#allocation2 + $0x378] sm:$0x3] %v2403
        %2410 = vst [vmem:[#allocation2 + $0x380] sm:$0x3] %v2404
        %2411 = vst [vmem:[#allocation2 + $0x388] sm:$0x3] %v2405
        %2412 = vst [vmem:[#allocation2 + $0x378] sm:$0xc] %v1688
        %2413 = vst [vmem:[#allocation2 + $0x380] sm:$0xc] %v1689
        %2414 = vst [vmem:[#allocation2 + $0x388] sm:$0xc] %v1690
        %2415 = vrot.lane.b32.xlu0 %v958, 84
        %v2416 = vpop.permute.xlu0 %2415
        %2417 = vrot.lane.b32.xlu0 %v959, 84
        %v2418 = vpop.permute.xlu0 %2417
        %2419 = vrot.lane.b32.xlu0 %v960, 84
        %v2420 = vpop.permute.xlu0 %2419
        %2421 = vrot.lane.b32.xlu0 %v1520, 84
        %v2422 = vpop.permute.xlu0 %2421
        %v2423 = vsel %vm1705, %v2416, %v2418
        %v2424 = vsel %vm1705, %v2418, %v2420
        %v2425 = vsel %vm1705, %v2420, %v2422
        %2429 = vst [vmem:[#allocation2 + $0x378] sm:$0x30] %v2423
        %2430 = vst [vmem:[#allocation2 + $0x380] sm:$0x30] %v2424
        %2431 = vst [vmem:[#allocation2 + $0x388] sm:$0x30] %v2425
        %2432 = vst [vmem:[#allocation2 + $0x378] sm:$0xc0] %v1724
        %2433 = vst [vmem:[#allocation2 + $0x380] sm:$0xc0] %v1725
        %2434 = vst [vmem:[#allocation2 + $0x388] sm:$0xc0] %v1726
        %2435 = vrot.lane.b32.xlu0 %v918, 82
        %v2436 = vpop.permute.xlu0 %2435
        %2437 = vrot.lane.b32.xlu0 %v919, 82
        %v2438 = vpop.permute.xlu0 %2437
        %2439 = vrot.lane.b32.xlu0 %v920, 82
        %v2440 = vpop.permute.xlu0 %2439
        %2441 = vrot.lane.b32.xlu0 %v1556, 82
        %v2442 = vpop.permute.xlu0 %2441
        %v2443 = vsel %vm1741, %v2436, %v2438
        %v2444 = vsel %vm1741, %v2438, %v2440
        %v2445 = vsel %vm1741, %v2440, %v2442
        %2449 = vst [vmem:[#allocation2 + $0x390] sm:$0x3] %v2443
        %2450 = vst [vmem:[#allocation2 + $0x398] sm:$0x3] %v2444
        %2451 = vst [vmem:[#allocation2 + $0x3a0] sm:$0x3] %v2445
        %2452 = vst [vmem:[#allocation2 + $0x390] sm:$0xc] %v1760
        %2453 = vst [vmem:[#allocation2 + $0x398] sm:$0xc] %v1761
        %2454 = vst [vmem:[#allocation2 + $0x3a0] sm:$0xc] %v1762
        %2455 = vrot.lane.b32.xlu0 %v958, 80
        %v2456 = vpop.permute.xlu0 %2455
        %2457 = vrot.lane.b32.xlu0 %v959, 80
        %v2458 = vpop.permute.xlu0 %2457
        %2459 = vrot.lane.b32.xlu0 %v960, 80
        %v2460 = vpop.permute.xlu0 %2459
        %2461 = vrot.lane.b32.xlu0 %v1520, 80
        %v2462 = vpop.permute.xlu0 %2461
        %v2463 = vsel %vm2026, %v2456, %v2458
        %v2464 = vsel %vm2026, %v2458, %v2460
        %v2465 = vsel %vm2026, %v2460, %v2462
        %2469 = vst [vmem:[#allocation2 + $0x390] sm:$0x30] %v2463
        %2470 = vst [vmem:[#allocation2 + $0x398] sm:$0x30] %v2464
        %2471 = vst [vmem:[#allocation2 + $0x3a0] sm:$0x30] %v2465
        %2472 = vrot.lane.b32.xlu0 %v896, 64
        %v2473 = vpop.permute.xlu0 %2472
        %2474 = vrot.lane.b32.xlu0 %v897, 64
        %v2475 = vpop.permute.xlu0 %2474
        %2476 = vrot.lane.b32.xlu0 %v898, 64
        %v2477 = vpop.permute.xlu0 %2476
        %2478 = vrot.lane.b32.xlu0 %v1519, 64
        %v2479 = vpop.permute.xlu0 %2478
        %vm2480 = vcmask 523264
        %v2481 = vsel %vm2480, %v2473, %v2475
        %v2482 = vsel %vm2480, %v2475, %v2477
        %v2483 = vsel %vm2480, %v2477, %v2479
        %2487 = vst [vmem:[#allocation2 + $0x390] sm:$0xc0] %v2481
        %2488 = vst [vmem:[#allocation2 + $0x398] sm:$0xc0] %v2482
        %2489 = vst [vmem:[#allocation2 + $0x3a0] sm:$0xc0] %v2483
        %2490 = vrot.lane.b32.xlu0 %v918, 63
        %v2491 = vpop.permute.xlu0 %2490
        %2492 = vrot.lane.b32.xlu0 %v919, 63
        %v2493 = vpop.permute.xlu0 %2492
        %2494 = vrot.lane.b32.xlu0 %v920, 63
        %v2495 = vpop.permute.xlu0 %2494
        %2496 = vrot.lane.b32.xlu0 %v1556, 63
        %v2497 = vpop.permute.xlu0 %2496
        %vm2498 = vcmask 515072
        %v2499 = vsel %vm2498, %v2491, %v2493
        %v2500 = vsel %vm2498, %v2493, %v2495
        %v2501 = vsel %vm2498, %v2495, %v2497
        %2505 = vst [vmem:[#allocation2 + $0x3a8] sm:$0x3] %v2499
        %2506 = vst [vmem:[#allocation2 + $0x3b0] sm:$0x3] %v2500
        %2507 = vst [vmem:[#allocation2 + $0x3b8] sm:$0x3] %v2501
        %2508 = vrot.lane.b32.xlu0 %v896, 62
        %v2509 = vpop.permute.xlu0 %2508
        %2510 = vrot.lane.b32.xlu0 %v897, 62
        %v2511 = vpop.permute.xlu0 %2510
        %2512 = vrot.lane.b32.xlu0 %v898, 62
        %v2513 = vpop.permute.xlu0 %2512
        %2514 = vrot.lane.b32.xlu0 %v1519, 62
        %v2515 = vpop.permute.xlu0 %2514
        %vm2516 = vcmask 506880
        %v2517 = vsel %vm2516, %v2509, %v2511
        %v2518 = vsel %vm2516, %v2511, %v2513
        %v2519 = vsel %vm2516, %v2513, %v2515
        %2523 = vst [vmem:[#allocation2 + $0x3a8] sm:$0xc] %v2517
        %2524 = vst [vmem:[#allocation2 + $0x3b0] sm:$0xc] %v2518
        %2525 = vst [vmem:[#allocation2 + $0x3b8] sm:$0xc] %v2519
        %2526 = vrot.lane.b32.xlu0 %v958, 61
        %v2527 = vpop.permute.xlu0 %2526
        %2528 = vrot.lane.b32.xlu0 %v959, 61
        %v2529 = vpop.permute.xlu0 %2528
        %2530 = vrot.lane.b32.xlu0 %v960, 61
        %v2531 = vpop.permute.xlu0 %2530
        %2532 = vrot.lane.b32.xlu0 %v1520, 61
        %v2533 = vpop.permute.xlu0 %2532
        %vm2534 = vcmask 498688
        %v2535 = vsel %vm2534, %v2527, %v2529
        %v2536 = vsel %vm2534, %v2529, %v2531
        %v2537 = vsel %vm2534, %v2531, %v2533
        %2541 = vst [vmem:[#allocation2 + $0x3a8] sm:$0x30] %v2535
        %2542 = vst [vmem:[#allocation2 + $0x3b0] sm:$0x30] %v2536
        %2543 = vst [vmem:[#allocation2 + $0x3b8] sm:$0x30] %v2537
        %2544 = vrot.lane.b32.xlu0 %v896, 60
        %v2545 = vpop.permute.xlu0 %2544
        %2546 = vrot.lane.b32.xlu0 %v897, 60
        %v2547 = vpop.permute.xlu0 %2546
        %2548 = vrot.lane.b32.xlu0 %v898, 60
        %v2549 = vpop.permute.xlu0 %2548
        %2550 = vrot.lane.b32.xlu0 %v1519, 60
        %v2551 = vpop.permute.xlu0 %2550
        %vm2552 = vcmask 490496
        %v2553 = vsel %vm2552, %v2545, %v2547
        %v2554 = vsel %vm2552, %v2547, %v2549
        %v2555 = vsel %vm2552, %v2549, %v2551
        %2559 = vst [vmem:[#allocation2 + $0x3a8] sm:$0xc0] %v2553
        %2560 = vst [vmem:[#allocation2 + $0x3b0] sm:$0xc0] %v2554
        %2561 = vst [vmem:[#allocation2 + $0x3b8] sm:$0xc0] %v2555
        %2562 = vrot.lane.b32.xlu0 %v918, 59
        %v2563 = vpop.permute.xlu0 %2562
        %2564 = vrot.lane.b32.xlu0 %v919, 59
        %v2565 = vpop.permute.xlu0 %2564
        %2566 = vrot.lane.b32.xlu0 %v920, 59
        %v2567 = vpop.permute.xlu0 %2566
        %2568 = vrot.lane.b32.xlu0 %v1556, 59
        %v2569 = vpop.permute.xlu0 %2568
        %vm2570 = vcmask 482304
        %v2571 = vsel %vm2570, %v2563, %v2565
        %v2572 = vsel %vm2570, %v2565, %v2567
        %v2573 = vsel %vm2570, %v2567, %v2569
        %2577 = vst [vmem:[#allocation2 + $0x3c0] sm:$0x3] %v2571
        %2578 = vst [vmem:[#allocation2 + $0x3c8] sm:$0x3] %v2572
        %2579 = vst [vmem:[#allocation2 + $0x3d0] sm:$0x3] %v2573
        %2580 = vrot.lane.b32.xlu0 %v896, 58
        %v2581 = vpop.permute.xlu0 %2580
        %2582 = vrot.lane.b32.xlu0 %v897, 58
        %v2583 = vpop.permute.xlu0 %2582
        %2584 = vrot.lane.b32.xlu0 %v898, 58
        %v2585 = vpop.permute.xlu0 %2584
        %2586 = vrot.lane.b32.xlu0 %v1519, 58
        %v2587 = vpop.permute.xlu0 %2586
        %vm2588 = vcmask 474112
        %v2589 = vsel %vm2588, %v2581, %v2583
        %v2590 = vsel %vm2588, %v2583, %v2585
        %v2591 = vsel %vm2588, %v2585, %v2587
        %2595 = vst [vmem:[#allocation2 + $0x3c0] sm:$0xc] %v2589
        %2596 = vst [vmem:[#allocation2 + $0x3c8] sm:$0xc] %v2590
        %2597 = vst [vmem:[#allocation2 + $0x3d0] sm:$0xc] %v2591
        %2598 = vrot.lane.b32.xlu0 %v958, 57
        %v2599 = vpop.permute.xlu0 %2598
        %2600 = vrot.lane.b32.xlu0 %v959, 57
        %v2601 = vpop.permute.xlu0 %2600
        %2602 = vrot.lane.b32.xlu0 %v960, 57
        %v2603 = vpop.permute.xlu0 %2602
        %2604 = vrot.lane.b32.xlu0 %v1520, 57
        %v2605 = vpop.permute.xlu0 %2604
        %vm2606 = vcmask 465920
        %v2607 = vsel %vm2606, %v2599, %v2601
        %v2608 = vsel %vm2606, %v2601, %v2603
        %v2609 = vsel %vm2606, %v2603, %v2605
        %2613 = vst [vmem:[#allocation2 + $0x3c0] sm:$0x30] %v2607
        %2614 = vst [vmem:[#allocation2 + $0x3c8] sm:$0x30] %v2608
        %2615 = vst [vmem:[#allocation2 + $0x3d0] sm:$0x30] %v2609
        %2616 = vrot.lane.b32.xlu0 %v896, 56
        %v2617 = vpop.permute.xlu0 %2616
        %2618 = vrot.lane.b32.xlu0 %v897, 56
        %v2619 = vpop.permute.xlu0 %2618
        %2620 = vrot.lane.b32.xlu0 %v898, 56
        %v2621 = vpop.permute.xlu0 %2620
        %2622 = vrot.lane.b32.xlu0 %v1519, 56
        %v2623 = vpop.permute.xlu0 %2622
        %v2624 = vsel %vm2083, %v2617, %v2619
        %v2625 = vsel %vm2083, %v2619, %v2621
        %v2626 = vsel %vm2083, %v2621, %v2623
        %2630 = vst [vmem:[#allocation2 + $0x3c0] sm:$0xc0] %v2624
        %2631 = vst [vmem:[#allocation2 + $0x3c8] sm:$0xc0] %v2625
        %2632 = vst [vmem:[#allocation2 + $0x3d0] sm:$0xc0] %v2626
        %v2633 = vld [vmem:[%s1] sm:$0x3]
        %v2634 = vld [vmem:[#allocation2] sm:$0xff]
        %v2635 = vld [vmem:[#allocation2 + $0x8] sm:$0xff]
        %v2636 = vld [vmem:[#allocation2 + $0x10] sm:$0xff]
        %v2637 = vld [vmem:[#allocation2 + $0x18] sm:$0xff]
        %v2638 = vld [vmem:[#allocation2 + $0x20] sm:$0xff]
        %v2639 = vld [vmem:[#allocation2 + $0x28] sm:$0xff]
        %v2640 = vld [vmem:[#allocation2 + $0x30] sm:$0x3]
        %v2641 = vld [vmem:[#allocation2 + $0x38] sm:$0x3]
        %v2642 = vld [vmem:[#allocation2 + $0x40] sm:$0x3]
        %vm2643 = vcmask 293888
        %v2645 = vsel %vm2643, %v2633, 0
        %vm2647 = vcmask 1041408
        %v2649 = vsel %vm2647, %v2640, 0
        %v2652 = vsel %vm2647, %v2641, 0
        %v2655 = vsel %vm2647, %v2642, 0
        %2657 = vmatprep.subr.bf16.mxu0 %v2635
        %2658 = vmatpush1.bf16.msra.mxu0 %v2634
        %2659 = vmatprep.subr.bf16.mxu0 %v2638
        %2660 = vmatpush1.bf16.msra.mxu0 %v2637
        %2661 = vmatprep.subr.bf16.mxu0 %v2652
        %2662 = vmatpush1.bf16.msra.mxu0 %v2649
        %2663 = vmatprep.subr.bf16.mxu0 0
        %2664 = vmatpush1.bf16.msra.mxu0 0
        %2665 = vmatprep.subr.bf16.mxu0 0
        %2666 = vmatpush1.bf16.msra.mxu0 0
        %2667 = vmatprep.subr.bf16.mxu0 0
        %2668 = vmatpush1.bf16.msra.mxu0 0
        %2669 = vmatprep.subr.bf16.mxu0 0
        %2670 = vmatpush1.bf16.msra.mxu0 0
        %2671 = vmatprep.subr.bf16.mxu0 0
        %2672 = vmatpush1.bf16.msra.mxu0 0
        %2673 = vmatprep.subr.bf16.mxu0 0
        %2674 = vmatpush1.bf16.msra.mxu0 0
        %2675 = vmatprep.subr.bf16.mxu0 0
        %2676 = vmatpush1.bf16.msra.mxu0 0
        %2677 = vmatprep.subr.bf16.mxu0 0
        %2678 = vmatpush1.bf16.msra.mxu0 0
        %2679 = vmatprep.subr.bf16.mxu0 0
        %2680 = vmatpush1.bf16.msra.mxu0 0
        %2681 = vmatprep.subr.bf16.mxu0 0
        %2682 = vmatpush1.bf16.msra.mxu0 0
        %2683 = vmatprep.subr.bf16.mxu0 0
        %2684 = vmatpush1.bf16.msra.mxu0 0
        %2685 = vmatprep.subr.bf16.mxu0 0
        %2686 = vmatpush1.bf16.msra.mxu0 0
        %2687 = vmatprep.subr.bf16.mxu0 0
        %2688 = vmatpush1.bf16.msra.mxu0 0
        %2689 = vmatprep.mubr.bf16.mxu0 0
        %2690 = vmatmul.mubr.bf16.gmra.mrb[0].mxu0 %v2645
        %v2691 = vpop.f32.mrb[0].mxu0
        %v2692 = vadd.f32 0.0, %v2691
        %v2693 = vpop.f32.mrb[0].mxu0
        %v2694 = vadd.f32 0.0, %v2693
        %v2695 = vpop.f32.mrb[0].mxu0
        %v2696 = vpop.f32.mrb[0].mxu0
        %2697 = vdwg.mxu0
        %2698 = vmatprep.subr.bf16.mxu0 0
        %2699 = vmatpush1.bf16.msra.mxu0 %v2636
        %2700 = vmatprep.subr.bf16.mxu0 0
        %2701 = vmatpush1.bf16.msra.mxu0 %v2639
        %2702 = vmatprep.subr.bf16.mxu0 0
        %2703 = vmatpush1.bf16.msra.mxu0 %v2655
        %2704 = vmatprep.subr.bf16.mxu0 0
        %2705 = vmatpush1.bf16.msra.mxu0 0
        %2706 = vmatprep.subr.bf16.mxu0 0
        %2707 = vmatpush1.bf16.msra.mxu0 0
        %2708 = vmatprep.subr.bf16.mxu0 0
        %2709 = vmatpush1.bf16.msra.mxu0 0
        %2710 = vmatprep.subr.bf16.mxu0 0
        %2711 = vmatpush1.bf16.msra.mxu0 0
        %2712 = vmatprep.subr.bf16.mxu0 0
        %2713 = vmatpush1.bf16.msra.mxu0 0
        %2714 = vmatprep.subr.bf16.mxu0 0
        %2715 = vmatpush1.bf16.msra.mxu0 0
        %2716 = vmatprep.subr.bf16.mxu0 0
        %2717 = vmatpush1.bf16.msra.mxu0 0
        %2718 = vmatprep.subr.bf16.mxu0 0
        %2719 = vmatpush1.bf16.msra.mxu0 0
        %2720 = vmatprep.subr.bf16.mxu0 0
        %2721 = vmatpush1.bf16.msra.mxu0 0
        %2722 = vmatprep.subr.bf16.mxu0 0
        %2723 = vmatpush1.bf16.msra.mxu0 0
        %2724 = vmatprep.subr.bf16.mxu0 0
        %2725 = vmatpush1.bf16.msra.mxu0 0
        %2726 = vmatprep.subr.bf16.mxu0 0
        %2727 = vmatpush1.bf16.msra.mxu0 0
        %2728 = vmatprep.subr.bf16.mxu0 0
        %2729 = vmatpush1.bf16.msra.mxu0 0
        %2730 = vmatprep.mubr.bf16.mxu0 0
        %2731 = vmatmul.mubr.bf16.gmra.mrb[0].mxu0 %v2645
        %v2732 = vpop.f32.mrb[0].mxu0
        %v2733 = vadd.f32 0.0, %v2732
        %v2734 = vpop.f32.mrb[0].mxu0
        %v2735 = vpop.f32.mrb[0].mxu0
        %v2736 = vpop.f32.mrb[0].mxu0
        %2737 = vdwg.mxu0
        %v2738 = vld [vmem:[%s2] sm:$0x3]
        %v2739 = vld [vmem:[#allocation2 + $0x30] sm:$0xfc]
        %v2740 = vld [vmem:[#allocation2 + $0x38] sm:$0xfc]
        %v2741 = vld [vmem:[#allocation2 + $0x40] sm:$0xfc]
        %v2742 = vld [vmem:[#allocation2 + $0x48] sm:$0xff]
        %v2743 = vld [vmem:[#allocation2 + $0x50] sm:$0xff]
        %v2744 = vld [vmem:[#allocation2 + $0x58] sm:$0xff]
        %v2745 = vld [vmem:[#allocation2 + $0x60] sm:$0xff]
        %v2746 = vld [vmem:[#allocation2 + $0x68] sm:$0xff]
        %v2747 = vld [vmem:[#allocation2 + $0x70] sm:$0xff]
        %v2748 = vld [vmem:[#allocation2 + $0x78] sm:$0xff]
        %v2749 = vld [vmem:[#allocation2 + $0x80] sm:$0xff]
        %v2750 = vld [vmem:[#allocation2 + $0x88] sm:$0xff]
        %v2751 = vld [vmem:[#allocation2 + $0x90] sm:$0xff]
        %v2752 = vld [vmem:[#allocation2 + $0x98] sm:$0xff]
        %v2753 = vld [vmem:[#allocation2 + $0xa0] sm:$0xff]
        %v2754 = vld [vmem:[#allocation2 + $0xa8] sm:$0xff]
        %v2755 = vld [vmem:[#allocation2 + $0xb0] sm:$0xff]
        %v2756 = vld [vmem:[#allocation2 + $0xb8] sm:$0xff]
        %v2757 = vld [vmem:[#allocation2 + $0xc0] sm:$0xf]
        %v2758 = vld [vmem:[#allocation2 + $0xc8] sm:$0xf]
        %v2759 = vld [vmem:[#allocation2 + $0xd0] sm:$0xf]
        %vm2781 = vcmask 1045504
        %v2782 = vrot.slane %v2739, 2
        %v2783 = vrot.slane %v2742, 2
        %v2784 = vsel %vm2781, %v2782, %v2783
        %v2785 = vrot.slane %v2740, 2
        %v2786 = vrot.slane %v2743, 2
        %v2787 = vsel %vm2781, %v2785, %v2786
        %v2788 = vrot.slane %v2741, 2
        %v2789 = vrot.slane %v2744, 2
        %v2790 = vsel %vm2781, %v2788, %v2789
        %v2791 = vrot.slane %v2745, 2
        %v2792 = vsel %vm2781, %v2783, %v2791
        %v2793 = vrot.slane %v2746, 2
        %v2794 = vsel %vm2781, %v2786, %v2793
        %v2795 = vrot.slane %v2747, 2
        %v2796 = vsel %vm2781, %v2789, %v2795
        %v2797 = vrot.slane %v2748, 2
        %v2798 = vsel %vm2781, %v2791, %v2797
        %v2799 = vrot.slane %v2749, 2
        %v2800 = vsel %vm2781, %v2793, %v2799
        %v2801 = vrot.slane %v2750, 2
        %v2802 = vsel %vm2781, %v2795, %v2801
        %v2803 = vrot.slane %v2751, 2
        %v2804 = vsel %vm2781, %v2797, %v2803
        %v2805 = vrot.slane %v2752, 2
        %v2806 = vsel %vm2781, %v2799, %v2805
        %v2807 = vrot.slane %v2753, 2
        %v2808 = vsel %vm2781, %v2801, %v2807
        %v2809 = vrot.slane %v2754, 2
        %v2810 = vsel %vm2781, %v2803, %v2809
        %v2811 = vrot.slane %v2755, 2
        %v2812 = vsel %vm2781, %v2805, %v2811
        %v2813 = vrot.slane %v2756, 2
        %v2814 = vsel %vm2781, %v2807, %v2813
        %v2815 = vrot.slane %v2757, 2
        %v2816 = vsel %vm2781, %v2809, %v2815
        %v2817 = vrot.slane %v2758, 2
        %v2818 = vsel %vm2781, %v2811, %v2817
        %v2819 = vrot.slane %v2759, 2
        %v2820 = vsel %vm2781, %v2813, %v2819
        %vm2839 = vcmask 818176
        %v2841 = vsel %vm2839, %v2738, 0
        %v2844 = vsel %vm2647, %v2815, 0
        %v2847 = vsel %vm2647, %v2817, 0
        %v2850 = vsel %vm2647, %v2819, 0
        %2852 = vmatprep.subr.bf16.mxu0 %v2787
        %2853 = vmatpush1.bf16.msra.mxu0 %v2784
        %2854 = vmatprep.subr.bf16.mxu0 %v2794
        %2855 = vmatpush1.bf16.msra.mxu0 %v2792
        %2856 = vmatprep.subr.bf16.mxu0 %v2800
        %2857 = vmatpush1.bf16.msra.mxu0 %v2798
        %2858 = vmatprep.subr.bf16.mxu0 %v2806
        %2859 = vmatpush1.bf16.msra.mxu0 %v2804
        %2860 = vmatprep.subr.bf16.mxu0 %v2812
        %2861 = vmatpush1.bf16.msra.mxu0 %v2810
        %2862 = vmatprep.subr.bf16.mxu0 %v2818
        %2863 = vmatpush1.bf16.msra.mxu0 %v2816
        %2864 = vmatprep.subr.bf16.mxu0 %v2847
        %2865 = vmatpush1.bf16.msra.mxu0 %v2844
        %2866 = vmatprep.subr.bf16.mxu0 0
        %2867 = vmatpush1.bf16.msra.mxu0 0
        %2868 = vmatprep.subr.bf16.mxu0 0
        %2869 = vmatpush1.bf16.msra.mxu0 0
        %2870 = vmatprep.subr.bf16.mxu0 0
        %2871 = vmatpush1.bf16.msra.mxu0 0
        %2872 = vmatprep.subr.bf16.mxu0 0
        %2873 = vmatpush1.bf16.msra.mxu0 0
        %2874 = vmatprep.subr.bf16.mxu0 0
        %2875 = vmatpush1.bf16.msra.mxu0 0
        %2876 = vmatprep.subr.bf16.mxu0 0
        %2877 = vmatpush1.bf16.msra.mxu0 0
        %2878 = vmatprep.subr.bf16.mxu0 0
        %2879 = vmatpush1.bf16.msra.mxu0 0
        %2880 = vmatprep.subr.bf16.mxu0 0
        %2881 = vmatpush1.bf16.msra.mxu0 0
        %2882 = vmatprep.subr.bf16.mxu0 0
        %2883 = vmatpush1.bf16.msra.mxu0 0
        %2884 = vmatprep.mubr.bf16.mxu0 0
        %2885 = vmatmul.mubr.bf16.gmra.mrb[0].mxu0 %v2841
        %v2886 = vpop.f32.mrb[0].mxu0
        %v2887 = vadd.f32 0.0, %v2886
        %v2888 = vpop.f32.mrb[0].mxu0
        %v2889 = vadd.f32 0.0, %v2888
        %v2890 = vpop.f32.mrb[0].mxu0
        %v2891 = vpop.f32.mrb[0].mxu0
        %2892 = vdwg.mxu0
        %2893 = vmatprep.subr.bf16.mxu0 0
        %2894 = vmatpush1.bf16.msra.mxu0 %v2790
        %2895 = vmatprep.subr.bf16.mxu0 0
        %2896 = vmatpush1.bf16.msra.mxu0 %v2796
        %2897 = vmatprep.subr.bf16.mxu0 0
        %2898 = vmatpush1.bf16.msra.mxu0 %v2802
        %2899 = vmatprep.subr.bf16.mxu0 0
        %2900 = vmatpush1.bf16.msra.mxu0 %v2808
        %2901 = vmatprep.subr.bf16.mxu0 0
        %2902 = vmatpush1.bf16.msra.mxu0 %v2814
        %2903 = vmatprep.subr.bf16.mxu0 0
        %2904 = vmatpush1.bf16.msra.mxu0 %v2820
        %2905 = vmatprep.subr.bf16.mxu0 0
        %2906 = vmatpush1.bf16.msra.mxu0 %v2850
        %2907 = vmatprep.subr.bf16.mxu0 0
        %2908 = vmatpush1.bf16.msra.mxu0 0
        %2909 = vmatprep.subr.bf16.mxu0 0
        %2910 = vmatpush1.bf16.msra.mxu0 0
        %2911 = vmatprep.subr.bf16.mxu0 0
        %2912 = vmatpush1.bf16.msra.mxu0 0
        %2913 = vmatprep.subr.bf16.mxu0 0
        %2914 = vmatpush1.bf16.msra.mxu0 0
        %2915 = vmatprep.subr.bf16.mxu0 0
        %2916 = vmatpush1.bf16.msra.mxu0 0
        %2917 = vmatprep.subr.bf16.mxu0 0
        %2918 = vmatpush1.bf16.msra.mxu0 0
        %2919 = vmatprep.subr.bf16.mxu0 0
        %2920 = vmatpush1.bf16.msra.mxu0 0
        %2921 = vmatprep.subr.bf16.mxu0 0
        %2922 = vmatpush1.bf16.msra.mxu0 0
        %2923 = vmatprep.subr.bf16.mxu0 0
        %2924 = vmatpush1.bf16.msra.mxu0 0
        %2925 = vmatprep.mubr.bf16.mxu0 0
        %2926 = vmatmul.mubr.bf16.gmra.mrb[0].mxu0 %v2841
        %v2927 = vpop.f32.mrb[0].mxu0
        %v2928 = vadd.f32 0.0, %v2927
        %v2929 = vpop.f32.mrb[0].mxu0
        %v2930 = vpop.f32.mrb[0].mxu0
        %v2931 = vpop.f32.mrb[0].mxu0
        %2932 = vdwg.mxu0
        %v2933 = vld [vmem:[%s3] sm:$0xf]
        %v2934 = vld [vmem:[#allocation2 + $0xc0] sm:$0xf0]
        %v2935 = vld [vmem:[#allocation2 + $0xc8] sm:$0xf0]
        %v2936 = vld [vmem:[#allocation2 + $0xd0] sm:$0xf0]
        %v2937 = vld [vmem:[#allocation2 + $0xd8] sm:$0xff]
        %v2938 = vld [vmem:[#allocation2 + $0xe0] sm:$0xff]
        %v2939 = vld [vmem:[#allocation2 + $0xe8] sm:$0xff]
        %v2940 = vld [vmem:[#allocation2 + $0xf0] sm:$0xff]
        %v2941 = vld [vmem:[#allocation2 + $0xf8] sm:$0xff]
        %v2942 = vld [vmem:[#allocation2 + $0x100] sm:$0xff]
        %v2943 = vld [vmem:[#allocation2 + $0x108] sm:$0xff]
        %v2944 = vld [vmem:[#allocation2 + $0x110] sm:$0xff]
        %v2945 = vld [vmem:[#allocation2 + $0x118] sm:$0xff]
        %v2946 = vld [vmem:[#allocation2 + $0x120] sm:$0xff]
        %v2947 = vld [vmem:[#allocation2 + $0x128] sm:$0xff]
        %v2948 = vld [vmem:[#allocation2 + $0x130] sm:$0xff]
        %v2949 = vld [vmem:[#allocation2 + $0x138] sm:$0xff]
        %v2950 = vld [vmem:[#allocation2 + $0x140] sm:$0xff]
        %v2951 = vld [vmem:[#allocation2 + $0x148] sm:$0xff]
        %v2952 = vld [vmem:[#allocation2 + $0x150] sm:$0xff]
        %v2953 = vld [vmem:[#allocation2 + $0x158] sm:$0xff]
        %v2954 = vld [vmem:[#allocation2 + $0x160] sm:$0xff]
        %v2955 = vld [vmem:[#allocation2 + $0x168] sm:$0xff]
        %v2956 = vld [vmem:[#allocation2 + $0x170] sm:$0xff]
        %v2957 = vld [vmem:[#allocation2 + $0x178] sm:$0xff]
        %v2958 = vld [vmem:[#allocation2 + $0x180] sm:$0xff]
        %v2959 = vld [vmem:[#allocation2 + $0x188] sm:$0xff]
        %v2960 = vld [vmem:[#allocation2 + $0x190] sm:$0xff]
        %v2961 = vld [vmem:[#allocation2 + $0x198] sm:$0xff]
        %v2962 = vld [vmem:[#allocation2 + $0x1a0] sm:$0xff]
        %v2963 = vld [vmem:[#allocation2 + $0x1a8] sm:$0xff]
        %v2964 = vld [vmem:[#allocation2 + $0x1b0] sm:$0xff]
        %v2965 = vld [vmem:[#allocation2 + $0x1b8] sm:$0xff]
        %v2966 = vld [vmem:[#allocation2 + $0x1c0] sm:$0xff]
        %v2967 = vld [vmem:[#allocation2 + $0x1c8] sm:$0xff]
        %v2968 = vld [vmem:[#allocation2 + $0x1d0] sm:$0xff]
        %v2969 = vld [vmem:[#allocation2 + $0x1d8] sm:$0xff]
        %v2970 = vld [vmem:[#allocation2 + $0x1e0] sm:$0x3f]
        %v2971 = vld [vmem:[#allocation2 + $0x1e8] sm:$0x3f]
        %v2972 = vld [vmem:[#allocation2 + $0x1f0] sm:$0x3f]
        %v2975 = vunpack.c.l.s4 1983009808
        %v2976 = vunpack.c.0.s8 %v2975
        %v2977 = vlaneseq
        %v2978 = vshrl.u32 %v2977, 7
        %v2979 = vsub.s32 %v2976, %v2978
        %v2980 = vrot.slane %v2933, %v2979
        %v2981 = vcombine.high %v2980, %v2980
        %vm3022 = vcmask 1043456
        %v3023 = vrot.slane %v2934, 4
        %v3024 = vrot.slane %v2937, 4
        %v3025 = vsel %vm3022, %v3023, %v3024
        %v3026 = vrot.slane %v2935, 4
        %v3027 = vrot.slane %v2938, 4
        %v3028 = vsel %vm3022, %v3026, %v3027
        %v3029 = vrot.slane %v2936, 4
        %v3030 = vrot.slane %v2939, 4
        %v3031 = vsel %vm3022, %v3029, %v3030
        %v3032 = vrot.slane %v2940, 4
        %v3033 = vsel %vm3022, %v3024, %v3032
        %v3034 = vrot.slane %v2941, 4
        %v3035 = vsel %vm3022, %v3027, %v3034
        %v3036 = vrot.slane %v2942, 4
        %v3037 = vsel %vm3022, %v3030, %v3036
        %v3038 = vrot.slane %v2943, 4
        %v3039 = vsel %vm3022, %v3032, %v3038
        %v3040 = vrot.slane %v2944, 4
        %v3041 = vsel %vm3022, %v3034, %v3040
        %v3042 = vrot.slane %v2945, 4
        %v3043 = vsel %vm3022, %v3036, %v3042
        %v3044 = vrot.slane %v2946, 4
        %v3045 = vsel %vm3022, %v3038, %v3044
        %v3046 = vrot.slane %v2947, 4
        %v3047 = vsel %vm3022, %v3040, %v3046
        %v3048 = vrot.slane %v2948, 4
        %v3049 = vsel %vm3022, %v3042, %v3048
        %v3050 = vrot.slane %v2949, 4
        %v3051 = vsel %vm3022, %v3044, %v3050
        %v3052 = vrot.slane %v2950, 4
        %v3053 = vsel %vm3022, %v3046, %v3052
        %v3054 = vrot.slane %v2951, 4
        %v3055 = vsel %vm3022, %v3048, %v3054
        %v3056 = vrot.slane %v2952, 4
        %v3057 = vsel %vm3022, %v3050, %v3056
        %v3058 = vrot.slane %v2953, 4
        %v3059 = vsel %vm3022, %v3052, %v3058
        %v3060 = vrot.slane %v2954, 4
        %v3061 = vsel %vm3022, %v3054, %v3060
        %v3062 = vrot.slane %v2955, 4
        %v3063 = vsel %vm3022, %v3056, %v3062
        %v3064 = vrot.slane %v2956, 4
        %v3065 = vsel %vm3022, %v3058, %v3064
        %v3066 = vrot.slane %v2957, 4
        %v3067 = vsel %vm3022, %v3060, %v3066
        %v3068 = vrot.slane %v2958, 4
        %v3069 = vsel %vm3022, %v3062, %v3068
        %v3070 = vrot.slane %v2959, 4
        %v3071 = vsel %vm3022, %v3064, %v3070
        %v3072 = vrot.slane %v2960, 4
        %v3073 = vsel %vm3022, %v3066, %v3072
        %v3074 = vrot.slane %v2961, 4
        %v3075 = vsel %vm3022, %v3068, %v3074
        %v3076 = vrot.slane %v2962, 4
        %v3077 = vsel %vm3022, %v3070, %v3076
        %v3078 = vrot.slane %v2963, 4
        %v3079 = vsel %vm3022, %v3072, %v3078
        %v3080 = vrot.slane %v2964, 4
        %v3081 = vsel %vm3022, %v3074, %v3080
        %v3082 = vrot.slane %v2965, 4
        %v3083 = vsel %vm3022, %v3076, %v3082
        %v3084 = vrot.slane %v2966, 4
        %v3085 = vsel %vm3022, %v3078, %v3084
        %v3086 = vrot.slane %v2967, 4
        %v3087 = vsel %vm3022, %v3080, %v3086
        %v3088 = vrot.slane %v2968, 4
        %v3089 = vsel %vm3022, %v3082, %v3088
        %v3090 = vrot.slane %v2969, 4
        %v3091 = vsel %vm3022, %v3084, %v3090
        %v3092 = vrot.slane %v2970, 4
        %v3093 = vsel %vm3022, %v3086, %v3092
        %v3094 = vrot.slane %v2971, 4
        %v3095 = vsel %vm3022, %v3088, %v3094
        %v3096 = vrot.slane %v2972, 4
        %v3097 = vsel %vm3022, %v3090, %v3096
        %vm3134 = vcmask 556032
        %v3136 = vsel %vm3134, %v2981, 0
        %v3139 = vsel %vm2647, %v3092, 0
        %v3142 = vsel %vm2647, %v3094, 0
        %v3145 = vsel %vm2647, %v3096, 0
        %3147 = vmatprep.subr.bf16.mxu0 %v3028
        %3148 = vmatpush1.bf16.msra.mxu0 %v3025
        %3149 = vmatprep.subr.bf16.mxu0 %v3035
        %3150 = vmatpush1.bf16.msra.mxu0 %v3033
        %3151 = vmatprep.subr.bf16.mxu0 %v3041
        %3152 = vmatpush1.bf16.msra.mxu0 %v3039
        %3153 = vmatprep.subr.bf16.mxu0 %v3047
        %3154 = vmatpush1.bf16.msra.mxu0 %v3045
        %3155 = vmatprep.subr.bf16.mxu0 %v3053
        %3156 = vmatpush1.bf16.msra.mxu0 %v3051
        %3157 = vmatprep.subr.bf16.mxu0 %v3059
        %3158 = vmatpush1.bf16.msra.mxu0 %v3057
        %3159 = vmatprep.subr.bf16.mxu0 %v3065
        %3160 = vmatpush1.bf16.msra.mxu0 %v3063
        %3161 = vmatprep.subr.bf16.mxu0 %v3071
        %3162 = vmatpush1.bf16.msra.mxu0 %v3069
        %3163 = vmatprep.subr.bf16.mxu0 %v3077
        %3164 = vmatpush1.bf16.msra.mxu0 %v3075
        %3165 = vmatprep.subr.bf16.mxu0 %v3083
        %3166 = vmatpush1.bf16.msra.mxu0 %v3081
        %3167 = vmatprep.subr.bf16.mxu0 %v3089
        %3168 = vmatpush1.bf16.msra.mxu0 %v3087
        %3169 = vmatprep.subr.bf16.mxu0 %v3095
        %3170 = vmatpush1.bf16.msra.mxu0 %v3093
        %3171 = vmatprep.subr.bf16.mxu0 %v3142
        %3172 = vmatpush1.bf16.msra.mxu0 %v3139
        %3173 = vmatprep.subr.bf16.mxu0 0
        %3174 = vmatpush1.bf16.msra.mxu0 0
        %3175 = vmatprep.subr.bf16.mxu0 0
        %3176 = vmatpush1.bf16.msra.mxu0 0
        %3177 = vmatprep.subr.bf16.mxu0 0
        %3178 = vmatpush1.bf16.msra.mxu0 0
        %3179 = vmatprep.mubr.bf16.mxu0 %v3136
        %3180 = vmatmul.mubr.bf16.gmra.mrb[0].mxu0 %v2980
        %v3181 = vpop.f32.mrb[0].mxu0
        %v3182 = vadd.f32 0.0, %v3181
        %v3183 = vpop.f32.mrb[0].mxu0
        %v3184 = vadd.f32 0.0, %v3183
        %v3185 = vpop.f32.mrb[0].mxu0
        %v3186 = vpop.f32.mrb[0].mxu0
        %3187 = vdwg.mxu0
        %3188 = vmatprep.subr.bf16.mxu0 0
        %3189 = vmatpush1.bf16.msra.mxu0 %v3031
        %3190 = vmatprep.subr.bf16.mxu0 0
        %3191 = vmatpush1.bf16.msra.mxu0 %v3037
        %3192 = vmatprep.subr.bf16.mxu0 0
        %3193 = vmatpush1.bf16.msra.mxu0 %v3043
        %3194 = vmatprep.subr.bf16.mxu0 0
        %3195 = vmatpush1.bf16.msra.mxu0 %v3049
        %3196 = vmatprep.subr.bf16.mxu0 0
        %3197 = vmatpush1.bf16.msra.mxu0 %v3055
        %3198 = vmatprep.subr.bf16.mxu0 0
        %3199 = vmatpush1.bf16.msra.mxu0 %v3061
        %3200 = vmatprep.subr.bf16.mxu0 0
        %3201 = vmatpush1.bf16.msra.mxu0 %v3067
        %3202 = vmatprep.subr.bf16.mxu0 0
        %3203 = vmatpush1.bf16.msra.mxu0 %v3073
        %3204 = vmatprep.subr.bf16.mxu0 0
        %3205 = vmatpush1.bf16.msra.mxu0 %v3079
        %3206 = vmatprep.subr.bf16.mxu0 0
        %3207 = vmatpush1.bf16.msra.mxu0 %v3085
        %3208 = vmatprep.subr.bf16.mxu0 0
        %3209 = vmatpush1.bf16.msra.mxu0 %v3091
        %3210 = vmatprep.subr.bf16.mxu0 0
        %3211 = vmatpush1.bf16.msra.mxu0 %v3097
        %3212 = vmatprep.subr.bf16.mxu0 0
        %3213 = vmatpush1.bf16.msra.mxu0 %v3145
        %3214 = vmatprep.subr.bf16.mxu0 0
        %3215 = vmatpush1.bf16.msra.mxu0 0
        %3216 = vmatprep.subr.bf16.mxu0 0
        %3217 = vmatpush1.bf16.msra.mxu0 0
        %3218 = vmatprep.subr.bf16.mxu0 0
        %3219 = vmatpush1.bf16.msra.mxu0 0
        %3220 = vmatprep.mubr.bf16.mxu0 %v3136
        %3221 = vmatmul.mubr.bf16.gmra.mrb[0].mxu0 %v2980
        %v3222 = vpop.f32.mrb[0].mxu0
        %v3223 = vadd.f32 0.0, %v3222
        %v3224 = vpop.f32.mrb[0].mxu0
        %v3225 = vpop.f32.mrb[0].mxu0
        %v3226 = vpop.f32.mrb[0].mxu0
        %3227 = vdwg.mxu0
        %v3228 = vld [vmem:[%s4] sm:$0x3f]
        %v3229 = vld [vmem:[#allocation2 + $0x1e0] sm:$0xc0]
        %v3230 = vld [vmem:[#allocation2 + $0x1e8] sm:$0xc0]
        %v3231 = vld [vmem:[#allocation2 + $0x1f0] sm:$0xc0]
        %v3232 = vld [vmem:[#allocation2 + $0x1f8] sm:$0xff]
        %v3233 = vld [vmem:[#allocation2 + $0x200] sm:$0xff]
        %v3234 = vld [vmem:[#allocation2 + $0x208] sm:$0xff]
        %v3235 = vld [vmem:[#allocation2 + $0x210] sm:$0xff]
        %v3236 = vld [vmem:[#allocation2 + $0x218] sm:$0xff]
        %v3237 = vld [vmem:[#allocation2 + $0x220] sm:$0xff]
        %v3238 = vld [vmem:[#allocation2 + $0x228] sm:$0xff]
        %v3239 = vld [vmem:[#allocation2 + $0x230] sm:$0xff]
        %v3240 = vld [vmem:[#allocation2 + $0x238] sm:$0xff]
        %v3241 = vld [vmem:[#allocation2 + $0x240] sm:$0xff]
        %v3242 = vld [vmem:[#allocation2 + $0x248] sm:$0xff]
        %v3243 = vld [vmem:[#allocation2 + $0x250] sm:$0xff]
        %v3244 = vld [vmem:[#allocation2 + $0x258] sm:$0xff]
        %v3245 = vld [vmem:[#allocation2 + $0x260] sm:$0xff]
        %v3246 = vld [vmem:[#allocation2 + $0x268] sm:$0xff]
        %v3247 = vld [vmem:[#allocation2 + $0x270] sm:$0xff]
        %v3248 = vld [vmem:[#allocation2 + $0x278] sm:$0xff]
        %v3249 = vld [vmem:[#allocation2 + $0x280] sm:$0xff]
        %v3250 = vld [vmem:[#allocation2 + $0x288] sm:$0xff]
        %v3251 = vld [vmem:[#allocation2 + $0x290] sm:$0xff]
        %v3252 = vld [vmem:[#allocation2 + $0x298] sm:$0xff]
        %v3253 = vld [vmem:[#allocation2 + $0x2a0] sm:$0xff]
        %v3254 = vld [vmem:[#allocation2 + $0x2a8] sm:$0xff]
        %v3255 = vld [vmem:[#allocation2 + $0x2b0] sm:$0xff]
        %v3256 = vld [vmem:[#allocation2 + $0x2b8] sm:$0xff]
        %v3257 = vld [vmem:[#allocation2 + $0x2c0] sm:$0xff]
        %v3258 = vld [vmem:[#allocation2 + $0x2c8] sm:$0xff]
        %v3259 = vld [vmem:[#allocation2 + $0x2d0] sm:$0xff]
        %v3260 = vld [vmem:[#allocation2 + $0x2d8] sm:$0xff]
        %v3261 = vld [vmem:[#allocation2 + $0x2e0] sm:$0xff]
        %v3262 = vld [vmem:[#allocation2 + $0x2e8] sm:$0xff]
        %v3263 = vld [vmem:[#allocation2 + $0x2f0] sm:$0xff]
        %v3264 = vld [vmem:[#allocation2 + $0x2f8] sm:$0xff]
        %v3265 = vld [vmem:[#allocation2 + $0x300] sm:$0xff]
        %v3266 = vld [vmem:[#allocation2 + $0x308] sm:$0xff]
        %v3267 = vld [vmem:[#allocation2 + $0x310] sm:$0xff]
        %v3268 = vld [vmem:[#allocation2 + $0x318] sm:$0xff]
        %v3269 = vld [vmem:[#allocation2 + $0x320] sm:$0xff]
        %v3270 = vld [vmem:[#allocation2 + $0x328] sm:$0xff]
        %v3271 = vld [vmem:[#allocation2 + $0x330] sm:$0xff]
        %v3272 = vld [vmem:[#allocation2 + $0x338] sm:$0xff]
        %v3273 = vld [vmem:[#allocation2 + $0x340] sm:$0xff]
        %v3274 = vld [vmem:[#allocation2 + $0x348] sm:$0xff]
        %v3275 = vld [vmem:[#allocation2 + $0x350] sm:$0xff]
        %v3276 = vld [vmem:[#allocation2 + $0x358] sm:$0xff]
        %v3277 = vld [vmem:[#allocation2 + $0x360] sm:$0xff]
        %v3278 = vld [vmem:[#allocation2 + $0x368] sm:$0xff]
        %v3279 = vld [vmem:[#allocation2 + $0x370] sm:$0xff]
        %v3280 = vld [vmem:[#allocation2 + $0x378] sm:$0xff]
        %v3281 = vld [vmem:[#allocation2 + $0x380] sm:$0xff]
        %v3282 = vld [vmem:[#allocation2 + $0x388] sm:$0xff]
        %v3283 = vld [vmem:[#allocation2 + $0x390] sm:$0xff]
        %v3284 = vld [vmem:[#allocation2 + $0x398] sm:$0xff]
        %v3285 = vld [vmem:[#allocation2 + $0x3a0] sm:$0xff]
        %v3286 = vld [vmem:[#allocation2 + $0x3a8] sm:$0xff]
        %v3287 = vld [vmem:[#allocation2 + $0x3b0] sm:$0xff]
        %v3288 = vld [vmem:[#allocation2 + $0x3b8] sm:$0xff]
        %v3289 = vld [vmem:[#allocation2 + $0x3c0] sm:$0xff]
        %v3290 = vld [vmem:[#allocation2 + $0x3c8] sm:$0xff]
        %v3291 = vld [vmem:[#allocation2 + $0x3d0] sm:$0xff]
        %v3293 = vcombine.high %v3228, %v3228
        %v3295 = vunpack.c.l.s4 1983009808
        %v3296 = vunpack.c.0.s8 %v3295
        %v3297 = vlaneseq
        %v3298 = vshrl.u32 %v3297, 7
        %v3299 = vsub.s32 %v3296, %v3298
        %v3300 = vrot.slane %v3228, %v3299
        %v3302 = vunpack.c.l.s4 1983009808
        %v3303 = vunpack.c.0.s8 %v3302
        %v3304 = vlaneseq
        %v3305 = vshrl.u32 %v3304, 7
        %v3306 = vsub.s32 %v3303, %v3305
        %v3307 = vrot.slane %v3293, %v3306
        %v3308 = vcombine.high %v3300, %v3300
        %vm3374 = vcmask 1041408
        %v3375 = vrot.slane %v3229, 6
        %v3376 = vrot.slane %v3232, 6
        %v3377 = vsel %vm3374, %v3375, %v3376
        %v3378 = vrot.slane %v3230, 6
        %v3379 = vrot.slane %v3233, 6
        %v3380 = vsel %vm3374, %v3378, %v3379
        %v3381 = vrot.slane %v3231, 6
        %v3382 = vrot.slane %v3234, 6
        %v3383 = vsel %vm3374, %v3381, %v3382
        %v3384 = vrot.slane %v3235, 6
        %v3385 = vsel %vm3374, %v3376, %v3384
        %v3386 = vrot.slane %v3236, 6
        %v3387 = vsel %vm3374, %v3379, %v3386
        %v3388 = vrot.slane %v3237, 6
        %v3389 = vsel %vm3374, %v3382, %v3388
        %v3390 = vrot.slane %v3238, 6
        %v3391 = vsel %vm3374, %v3384, %v3390
        %v3392 = vrot.slane %v3239, 6
        %v3393 = vsel %vm3374, %v3386, %v3392
        %v3394 = vrot.slane %v3240, 6
        %v3395 = vsel %vm3374, %v3388, %v3394
        %v3396 = vrot.slane %v3241, 6
        %v3397 = vsel %vm3374, %v3390, %v3396
        %v3398 = vrot.slane %v3242, 6
        %v3399 = vsel %vm3374, %v3392, %v3398
        %v3400 = vrot.slane %v3243, 6
        %v3401 = vsel %vm3374, %v3394, %v3400
        %v3402 = vrot.slane %v3244, 6
        %v3403 = vsel %vm3374, %v3396, %v3402
        %v3404 = vrot.slane %v3245, 6
        %v3405 = vsel %vm3374, %v3398, %v3404
        %v3406 = vrot.slane %v3246, 6
        %v3407 = vsel %vm3374, %v3400, %v3406
        %v3408 = vrot.slane %v3247, 6
        %v3409 = vsel %vm3374, %v3402, %v3408
        %v3410 = vrot.slane %v3248, 6
        %v3411 = vsel %vm3374, %v3404, %v3410
        %v3412 = vrot.slane %v3249, 6
        %v3413 = vsel %vm3374, %v3406, %v3412
        %v3414 = vrot.slane %v3250, 6
        %v3415 = vsel %vm3374, %v3408, %v3414
        %v3416 = vrot.slane %v3251, 6
        %v3417 = vsel %vm3374, %v3410, %v3416
        %v3418 = vrot.slane %v3252, 6
        %v3419 = vsel %vm3374, %v3412, %v3418
        %v3420 = vrot.slane %v3253, 6
        %v3421 = vsel %vm3374, %v3414, %v3420
        %v3422 = vrot.slane %v3254, 6
        %v3423 = vsel %vm3374, %v3416, %v3422
        %v3424 = vrot.slane %v3255, 6
        %v3425 = vsel %vm3374, %v3418, %v3424
        %v3426 = vrot.slane %v3256, 6
        %v3427 = vsel %vm3374, %v3420, %v3426
        %v3428 = vrot.slane %v3257, 6
        %v3429 = vsel %vm3374, %v3422, %v3428
        %v3430 = vrot.slane %v3258, 6
        %v3431 = vsel %vm3374, %v3424, %v3430
        %v3432 = vrot.slane %v3259, 6
        %v3433 = vsel %vm3374, %v3426, %v3432
        %v3434 = vrot.slane %v3260, 6
        %v3435 = vsel %vm3374, %v3428, %v3434
        %v3436 = vrot.slane %v3261, 6
        %v3437 = vsel %vm3374, %v3430, %v3436
        %v3438 = vrot.slane %v3262, 6
        %v3439 = vsel %vm3374, %v3432, %v3438
        %v3440 = vrot.slane %v3263, 6
        %v3441 = vsel %vm3374, %v3434, %v3440
        %v3442 = vrot.slane %v3264, 6
        %v3443 = vsel %vm3374, %v3436, %v3442
        %v3444 = vrot.slane %v3265, 6
        %v3445 = vsel %vm3374, %v3438, %v3444
        %v3446 = vrot.slane %v3266, 6
        %v3447 = vsel %vm3374, %v3440, %v3446
        %v3448 = vrot.slane %v3267, 6
        %v3449 = vsel %vm3374, %v3442, %v3448
        %v3450 = vrot.slane %v3268, 6
        %v3451 = vsel %vm3374, %v3444, %v3450
        %v3452 = vrot.slane %v3269, 6
        %v3453 = vsel %vm3374, %v3446, %v3452
        %v3454 = vrot.slane %v3270, 6
        %v3455 = vsel %vm3374, %v3448, %v3454
        %v3456 = vrot.slane %v3271, 6
        %v3457 = vsel %vm3374, %v3450, %v3456
        %v3458 = vrot.slane %v3272, 6
        %v3459 = vsel %vm3374, %v3452, %v3458
        %v3460 = vrot.slane %v3273, 6
        %v3461 = vsel %vm3374, %v3454, %v3460
        %v3462 = vrot.slane %v3274, 6
        %v3463 = vsel %vm3374, %v3456, %v3462
        %v3464 = vrot.slane %v3275, 6
        %v3465 = vsel %vm3374, %v3458, %v3464
        %v3466 = vrot.slane %v3276, 6
        %v3467 = vsel %vm3374, %v3460, %v3466
        %v3468 = vrot.slane %v3277, 6
        %v3469 = vsel %vm3374, %v3462, %v3468
        %v3470 = vrot.slane %v3278, 6
        %v3471 = vsel %vm3374, %v3464, %v3470
        %v3472 = vrot.slane %v3279, 6
        %v3473 = vsel %vm3374, %v3466, %v3472
        %v3474 = vrot.slane %v3280, 6
        %v3475 = vsel %vm3374, %v3468, %v3474
        %v3476 = vrot.slane %v3281, 6
        %v3477 = vsel %vm3374, %v3470, %v3476
        %v3478 = vrot.slane %v3282, 6
        %v3479 = vsel %vm3374, %v3472, %v3478
        %v3480 = vrot.slane %v3283, 6
        %v3481 = vsel %vm3374, %v3474, %v3480
        %v3482 = vrot.slane %v3284, 6
        %v3483 = vsel %vm3374, %v3476, %v3482
        %v3484 = vrot.slane %v3285, 6
        %v3485 = vsel %vm3374, %v3478, %v3484
        %v3486 = vrot.slane %v3286, 6
        %v3487 = vsel %vm3374, %v3480, %v3486
        %v3488 = vrot.slane %v3287, 6
        %v3489 = vsel %vm3374, %v3482, %v3488
        %v3490 = vrot.slane %v3288, 6
        %v3491 = vsel %vm3374, %v3484, %v3490
        %v3492 = vrot.slane %v3289, 6
        %v3493 = vsel %vm3374, %v3486, %v3492
        %v3494 = vrot.slane %v3290, 6
        %v3495 = vsel %vm3374, %v3488, %v3494
        %v3496 = vrot.slane %v3291, 6
        %v3497 = vsel %vm3374, %v3490, %v3496
        %v3559 = vsel %vm3134, %v3307, 0
        %v3562 = vsel %vm2647, %v3492, 0
        %v3565 = vsel %vm2647, %v3494, 0
        %v3568 = vsel %vm2647, %v3496, 0
        %3570 = vmatprep.subr.bf16.mxu0 %v3380
        %3571 = vmatpush1.bf16.msra.mxu0 %v3377
        %3572 = vmatprep.subr.bf16.mxu0 %v3387
        %3573 = vmatpush1.bf16.msra.mxu0 %v3385
        %3574 = vmatprep.subr.bf16.mxu0 %v3393
        %3575 = vmatpush1.bf16.msra.mxu0 %v3391
        %3576 = vmatprep.subr.bf16.mxu0 %v3399
        %3577 = vmatpush1.bf16.msra.mxu0 %v3397
        %3578 = vmatprep.subr.bf16.mxu0 %v3405
        %3579 = vmatpush1.bf16.msra.mxu0 %v3403
        %3580 = vmatprep.subr.bf16.mxu0 %v3411
        %3581 = vmatpush1.bf16.msra.mxu0 %v3409
        %3582 = vmatprep.subr.bf16.mxu0 %v3417
        %3583 = vmatpush1.bf16.msra.mxu0 %v3415
        %3584 = vmatprep.subr.bf16.mxu0 %v3423
        %3585 = vmatpush1.bf16.msra.mxu0 %v3421
        %3586 = vmatprep.subr.bf16.mxu0 %v3429
        %3587 = vmatpush1.bf16.msra.mxu0 %v3427
        %3588 = vmatprep.subr.bf16.mxu0 %v3435
        %3589 = vmatpush1.bf16.msra.mxu0 %v3433
        %3590 = vmatprep.subr.bf16.mxu0 %v3441
        %3591 = vmatpush1.bf16.msra.mxu0 %v3439
        %3592 = vmatprep.subr.bf16.mxu0 %v3447
        %3593 = vmatpush1.bf16.msra.mxu0 %v3445
        %3594 = vmatprep.subr.bf16.mxu0 %v3453
        %3595 = vmatpush1.bf16.msra.mxu0 %v3451
        %3596 = vmatprep.subr.bf16.mxu0 %v3459
        %3597 = vmatpush1.bf16.msra.mxu0 %v3457
        %3598 = vmatprep.subr.bf16.mxu0 %v3465
        %3599 = vmatpush1.bf16.msra.mxu0 %v3463
        %3600 = vmatprep.subr.bf16.mxu0 %v3471
        %3601 = vmatpush1.bf16.msra.mxu0 %v3469
        %3602 = vmatprep.mubr.bf16.mxu0 %v3308
        %3603 = vmatmul.mubr.bf16.gmra.mrb[0].mxu0 %v3300
        %v3604 = vpop.f32.mrb[0].mxu0
        %v3605 = vadd.f32 0.0, %v3604
        %v3606 = vpop.f32.mrb[0].mxu0
        %v3607 = vadd.f32 0.0, %v3606
        %v3608 = vpop.f32.mrb[0].mxu0
        %v3609 = vpop.f32.mrb[0].mxu0
        %3610 = vdwg.mxu0
        %3611 = vmatprep.subr.bf16.mxu0 %v3477
        %3612 = vmatpush1.bf16.msra.mxu0 %v3475
        %3613 = vmatprep.subr.bf16.mxu0 %v3483
        %3614 = vmatpush1.bf16.msra.mxu0 %v3481
        %3615 = vmatprep.subr.bf16.mxu0 %v3489
        %3616 = vmatpush1.bf16.msra.mxu0 %v3487
        %3617 = vmatprep.subr.bf16.mxu0 %v3495
        %3618 = vmatpush1.bf16.msra.mxu0 %v3493
        %3619 = vmatprep.subr.bf16.mxu0 %v3565
        %3620 = vmatpush1.bf16.msra.mxu0 %v3562
        %3621 = vmatprep.subr.bf16.mxu0 0
        %3622 = vmatpush1.bf16.msra.mxu0 0
        %3623 = vmatprep.subr.bf16.mxu0 0
        %3624 = vmatpush1.bf16.msra.mxu0 0
        %3625 = vmatprep.subr.bf16.mxu0 0
        %3626 = vmatpush1.bf16.msra.mxu0 0
        %3627 = vmatprep.subr.bf16.mxu0 0
        %3628 = vmatpush1.bf16.msra.mxu0 0
        %3629 = vmatprep.subr.bf16.mxu0 0
        %3630 = vmatpush1.bf16.msra.mxu0 0
        %3631 = vmatprep.subr.bf16.mxu0 0
        %3632 = vmatpush1.bf16.msra.mxu0 0
        %3633 = vmatprep.subr.bf16.mxu0 0
        %3634 = vmatpush1.bf16.msra.mxu0 0
        %3635 = vmatprep.subr.bf16.mxu0 0
        %3636 = vmatpush1.bf16.msra.mxu0 0
        %3637 = vmatprep.subr.bf16.mxu0 0
        %3638 = vmatpush1.bf16.msra.mxu0 0
        %3639 = vmatprep.subr.bf16.mxu0 0
        %3640 = vmatpush1.bf16.msra.mxu0 0
        %3641 = vmatprep.subr.bf16.mxu0 0
        %3642 = vmatpush1.bf16.msra.mxu0 0
        %3643 = vmatprep.mubr.bf16.mxu0 0
        %3644 = vmatmul.mubr.bf16.gmra.mrb[0].mxu0 %v3559
        %v3645 = vpop.f32.mrb[0].mxu0
        %v3646 = vadd.f32 %v3605, %v3645
        %v3647 = vpop.f32.mrb[0].mxu0
        %v3648 = vadd.f32 %v3607, %v3647
        %v3649 = vpop.f32.mrb[0].mxu0
        %v3650 = vpop.f32.mrb[0].mxu0
        %3651 = vdwg.mxu0
        %3652 = vmatprep.subr.bf16.mxu0 0
        %3653 = vmatpush1.bf16.msra.mxu0 %v3383
        %3654 = vmatprep.subr.bf16.mxu0 0
        %3655 = vmatpush1.bf16.msra.mxu0 %v3389
        %3656 = vmatprep.subr.bf16.mxu0 0
        %3657 = vmatpush1.bf16.msra.mxu0 %v3395
        %3658 = vmatprep.subr.bf16.mxu0 0
        %3659 = vmatpush1.bf16.msra.mxu0 %v3401
        %3660 = vmatprep.subr.bf16.mxu0 0
        %3661 = vmatpush1.bf16.msra.mxu0 %v3407
        %3662 = vmatprep.subr.bf16.mxu0 0
        %3663 = vmatpush1.bf16.msra.mxu0 %v3413
        %3664 = vmatprep.subr.bf16.mxu0 0
        %3665 = vmatpush1.bf16.msra.mxu0 %v3419
        %3666 = vmatprep.subr.bf16.mxu0 0
        %3667 = vmatpush1.bf16.msra.mxu0 %v3425
        %3668 = vmatprep.subr.bf16.mxu0 0
        %3669 = vmatpush1.bf16.msra.mxu0 %v3431
        %3670 = vmatprep.subr.bf16.mxu0 0
        %3671 = vmatpush1.bf16.msra.mxu0 %v3437
        %3672 = vmatprep.subr.bf16.mxu0 0
        %3673 = vmatpush1.bf16.msra.mxu0 %v3443
        %3674 = vmatprep.subr.bf16.mxu0 0
        %3675 = vmatpush1.bf16.msra.mxu0 %v3449
        %3676 = vmatprep.subr.bf16.mxu0 0
        %3677 = vmatpush1.bf16.msra.mxu0 %v3455
        %3678 = vmatprep.subr.bf16.mxu0 0
        %3679 = vmatpush1.bf16.msra.mxu0 %v3461
        %3680 = vmatprep.subr.bf16.mxu0 0
        %3681 = vmatpush1.bf16.msra.mxu0 %v3467
        %3682 = vmatprep.subr.bf16.mxu0 0
        %3683 = vmatpush1.bf16.msra.mxu0 %v3473
        %3684 = vmatprep.mubr.bf16.mxu0 %v3308
        %3685 = vmatmul.mubr.bf16.gmra.mrb[0].mxu0 %v3300
        %v3686 = vpop.f32.mrb[0].mxu0
        %v3687 = vadd.f32 0.0, %v3686
        %v3688 = vpop.f32.mrb[0].mxu0
        %v3689 = vpop.f32.mrb[0].mxu0
        %v3690 = vpop.f32.mrb[0].mxu0
        %3691 = vdwg.mxu0
        %3692 = vmatprep.subr.bf16.mxu0 0
        %3693 = vmatpush1.bf16.msra.mxu0 %v3479
        %3694 = vmatprep.subr.bf16.mxu0 0
        %3695 = vmatpush1.bf16.msra.mxu0 %v3485
        %3696 = vmatprep.subr.bf16.mxu0 0
        %3697 = vmatpush1.bf16.msra.mxu0 %v3491
        %3698 = vmatprep.subr.bf16.mxu0 0
        %3699 = vmatpush1.bf16.msra.mxu0 %v3497
        %3700 = vmatprep.subr.bf16.mxu0 0
        %3701 = vmatpush1.bf16.msra.mxu0 %v3568
        %3702 = vmatprep.subr.bf16.mxu0 0
        %3703 = vmatpush1.bf16.msra.mxu0 0
        %3704 = vmatprep.subr.bf16.mxu0 0
        %3705 = vmatpush1.bf16.msra.mxu0 0
        %3706 = vmatprep.subr.bf16.mxu0 0
        %3707 = vmatpush1.bf16.msra.mxu0 0
        %3708 = vmatprep.subr.bf16.mxu0 0
        %3709 = vmatpush1.bf16.msra.mxu0 0
        %3710 = vmatprep.subr.bf16.mxu0 0
        %3711 = vmatpush1.bf16.msra.mxu0 0
        %3712 = vmatprep.subr.bf16.mxu0 0
        %3713 = vmatpush1.bf16.msra.mxu0 0
        %3714 = vmatprep.subr.bf16.mxu0 0
        %3715 = vmatpush1.bf16.msra.mxu0 0
        %3716 = vmatprep.subr.bf16.mxu0 0
        %3717 = vmatpush1.bf16.msra.mxu0 0
        %3718 = vmatprep.subr.bf16.mxu0 0
        %3719 = vmatpush1.bf16.msra.mxu0 0
        %3720 = vmatprep.subr.bf16.mxu0 0
        %3721 = vmatpush1.bf16.msra.mxu0 0
        %3722 = vmatprep.subr.bf16.mxu0 0
        %3723 = vmatpush1.bf16.msra.mxu0 0
        %3724 = vmatprep.mubr.bf16.mxu0 0
        %3725 = vmatmul.mubr.bf16.gmra.mrb[0].mxu0 %v3559
        %v3726 = vpop.f32.mrb[0].mxu0
        %v3727 = vadd.f32 %v3687, %v3726
        %v3728 = vpop.f32.mrb[0].mxu0
        %v3729 = vpop.f32.mrb[0].mxu0
        %v3730 = vpop.f32.mrb[0].mxu0
        %3731 = vdwg.mxu0
        %v3733 = vlaneseq
        %v3734 = vshrl.u32 %v3733, 7
        %v3735 = vsub.s32 0, %v3734
        %v3736 = vrot.slane %v360, %v3735
        %v3737 = vlaneseq
        %v3738 = vshrl.u32 %v3737, 7
        %v3739 = vsub.s32 1, %v3738
        %v3740 = vrot.slane %v360, %v3739
        %v3741 = vlaneseq
        %v3742 = vshrl.u32 %v3741, 7
        %v3743 = vsub.s32 2, %v3742
        %v3744 = vrot.slane %v360, %v3743
        %v3748 = vmul.f32 %v2692, %v3736
        %v3749 = vmul.f32 %v2694, %v3740
        %v3750 = vmul.f32 %v2733, %v3744
        %vm3751 = vcmask 1043456
        %v3752 = vsel %vm3751, %v3748, 0.0
        %v3753 = vsel %vm3751, %v3749, 0.0
        %v3754 = vadd.f32 %v3752, %v3753
        %v3755 = vsel %vm3751, %v3750, 0.0
        %v3756 = vadd.f32 %v3754, %v3755
        %3757 = vadd.xlane.f32.xlu0 %v3756
        %v3758 = vpop.xlane.xlu0 %3757
        %v3759 = vmul.f32 %v3758, 0.00390625
        %v3760 = vadd.f32 %v3759, %v358
        %v3761 = vld [vmem:[%s6] sm:$0xf]
        %v3762 = vmul.f32 %v3761, %v3760
        %vm3763 = vcmask 3072
        %v3764 = vsel %vm3763, %v3762, 0.0
        %v3765 = vrot.slane %v3764, 4
        %v3766 = vadd.f32 %v3764, %v3765
        %v3767 = vrot.slane %v3766, 2
        %v3768 = vadd.f32 %v3766, %v3767
        %v3769 = vrot.slane %v3768, 1
        %v3770 = vadd.f32 %v3768, %v3769
        %v3771 = vmax.f32 %v3770, 0.0
        %v3772 = vld [vmem:[%s7] sm:$0xf]
        %v3773 = vmul.f32 %v3772, %v3771
        %v3774 = vadd.f32 %v3773, 0.0
        %v3775 = vsub.f32 0.0, %v3774
        %v3776 = vmul.f32 %v3775, 1.442695
        %v3777 = vpow.pop %v3776
        %v3778 = vadd.f32 %v3777, 1.0
        %v3779 = vrcp.pop %v3778
        %v3780 = vmul.f32 1.0, %v3779
        %v3781 = vmul.f32 %v2887, %v3736
        %v3782 = vmul.f32 %v2889, %v3740
        %v3783 = vmul.f32 %v2928, %v3744
        %v3784 = vsel %vm3751, %v3781, 0.0
        %v3785 = vsel %vm3751, %v3782, 0.0
        %v3786 = vadd.f32 %v3784, %v3785
        %v3787 = vsel %vm3751, %v3783, 0.0
        %v3788 = vadd.f32 %v3786, %v3787
        %3789 = vadd.xlane.f32.xlu0 %v3788
        %v3790 = vpop.xlane.xlu0 %3789
        %v3791 = vmul.f32 %v3790, 0.00390625
        %v3793 = vrot.slane %v358, 4
        %v3795 = vadd.f32 %v3791, %v3793
        %s3796 = scalar_lea.vmem %s6, 4
        %v3797 = vld [vmem:[%s3796] sm:$0xf]
        %v3798 = vmul.f32 %v3797, %v3795
        %v3799 = vsel %vm3763, %v3798, 0.0
        %v3800 = vrot.slane %v3799, 4
        %v3801 = vadd.f32 %v3799, %v3800
        %v3802 = vrot.slane %v3801, 2
        %v3803 = vadd.f32 %v3801, %v3802
        %v3804 = vrot.slane %v3803, 1
        %v3805 = vadd.f32 %v3803, %v3804
        %v3806 = vmax.f32 %v3805, 0.0
        %s3807 = scalar_lea.vmem %s7, 4
        %v3808 = vld [vmem:[%s3807] sm:$0xf]
        %v3809 = vmul.f32 %v3808, %v3806
        %v3810 = vadd.f32 %v3809, 0.0
        %v3811 = vsub.f32 0.0, %v3810
        %v3812 = vmul.f32 %v3811, 1.442695
        %v3813 = vpow.pop %v3812
        %v3814 = vadd.f32 %v3813, 1.0
        %v3815 = vrcp.pop %v3814
        %v3816 = vmul.f32 1.0, %v3815
        %v3817 = vmul.f32 %v3182, %v3736
        %v3818 = vmul.f32 %v3184, %v3740
        %v3819 = vmul.f32 %v3223, %v3744
        %v3820 = vsel %vm3751, %v3817, 0.0
        %v3821 = vsel %vm3751, %v3818, 0.0
        %v3822 = vadd.f32 %v3820, %v3821
        %v3823 = vsel %vm3751, %v3819, 0.0
        %v3824 = vadd.f32 %v3822, %v3823
        %3825 = vadd.xlane.f32.xlu0 %v3824
        %v3826 = vpop.xlane.xlu0 %3825
        %v3827 = vmul.f32 %v3826, 0.00390625
        %v3828 = vadd.f32 %v3827, %v359
        %s3829 = scalar_lea.vmem %s6, 8
        %v3830 = vld [vmem:[%s3829] sm:$0xf]
        %v3831 = vmul.f32 %v3830, %v3828
        %v3832 = vsel %vm3763, %v3831, 0.0
        %v3833 = vrot.slane %v3832, 4
        %v3834 = vadd.f32 %v3832, %v3833
        %v3835 = vrot.slane %v3834, 2
        %v3836 = vadd.f32 %v3834, %v3835
        %v3837 = vrot.slane %v3836, 1
        %v3838 = vadd.f32 %v3836, %v3837
        %v3839 = vmax.f32 %v3838, 0.0
        %s3840 = scalar_lea.vmem %s7, 8
        %v3841 = vld [vmem:[%s3840] sm:$0xf]
        %v3842 = vmul.f32 %v3841, %v3839
        %v3843 = vadd.f32 %v3842, 0.0
        %v3844 = vsub.f32 0.0, %v3843
        %v3845 = vmul.f32 %v3844, 1.442695
        %v3846 = vpow.pop %v3845
        %v3847 = vadd.f32 %v3846, 1.0
        %v3848 = vrcp.pop %v3847
        %v3849 = vmul.f32 1.0, %v3848
        %v3850 = vmul.f32 %v3646, %v3736
        %v3851 = vmul.f32 %v3648, %v3740
        %v3852 = vmul.f32 %v3727, %v3744
        %v3853 = vsel %vm3751, %v3850, 0.0
        %v3854 = vsel %vm3751, %v3851, 0.0
        %v3855 = vadd.f32 %v3853, %v3854
        %v3856 = vsel %vm3751, %v3852, 0.0
        %v3857 = vadd.f32 %v3855, %v3856
        %3858 = vadd.xlane.f32.xlu0 %v3857
        %v3859 = vpop.xlane.xlu0 %3858
        %v3860 = vmul.f32 %v3859, 0.00390625
        %v3862 = vrot.slane %v359, 4
        %v3864 = vadd.f32 %v3860, %v3862
        %s3865 = scalar_lea.vmem %s6, 12
        %v3866 = vld [vmem:[%s3865] sm:$0xf]
        %v3867 = vmul.f32 %v3866, %v3864
        %v3868 = vsel %vm3763, %v3867, 0.0
        %v3869 = vrot.slane %v3868, 4
        %v3870 = vadd.f32 %v3868, %v3869
        %v3871 = vrot.slane %v3870, 2
        %v3872 = vadd.f32 %v3870, %v3871
        %v3873 = vrot.slane %v3872, 1
        %v3874 = vadd.f32 %v3872, %v3873
        %v3875 = vmax.f32 %v3874, 0.0
        %s3876 = scalar_lea.vmem %s7, 12
        %v3877 = vld [vmem:[%s3876] sm:$0xf]
        %v3878 = vmul.f32 %v3877, %v3875
        %v3879 = vadd.f32 %v3878, 0.0
        %v3880 = vsub.f32 0.0, %v3879
        %v3881 = vmul.f32 %v3880, 1.442695
        %v3882 = vpow.pop %v3881
        %v3883 = vadd.f32 %v3882, 1.0
        %v3884 = vrcp.pop %v3883
        %v3885 = vmul.f32 1.0, %v3884
        %v3886 = vmax.f32 %v3780, %v3816
        %v3887 = vmax.f32 %v3886, %v3849
        %v3888 = vmax.f32 %v3887, %v3885
        %v3889 = vsub.f32 %v3780, %v3888
        %v3890 = vmul.f32 %v3889, 1.442695
        %v3891 = vpow.pop %v3890
        %v3892 = vsub.f32 %v3816, %v3888
        %v3893 = vmul.f32 %v3892, 1.442695
        %v3894 = vpow.pop %v3893
        %v3895 = vsub.f32 %v3849, %v3888
        %v3896 = vmul.f32 %v3895, 1.442695
        %v3897 = vpow.pop %v3896
        %v3898 = vsub.f32 %v3885, %v3888
        %v3899 = vmul.f32 %v3898, 1.442695
        %v3900 = vpow.pop %v3899
        %v3901 = vadd.f32 %v3891, %v3894
        %v3902 = vadd.f32 %v3901, %v3897
        %v3903 = vadd.f32 %v3902, %v3900
        %v3904 = vrcp.pop %v3903
        %v3905 = vmul.f32 %v3891, %v3904
        %3907 = vset.pattern.permute.xlu0 0
        %3908 = vperm.xlu0 %3907, %v3905
        %v3909 = vpop.permute.xlu0 %3908
        %v3911 = vmul.f32 %v3909, %v2692
        %v3912 = vmul.f32 %v3909, %v2694
        %v3913 = vmul.f32 %v3909, %v2733
        %v3914 = vadd.f32 %v3911, 0.0
        %v3915 = vadd.f32 %v3912, 0.0
        %v3916 = vadd.f32 %v3913, 0.0
        %v3917 = vmul.f32 %v3905, %v358
        %v3918 = vadd.f32 %v3917, 0.0
        %v3919 = vmul.f32 %v3894, %v3904
        %3921 = vset.pattern.permute.xlu0 0
        %3922 = vperm.xlu0 %3921, %v3919
        %v3923 = vpop.permute.xlu0 %3922
        %v3925 = vmul.f32 %v3923, %v2887
        %v3926 = vmul.f32 %v3923, %v2889
        %v3927 = vmul.f32 %v3923, %v2928
        %v3928 = vadd.f32 %v3914, %v3925
        %v3929 = vadd.f32 %v3915, %v3926
        %v3930 = vadd.f32 %v3916, %v3927
        %v3931 = vmul.f32 %v3919, %v3793
        %v3932 = vadd.f32 %v3918, %v3931
        %v3933 = vmul.f32 %v3897, %v3904
        %3935 = vset.pattern.permute.xlu0 0
        %3936 = vperm.xlu0 %3935, %v3933
        %v3937 = vpop.permute.xlu0 %3936
        %v3939 = vmul.f32 %v3937, %v3182
        %v3940 = vmul.f32 %v3937, %v3184
        %v3941 = vmul.f32 %v3937, %v3223
        %v3942 = vadd.f32 %v3928, %v3939
        %v3943 = vadd.f32 %v3929, %v3940
        %v3944 = vadd.f32 %v3930, %v3941
        %v3945 = vmul.f32 %v3933, %v359
        %v3946 = vadd.f32 %v3932, %v3945
        %v3947 = vmul.f32 %v3900, %v3904
        %3949 = vset.pattern.permute.xlu0 0
        %3950 = vperm.xlu0 %3949, %v3947
        %v3951 = vpop.permute.xlu0 %3950
        %v3953 = vmul.f32 %v3951, %v3646
        %v3954 = vmul.f32 %v3951, %v3648
        %v3955 = vmul.f32 %v3951, %v3727
        %v3956 = vadd.f32 %v3942, %v3953
        %v3957 = vadd.f32 %v3943, %v3954
        %v3958 = vadd.f32 %v3944, %v3955
        %v3959 = vmul.f32 %v3947, %v3862
        %v3960 = vadd.f32 %v3946, %v3959
        %3962 = vset.pattern.permute.xlu0 0
        %3963 = vperm.xlu0 %3962, %v3960
        %v3964 = vpop.permute.xlu0 %3963
        %v3966 = vadd.f32 %v3956, %v3964
        %v3967 = vadd.f32 %v3957, %v3964
        %v3968 = vadd.f32 %v3958, %v3964
        %v3971 = vcombine.low %v3966, %v3967
        %3973 = vst [vmem:[%s350] sm:$0xff] %v3971
        %3974 = vst [vmem:[%s350 + $0x8] sm:$0xf] %v3968
        %s3975 = sand.u32 %s228, 1
        %s3976 = scalar_lea.sflag [#allocation5], %s3975
        %s3977 = sand.u32 %s228, 1
        %s3978 = smul.addr %s3977, 12
        %s3979 = scalar_lea.vmem [#allocation6], %s3978
        // Predicated region
        $region61: #{tpu_custom_call.1} parent=55 // pred_check
          %p3980 = pneg %p238
        $region62: #{tpu_custom_call.1} parent=55 // pred_check_branch
          %3982 = sbr.rel (%p3980) target = $region64
        $region63: #{tpu_custom_call.1} parent=55 // pred_region
          %s3984 = ssub.s32 192, 192
          %3985 = vsyncadd %s3976, %s3984
          %s3986 = smul.addr %s26, 3
          %s3987 = smul.addr %s3986, 64
          %s3988 = scalar_lea.hbm %s9, %s3987
          %s3990 = sshll.u32 %s3979, 4
          %s3991 = int_to_ptr.vmem [resolvable:$true] %s3990
          %3993 = dma.vmem_to_hbm [thread:$0]  %s3991, 192, %s3988, %s3976
        $region64: #{tpu_custom_call.1} parent=55 // pred_fallthru
          _
      $region56: #{tpu_custom_call.1} parent=5 // pred_fallthru
        _
      %p3994 = scmp.le.s32.totalorder 2, %s21
      // Predicated region
      $region65: #{tpu_custom_call.1} parent=5 // pred_check
        %p3995 = pneg %p3994
      $region66: #{tpu_custom_call.1} parent=5 // pred_check_branch
        %3997 = sbr.rel (%p3995) target = $region68
      $region67: #{tpu_custom_call.1} parent=5 // pred_region
        %s3998 = ssub.s32 %s21, 2
        // Predicated region
        $region69: #{tpu_custom_call.1} parent=67 // pred_check
          %p3999 = pneg %p244
        $region70: #{tpu_custom_call.1} parent=67 // pred_check_branch
          %4001 = sbr.rel (%p3999) target = $region72
        $region71: #{tpu_custom_call.1} parent=67 // pred_region
          %s4002 = sand.u32 %s229, 1
          %s4003 = scalar_lea.sflag [#allocation5], %s4002
          %s4004 = sand.u32 %s229, 1
          %s4005 = smul.addr %s4004, 12
          %s4006 = scalar_lea.vmem [#allocation6], %s4005
          %4007 = dma.done %s4003, 192
        $region72: #{tpu_custom_call.1} parent=67 // pred_fallthru
          _
      $region68: #{tpu_custom_call.1} parent=5 // pred_fallthru
        _
    $region6: #{tpu_custom_call.1} parent=1 // loop_footer
      %s25 = sadd.s32 1, %s21
    $region7: #{tpu_custom_call.1} parent=1 // loop_footer_branch
      %20 = sbr.rel target = $region3
    $region8: #{tpu_custom_call.1} parent=1 // loop_exit
      _
    %4008 = vsyncpa [#allocation4], 1
    %s4009 = scalar_lea.sflag [#allocation4], 1
    %4010 = vsyncpa %s4009, 1
    %4011 = vsyncpa [#allocation5], 1
    %s4012 = scalar_lea.sflag [#allocation5], 1
    %4013 = vsyncpa %s4012, 1

</llo_original>
